<compile_context>
chip_gen: v6e
topology: v6e:2x2x1
jax: 0.10.0
libtpu: 0.0.40
codegen_flags: <defaults>
</compile_context>

<pallas_src>
import jax
import jax.numpy as jnp
from jax.experimental import pallas as pl
from jax.experimental.pallas import tpu as pltpu

H = 256  # LSTM hidden size (nn.LSTM(128, 256), unidirectional, single layer)


# ----------------------------------------------------------------------------
# Fused forward kernel: one grid step = one tile of Bt batch elements.
# Row layout inside a tile is block-major / batch-minor: row = block_n * Bt + i.
# ----------------------------------------------------------------------------
def _make_fused_kernel(Bt, NB, Lp2, T):
    R = NB * Bt          # pool1 block-rows per tile (per conv1 parity)
    R2 = Lp2 * Bt        # pool2 rows per tile
    R3 = T * Bt          # LSTM time-step rows per tile

    def kernel(xs_ref,
               wev_ref, b1_ref,
               w2e_ref, w2a_ref, w2b_ref, b2_ref,
               w3a_ref, w3b_ref, b3_ref,
               w4_ref, b4_ref,
               wih_ref, whh_ref, bl_ref,
               wf1_ref, bf1_ref, wf2_ref, bf2_ref, wf3_ref, bf3_ref,
               out_ref,
               gx_ref, h_ref, c_ref):
        f32 = jnp.float32
        cdt = wev_ref.dtype                       # MXU operand dtype (bf16)

        # ---- conv1 + relu1 + pool1: ONE (2R, 600) @ (600, 320) matmul ---------------
        # rows [0:R) = even conv1 windows, rows [R:2R) = odd windows of the same
        # (block, batch) pairs; wev is block-diagonal (20 conv1 windows per row).
        x_all = xs_ref[0]                                               # (2R, 600) bf16
        p1 = jnp.dot(x_all.astype(cdt), wev_ref[...],
                     preferred_element_type=f32) + b1_ref[...]
        p1 = jnp.maximum(p1, 0.0)
        p20 = jnp.maximum(p1[0:R, :], p1[R:2 * R, :])                   # (R, 320)

        # ---- conv2 + relu2 + pool2 ---------------------------------------------------
        pa = p20[0:R2, :].astype(cdt)          # block m   rows (m*Bt + i)
        pb = p20[Bt:Bt + R2, :].astype(cdt)    # block m+1 rows
        b2 = b2_ref[...]
        c2_even = jnp.dot(pa, w2e_ref[...], preferred_element_type=f32) + b2
        c2_odd = (jnp.dot(pa, w2a_ref[...], preferred_element_type=f32)
                  + jnp.dot(pb, w2b_ref[...], preferred_element_type=f32) + b2)
        p2 = jnp.maximum(jnp.maximum(c2_even, 0.0),
                         jnp.maximum(c2_odd, 0.0))                      # (R2, 32)

        # ---- conv3 + relu3 (K=2, S=1) -------------------------------------------------
        qa = p2[0:R3, :].astype(cdt)
        qb = p2[Bt:Bt + R3, :].astype(cdt)
        y3 = jnp.maximum(
            jnp.dot(qa, w3a_ref[...], preferred_element_type=f32)
            + jnp.dot(qb, w3b_ref[...], preferred_element_type=f32)
            + b3_ref[...], 0.0)                                         # (R3, 64)

        # ---- conv4 + relu4 (K=1) ------------------------------------------------------
        y4 = jnp.maximum(
            jnp.dot(y3.astype(cdt), w4_ref[...], preferred_element_type=f32)
            + b4_ref[...], 0.0)                                         # (R3, 128)

        # ---- LSTM: input projection hoisted out of the recurrence ---------------------
        gx_ref[...] = (jnp.dot(y4.astype(cdt), wih_ref[...],
                               preferred_element_type=f32) + bl_ref[...])   # (R3, 4H)
        whh = whh_ref[...]                                              # (H, 4H)
        for t in range(T):                       # T is small & static -> unrolled
            g = gx_ref[pl.ds(t * Bt, Bt), :]                            # (Bt, 4H)
            if t > 0:                            # h == 0 at t == 0: skip the dot
                g = g + jnp.dot(h_ref[...].astype(cdt), whh,
                                preferred_element_type=f32)
            i_g = jax.nn.sigmoid(g[:, 0 * H:1 * H])                     # torch order [i,f,g,o]
            f_g = jax.nn.sigmoid(g[:, 1 * H:2 * H])
            g_g = jnp.tanh(g[:, 2 * H:3 * H])
            o_g = jax.nn.sigmoid(g[:, 3 * H:4 * H])
            c_new = i_g * g_g if t == 0 else f_g * c_ref[...] + i_g * g_g
            c_ref[...] = c_new
            h_ref[...] = o_g * jnp.tanh(c_new)

        # ---- fc1/fc2/fc3, each followed by a Sigmoid ------------------------------------
        z = jax.nn.sigmoid(jnp.dot(h_ref[...].astype(cdt), wf1_ref[...],
                                   preferred_element_type=f32) + bf1_ref[...])
        z = jax.nn.sigmoid(jnp.dot(z.astype(cdt), wf2_ref[...],
                                   preferred_element_type=f32) + bf2_ref[...])
        z = jax.nn.sigmoid(jnp.dot(z.astype(cdt), wf3_ref[...],
                                   preferred_element_type=f32) + bf3_ref[...])
        out_ref[0] = z                                                   # (Bt, 1)

    return kernel


# ----------------------------------------------------------------------------
# One-time weight preparation (matmul-ready, channels-last layouts, bf16 MXU weights)
# ----------------------------------------------------------------------------
def prepare_params(p, mxu_dtype=jnp.bfloat16):
    f32 = jnp.float32

    # conv1 (16,1,30) -> block-diagonal (600, 320): column t*16+c is channel c of the
    # t-th (of 20) conv1 window inside a 600-sample row.
    w1r = p["conv1_w"].astype(f32).transpose(2, 1, 0).reshape(30, 16)    # [tap, ch]
    wev = jnp.kron(jnp.eye(20, dtype=f32), w1r)                           # (600, 320)
    b1t = jnp.tile(p["conv1_b"].astype(f32), 20).reshape(1, 320)

    # conv2 (32,16,20): even conv2 positions read one full 20-position pool1 block;
    # odd positions straddle two blocks -> zero-padded half matrices.
    w2 = p["conv2_w"].astype(f32)
    w2e = w2.transpose(2, 1, 0).reshape(320, 32)                          # taps 0..19
    w2a = jnp.concatenate(
        [jnp.zeros((160, 32), f32),
         w2[:, :, 0:10].transpose(2, 1, 0).reshape(160, 32)], axis=0)     # taps 0..9
    w2b = jnp.concatenate(
        [w2[:, :, 10:20].transpose(2, 1, 0).reshape(160, 32),
         jnp.zeros((160, 32), f32)], axis=0)                              # taps 10..19
    b2 = p["conv2_b"].astype(f32).reshape(1, 32)

    w3 = p["conv3_w"].astype(f32)                                         # (64, 32, 2)
    w3a, w3b = w3[:, :, 0].T, w3[:, :, 1].T
    b3 = p["conv3_b"].astype(f32).reshape(1, 64)

    w4 = p["conv4_w"].astype(f32)[:, :, 0].T                              # (64, 128)
    b4 = p["conv4_b"].astype(f32).reshape(1, 128)

    wih = p["lstm_w_ih"].astype(f32).T                                    # (128, 4H)
    whh = p["lstm_w_hh"].astype(f32).T                                    # (H, 4H)
    bl = (p["lstm_b_ih"] + p["lstm_b_hh"]).astype(f32).reshape(1, 4 * H)

    wf1 = p["fc1_w"].astype(f32).T                                        # (256, 128)
    bf1 = p["fc1_b"].astype(f32).reshape(1, 128)
    wf2 = p["fc2_w"].astype(f32).T                                        # (128, 64)
    bf2 = p["fc2_b"].astype(f32).reshape(1, 64)
    wf3 = p["fc3_w"].astype(f32).T                                        # (64, 1)
    bf3 = p["fc3_b"].astype(f32).reshape(1, 1)

    m = lambda a: a.astype(mxu_dtype)                                     # MXU weights bf16
    return dict(wev=m(wev), b1t=b1t,
                w2e=m(w2e), w2a=m(w2a), w2b=m(w2b), b2=b2,
                w3a=m(w3a), w3b=m(w3b), b3=b3,
                w4=m(w4), b4=b4,
                wih=m(wih), whh=m(whh), bl=bl,
                wf1=m(wf1), bf1=bf1, wf2=m(wf2), bf2=bf2, wf3=m(wf3), bf3=bf3)


# ----------------------------------------------------------------------------
# Host wrapper: layer geometry, batch tiling, one pallas_call
# ----------------------------------------------------------------------------
def cnn1d_forward(prep, x, *, batch_tile=8):
    """x: (B, 1, L) float32 -> (B, 1); same semantics as CNN1D.forward."""
    B, cin, L = x.shape
    assert cin == 1
    f32 = jnp.float32
    mxu_dtype = prep["wev"].dtype

    # Static layer geometry: conv1(K30,S15) -> /2 -> conv2(K20,S10) -> /2 -> conv3(K2) -> conv4(K1)
    L1 = (L - 30) // 15 + 1
    Lp1 = L1 // 2
    L2 = (Lp1 - 20) // 10 + 1
    Lp2 = L2 // 2
    T = Lp2 - 1
    assert L >= 30 and Lp1 >= 20 and T >= 1, "input length too short for the conv stack"
    NB = Lp2 + 1                       # 20-position pool1 blocks needed per batch element
    # The only pool1 positions fabricated from zero padding live in the back half of
    # block Lp2, which is only ever multiplied by the zero rows of w2b.  That requires:
    assert Lp1 >= 20 * Lp2 + 10, "pool1 tail-garbage invariant violated"

    # Batch tile: sublane aligned; when the batch allows it, keep >= 2 grid steps so
    # both v7x TensorCores get work.
    Bt = max(8, (int(batch_tile) + 7) // 8 * 8)
    while Bt > 8 and (B + Bt - 1) // Bt < 2:
        Bt -= 8
    G = (B + Bt - 1) // Bt
    B_pad = G * Bt
    R = NB * Bt

    # Host-side layout: one merged input per tile, rows = [even windows | odd windows],
    # each half block-major / batch-minor (row = block * Bt + batch_in_tile).
    xf = x.reshape(B, L).astype(f32)
    pad_len = max(L, 600 * NB + 15)    # zero pad only feeds unused / zero-weighted taps
    xf = jnp.pad(xf, ((0, B_pad - B), (0, pad_len - L)))
    xe = xf[:, 0:600 * NB].reshape(B_pad, NB, 600)           # even conv1 windows
    xo = xf[:, 15:600 * NB + 15].reshape(B_pad, NB, 600)     # odd conv1 windows (shift 15)

    def tile_rows(a):
        return a.reshape(G, Bt, NB, 600).transpose(0, 2, 1, 3).reshape(G, R, 600)

    xs = jnp.concatenate([tile_rows(xe), tile_rows(xo)], axis=1).astype(mxu_dtype)

    # Weights use constant index_maps -> fetched once per core.  (Single-buffering them
    # via pl.Buffered(1) would only save ~1.3 MiB of VMEM headroom; not needed here.)
    wspec = lambda shape: pl.BlockSpec(shape, lambda g: (0, 0))
    kernel = _make_fused_kernel(Bt, NB, Lp2, T)

    out = pl.pallas_call(
        kernel,
        out_shape=jax.ShapeDtypeStruct((G, Bt, 1), f32),
        grid=(G,),
        in_specs=[
            pl.BlockSpec((1, 2 * R, 600), lambda g: (g, 0, 0)),
            wspec((600, 320)), wspec((1, 320)),
            wspec((320, 32)), wspec((320, 32)), wspec((320, 32)), wspec((1, 32)),
            wspec((32, 64)), wspec((32, 64)), wspec((1, 64)),
            wspec((64, 128)), wspec((1, 128)),
            wspec((128, 4 * H)), wspec((H, 4 * H)), wspec((1, 4 * H)),
            wspec((H, 128)), wspec((1, 128)),
            wspec((128, 64)), wspec((1, 64)),
            wspec((64, 1)), wspec((1, 1)),
        ],
        out_specs=pl.BlockSpec((1, Bt, 1), lambda g: (g, 0, 0)),
        scratch_shapes=[
            pltpu.VMEM((T * Bt, 4 * H), f32),   # hoisted LSTM gate projection gx
            pltpu.VMEM((Bt, H), f32),           # LSTM hidden carry h
            pltpu.VMEM((Bt, H), f32),           # LSTM cell carry c
        ],
        compiler_params=pltpu.CompilerParams(
            dimension_semantics=("parallel",),
            vmem_limit_bytes=32 * 1024 * 1024,
        ),
    )(xs,
      prep["wev"], prep["b1t"],
      prep["w2e"], prep["w2a"], prep["w2b"], prep["b2"],
      prep["w3a"], prep["w3b"], prep["b3"],
      prep["w4"], prep["b4"],
      prep["wih"], prep["whh"], prep["bl"],
      prep["wf1"], prep["bf1"], prep["wf2"], prep["bf2"], prep["wf3"], prep["bf3"])
    return out.reshape(B_pad, 1)[:B]


# ----------------------------------------------------------------------------
# Parameters (deterministic synthetic init, PyTorch-like scales)
# ----------------------------------------------------------------------------
def init_params(key):
    def uni(k, shape, fan_in):
        bound = 1.0 / jnp.sqrt(jnp.float32(fan_in))
        return jax.random.uniform(k, shape, jnp.float32, -bound, bound)

    ks = jax.random.split(key, 20)
    p = {}
    p["conv1_w"] = uni(ks[0], (16, 1, 30), 1 * 30)
    p["conv1_b"] = uni(ks[1], (16,), 1 * 30)
    p["conv2_w"] = uni(ks[2], (32, 16, 20), 16 * 20)
    p["conv2_b"] = uni(ks[3], (32,), 16 * 20)
    p["conv3_w"] = uni(ks[4], (64, 32, 2), 32 * 2)
    p["conv3_b"] = uni(ks[5], (64,), 32 * 2)
    p["conv4_w"] = uni(ks[6], (128, 64, 1), 64 * 1)
    p["conv4_b"] = uni(ks[7], (128,), 64 * 1)
    p["lstm_w_ih"] = uni(ks[8], (4 * H, 128), H)
    p["lstm_w_hh"] = uni(ks[9], (4 * H, H), H)
    p["lstm_b_ih"] = uni(ks[10], (4 * H,), H)
    p["lstm_b_hh"] = uni(ks[11], (4 * H,), H)
    p["fc1_w"] = uni(ks[12], (128, 256), 256)   # Linear(2*128=256, 128)
    p["fc1_b"] = uni(ks[13], (128,), 256)
    p["fc2_w"] = uni(ks[14], (64, 128), 128)
    p["fc2_b"] = uni(ks[15], (64,), 128)
    p["fc3_w"] = uni(ks[16], (1, 64), 64)
    p["fc3_b"] = uni(ks[17], (1,), 64)
    return p


# ----------------------------------------------------------------------------
# Pure-JAX f32 reference (XLA) mirroring CNN1D.forward, for a correctness check
# ----------------------------------------------------------------------------
def cnn1d_reference(params, x):
    PH = jax.lax.Precision.HIGHEST

    def conv1d(h, w, b, stride):
        _, _, Lin = h.shape
        Cout, _, K = w.shape
        Lout = (Lin - K) // stride + 1
        idx = jnp.arange(Lout)[:, None] * stride + jnp.arange(K)[None, :]
        patches = h[:, :, idx]                                   # (B, Cin, Lout, K)
        y = jnp.einsum("bclk,ock->bol", patches, w, precision=PH)
        return y + b[None, :, None]

    def maxpool2(h):
        Bn, C, Lin = h.shape
        Lp = Lin // 2
        return jnp.max(h[:, :, :2 * Lp].reshape(Bn, C, Lp, 2), axis=-1)

    h = jax.nn.relu(conv1d(x, params["conv1_w"], params["conv1_b"], 15))
    h = maxpool2(h)
    h = jax.nn.relu(conv1d(h, params["conv2_w"], params["conv2_b"], 10))
    h = maxpool2(h)
    h = jax.nn.relu(conv1d(h, params["conv3_w"], params["conv3_b"], 1))
    h = jax.nn.relu(conv1d(h, params["conv4_w"], params["conv4_b"], 1))
    h = h.transpose(0, 2, 1)                                     # (B, T, 128)
    Bn, T, _ = h.shape
    wih, whh = params["lstm_w_ih"], params["lstm_w_hh"]
    bias = params["lstm_b_ih"] + params["lstm_b_hh"]
    hs = jnp.zeros((Bn, H), jnp.float32)
    cs = jnp.zeros((Bn, H), jnp.float32)
    for t in range(T):
        g = (jnp.matmul(h[:, t, :], wih.T, precision=PH)
             + jnp.matmul(hs, whh.T, precision=PH) + bias)
        i_g = jax.nn.sigmoid(g[:, 0 * H:1 * H])
        f_g = jax.nn.sigmoid(g[:, 1 * H:2 * H])
        g_g = jnp.tanh(g[:, 2 * H:3 * H])
        o_g = jax.nn.sigmoid(g[:, 3 * H:4 * H])
        cs = f_g * cs + i_g * g_g
        hs = o_g * jnp.tanh(cs)
    y = jax.nn.sigmoid(jnp.matmul(hs, params["fc1_w"].T, precision=PH) + params["fc1_b"])
    y = jax.nn.sigmoid(jnp.matmul(y, params["fc2_w"].T, precision=PH) + params["fc2_b"])
    y = jax.nn.sigmoid(jnp.matmul(y, params["fc3_w"].T, precision=PH) + params["fc3_b"])
    return y


if __name__ == "__main__":
    key = jax.random.PRNGKey(0)
    pkey, xkey = jax.random.split(key)
    params = init_params(pkey)
    prep = prepare_params(params)

    # Smallest reasonable input: the strided conv stack needs L >= ~1515; L = 3000 gives
    # the chain 3000 -> 199 -> 99 -> 8 -> 4 -> 3 -> 3 (LSTM sequence length T = 3).
    B, L = 2, 3000
    x = jax.random.normal(xkey, (B, 1, L), dtype=jnp.float32)

    out = jax.jit(cnn1d_forward)(prep, x)
    out = jax.block_until_ready(out)
    assert out.shape == (B, 1), out.shape
    assert bool(jnp.all(jnp.isfinite(out)))
    assert bool(jnp.all((out >= 0.0) & (out <= 1.0)))

    # Kernel uses bf16 MXU operands with f32 accumulation; compare against the
    # pure-f32 reference with a correspondingly loosened tolerance.
    ref = cnn1d_reference(params, x)
    assert bool(jnp.allclose(out, ref, atol=2e-2, rtol=2e-2)), (out, ref)

    print("KERNEL_OK")
</pallas_src>

<mosaic_0001>
module attributes {stable_mosaic.version = 11 : i64} {
  func.func @kernel(%arg0: i32, %arg1: memref<1x80x600xbf16, #tpu.memory_space<vmem>>, %arg2: memref<600x320xbf16, #tpu.memory_space<vmem>>, %arg3: memref<1x320xf32, #tpu.memory_space<vmem>>, %arg4: memref<320x32xbf16, #tpu.memory_space<vmem>>, %arg5: memref<320x32xbf16, #tpu.memory_space<vmem>>, %arg6: memref<320x32xbf16, #tpu.memory_space<vmem>>, %arg7: memref<1x32xf32, #tpu.memory_space<vmem>>, %arg8: memref<32x64xbf16, #tpu.memory_space<vmem>>, %arg9: memref<32x64xbf16, #tpu.memory_space<vmem>>, %arg10: memref<1x64xf32, #tpu.memory_space<vmem>>, %arg11: memref<64x128xbf16, #tpu.memory_space<vmem>>, %arg12: memref<1x128xf32, #tpu.memory_space<vmem>>, %arg13: memref<128x1024xbf16, #tpu.memory_space<vmem>>, %arg14: memref<256x1024xbf16, #tpu.memory_space<vmem>>, %arg15: memref<1x1024xf32, #tpu.memory_space<vmem>>, %arg16: memref<256x128xbf16, #tpu.memory_space<vmem>>, %arg17: memref<1x128xf32, #tpu.memory_space<vmem>>, %arg18: memref<128x64xbf16, #tpu.memory_space<vmem>>, %arg19: memref<1x64xf32, #tpu.memory_space<vmem>>, %arg20: memref<64x1xbf16, #tpu.memory_space<vmem>>, %arg21: memref<1x1xf32, #tpu.memory_space<vmem>>, %arg22: memref<1x8x1xf32, #tpu.memory_space<vmem>>, %arg23: memref<24x1024xf32, #tpu.memory_space<vmem>>, %arg24: memref<8x256xf32, #tpu.memory_space<vmem>>, %arg25: memref<8x256xf32, #tpu.memory_space<vmem>>) attributes {dimension_semantics = [#tpu.dimension_semantics<parallel>], iteration_bounds = array<i64: 1>, scalar_prefetch = 0 : i64, scratch_operands = 3 : i64, tpu.core_type = #tpu.core_type<tc>, window_params = [{transform_indices = @transform_0, window_bounds = array<i64: 1, 80, 600>}, {pipeline_mode = #tpu.pipeline_mode<synchronous>, transform_indices = @transform_1, window_bounds = array<i64: 600, 320>}, {pipeline_mode = #tpu.pipeline_mode<synchronous>, transform_indices = @transform_2, window_bounds = array<i64: 1, 320>}, {pipeline_mode = #tpu.pipeline_mode<synchronous>, transform_indices = @transform_3, window_bounds = array<i64: 320, 32>}, {pipeline_mode = #tpu.pipeline_mode<synchronous>, transform_indices = @transform_4, window_bounds = array<i64: 320, 32>}, {pipeline_mode = #tpu.pipeline_mode<synchronous>, transform_indices = @transform_5, window_bounds = array<i64: 320, 32>}, {pipeline_mode = #tpu.pipeline_mode<synchronous>, transform_indices = @transform_6, window_bounds = array<i64: 1, 32>}, {pipeline_mode = #tpu.pipeline_mode<synchronous>, transform_indices = @transform_7, window_bounds = array<i64: 32, 64>}, {pipeline_mode = #tpu.pipeline_mode<synchronous>, transform_indices = @transform_8, window_bounds = array<i64: 32, 64>}, {pipeline_mode = #tpu.pipeline_mode<synchronous>, transform_indices = @transform_9, window_bounds = array<i64: 1, 64>}, {pipeline_mode = #tpu.pipeline_mode<synchronous>, transform_indices = @transform_10, window_bounds = array<i64: 64, 128>}, {pipeline_mode = #tpu.pipeline_mode<synchronous>, transform_indices = @transform_11, window_bounds = array<i64: 1, 128>}, {pipeline_mode = #tpu.pipeline_mode<synchronous>, transform_indices = @transform_12, window_bounds = array<i64: 128, 1024>}, {pipeline_mode = #tpu.pipeline_mode<synchronous>, transform_indices = @transform_13, window_bounds = array<i64: 256, 1024>}, {pipeline_mode = #tpu.pipeline_mode<synchronous>, transform_indices = @transform_14, window_bounds = array<i64: 1, 1024>}, {pipeline_mode = #tpu.pipeline_mode<synchronous>, transform_indices = @transform_15, window_bounds = array<i64: 256, 128>}, {pipeline_mode = #tpu.pipeline_mode<synchronous>, transform_indices = @transform_16, window_bounds = array<i64: 1, 128>}, {pipeline_mode = #tpu.pipeline_mode<synchronous>, transform_indices = @transform_17, window_bounds = array<i64: 128, 64>}, {pipeline_mode = #tpu.pipeline_mode<synchronous>, transform_indices = @transform_18, window_bounds = array<i64: 1, 64>}, {pipeline_mode = #tpu.pipeline_mode<synchronous>, transform_indices = @transform_19, window_bounds = array<i64: 64, 1>}, {pipeline_mode = #tpu.pipeline_mode<synchronous>, transform_indices = @transform_20, window_bounds = array<i64: 1, 1>}, {transform_indices = @transform_21, window_bounds = array<i64: 1, 8, 1>}]} {
    %c0 = arith.constant 0 : index
    %c0_0 = arith.constant 0 : index
    %c0_1 = arith.constant 0 : index
    %0 = vector.load %arg1[%c0, %c0_0, %c0_1] : memref<1x80x600xbf16, #tpu.memory_space<vmem>>, vector<1x80x600xbf16>
    %1 = vector.shape_cast %0 : vector<1x80x600xbf16> to vector<80x600xbf16>
    %c0_2 = arith.constant 0 : index
    %c0_3 = arith.constant 0 : index
    %2 = vector.load %arg2[%c0_2, %c0_3] : memref<600x320xbf16, #tpu.memory_space<vmem>>, vector<600x320xbf16>
    %cst = arith.constant dense<0.000000e+00> : vector<80x320xf32>
    %3 = tpu.matmul %1, %2, %cst {dimension_numbers = #tpu.dot_dimension_numbers<[1], [0], [0], [1], [0, 0, 1, 1], [], []>} : vector<80x600xbf16>, vector<600x320xbf16>, vector<80x320xf32> -> vector<80x320xf32>
    %c0_4 = arith.constant 0 : index
    %c0_5 = arith.constant 0 : index
    %4 = vector.load %arg3[%c0_4, %c0_5] : memref<1x320xf32, #tpu.memory_space<vmem>>, vector<1x320xf32>
    %5 = vector.broadcast %4 : vector<1x320xf32> to vector<80x320xf32>
    %6 = arith.addf %3, %5 : vector<80x320xf32>
    %cst_6 = arith.constant 0.000000e+00 : f32
    %7 = vector.broadcast %cst_6 : f32 to vector<80x320xf32>
    %8 = arith.maximumf %6, %7 : vector<80x320xf32>
    %9 = vector.extract_strided_slice %8 {offsets = [0, 0], sizes = [40, 320], strides = [1, 1]} : vector<80x320xf32> to vector<40x320xf32>
    %10 = vector.extract_strided_slice %8 {offsets = [40, 0], sizes = [40, 320], strides = [1, 1]} : vector<80x320xf32> to vector<40x320xf32>
    %11 = arith.maximumf %9, %10 : vector<40x320xf32>
    %12 = vector.extract_strided_slice %11 {offsets = [0, 0], sizes = [32, 320], strides = [1, 1]} : vector<40x320xf32> to vector<32x320xf32>
    %13 = arith.truncf %12 : vector<32x320xf32> to vector<32x320xbf16>
    %14 = vector.extract_strided_slice %11 {offsets = [8, 0], sizes = [32, 320], strides = [1, 1]} : vector<40x320xf32> to vector<32x320xf32>
    %15 = arith.truncf %14 : vector<32x320xf32> to vector<32x320xbf16>
    %c0_7 = arith.constant 0 : index
    %c0_8 = arith.constant 0 : index
    %16 = vector.load %arg7[%c0_7, %c0_8] : memref<1x32xf32, #tpu.memory_space<vmem>>, vector<1x32xf32>
    %c0_9 = arith.constant 0 : index
    %c0_10 = arith.constant 0 : index
    %17 = vector.load %arg4[%c0_9, %c0_10] : memref<320x32xbf16, #tpu.memory_space<vmem>>, vector<320x32xbf16>
    %cst_11 = arith.constant dense<0.000000e+00> : vector<32x32xf32>
    %18 = tpu.matmul %13, %17, %cst_11 {dimension_numbers = #tpu.dot_dimension_numbers<[1], [0], [0], [1], [0, 0, 1, 1], [], []>} : vector<32x320xbf16>, vector<320x32xbf16>, vector<32x32xf32> -> vector<32x32xf32>
    %19 = vector.broadcast %16 : vector<1x32xf32> to vector<32x32xf32>
    %20 = arith.addf %18, %19 : vector<32x32xf32>
    %c0_12 = arith.constant 0 : index
    %c0_13 = arith.constant 0 : index
    %21 = vector.load %arg5[%c0_12, %c0_13] : memref<320x32xbf16, #tpu.memory_space<vmem>>, vector<320x32xbf16>
    %cst_14 = arith.constant dense<0.000000e+00> : vector<32x32xf32>
    %22 = tpu.matmul %13, %21, %cst_14 {dimension_numbers = #tpu.dot_dimension_numbers<[1], [0], [0], [1], [0, 0, 1, 1], [], []>} : vector<32x320xbf16>, vector<320x32xbf16>, vector<32x32xf32> -> vector<32x32xf32>
    %c0_15 = arith.constant 0 : index
    %c0_16 = arith.constant 0 : index
    %23 = vector.load %arg6[%c0_15, %c0_16] : memref<320x32xbf16, #tpu.memory_space<vmem>>, vector<320x32xbf16>
    %cst_17 = arith.constant dense<0.000000e+00> : vector<32x32xf32>
    %24 = tpu.matmul %15, %23, %cst_17 {dimension_numbers = #tpu.dot_dimension_numbers<[1], [0], [0], [1], [0, 0, 1, 1], [], []>} : vector<32x320xbf16>, vector<320x32xbf16>, vector<32x32xf32> -> vector<32x32xf32>
    %25 = arith.addf %22, %24 : vector<32x32xf32>
    %26 = vector.broadcast %16 : vector<1x32xf32> to vector<32x32xf32>
    %27 = arith.addf %25, %26 : vector<32x32xf32>
    %cst_18 = arith.constant 0.000000e+00 : f32
    %28 = vector.broadcast %cst_18 : f32 to vector<32x32xf32>
    %29 = arith.maximumf %20, %28 : vector<32x32xf32>
    %cst_19 = arith.constant 0.000000e+00 : f32
    %30 = vector.broadcast %cst_19 : f32 to vector<32x32xf32>
    %31 = arith.maximumf %27, %30 : vector<32x32xf32>
    %32 = arith.maximumf %29, %31 : vector<32x32xf32>
    %33 = vector.extract_strided_slice %32 {offsets = [0, 0], sizes = [24, 32], strides = [1, 1]} : vector<32x32xf32> to vector<24x32xf32>
    %34 = arith.truncf %33 : vector<24x32xf32> to vector<24x32xbf16>
    %35 = vector.extract_strided_slice %32 {offsets = [8, 0], sizes = [24, 32], strides = [1, 1]} : vector<32x32xf32> to vector<24x32xf32>
    %36 = arith.truncf %35 : vector<24x32xf32> to vector<24x32xbf16>
    %c0_20 = arith.constant 0 : index
    %c0_21 = arith.constant 0 : index
    %37 = vector.load %arg8[%c0_20, %c0_21] : memref<32x64xbf16, #tpu.memory_space<vmem>>, vector<32x64xbf16>
    %cst_22 = arith.constant dense<0.000000e+00> : vector<24x64xf32>
    %38 = tpu.matmul %34, %37, %cst_22 {dimension_numbers = #tpu.dot_dimension_numbers<[1], [0], [0], [1], [0, 0, 1, 1], [], []>} : vector<24x32xbf16>, vector<32x64xbf16>, vector<24x64xf32> -> vector<24x64xf32>
    %c0_23 = arith.constant 0 : index
    %c0_24 = arith.constant 0 : index
    %39 = vector.load %arg9[%c0_23, %c0_24] : memref<32x64xbf16, #tpu.memory_space<vmem>>, vector<32x64xbf16>
    %cst_25 = arith.constant dense<0.000000e+00> : vector<24x64xf32>
    %40 = tpu.matmul %36, %39, %cst_25 {dimension_numbers = #tpu.dot_dimension_numbers<[1], [0], [0], [1], [0, 0, 1, 1], [], []>} : vector<24x32xbf16>, vector<32x64xbf16>, vector<24x64xf32> -> vector<24x64xf32>
    %41 = arith.addf %38, %40 : vector<24x64xf32>
    %c0_26 = arith.constant 0 : index
    %c0_27 = arith.constant 0 : index
    %42 = vector.load %arg10[%c0_26, %c0_27] : memref<1x64xf32, #tpu.memory_space<vmem>>, vector<1x64xf32>
    %43 = vector.broadcast %42 : vector<1x64xf32> to vector<24x64xf32>
    %44 = arith.addf %41, %43 : vector<24x64xf32>
    %cst_28 = arith.constant 0.000000e+00 : f32
    %45 = vector.broadcast %cst_28 : f32 to vector<24x64xf32>
    %46 = arith.maximumf %44, %45 : vector<24x64xf32>
    %47 = arith.truncf %46 : vector<24x64xf32> to vector<24x64xbf16>
    %c0_29 = arith.constant 0 : index
    %c0_30 = arith.constant 0 : index
    %48 = vector.load %arg11[%c0_29, %c0_30] : memref<64x128xbf16, #tpu.memory_space<vmem>>, vector<64x128xbf16>
    %cst_31 = arith.constant dense<0.000000e+00> : vector<24x128xf32>
    %49 = tpu.matmul %47, %48, %cst_31 {dimension_numbers = #tpu.dot_dimension_numbers<[1], [0], [0], [1], [0, 0, 1, 1], [], []>} : vector<24x64xbf16>, vector<64x128xbf16>, vector<24x128xf32> -> vector<24x128xf32>
    %c0_32 = arith.constant 0 : index
    %c0_33 = arith.constant 0 : index
    %50 = vector.load %arg12[%c0_32, %c0_33] : memref<1x128xf32, #tpu.memory_space<vmem>>, vector<1x128xf32>
    %51 = vector.broadcast %50 : vector<1x128xf32> to vector<24x128xf32>
    %52 = arith.addf %49, %51 : vector<24x128xf32>
    %cst_34 = arith.constant 0.000000e+00 : f32
    %53 = vector.broadcast %cst_34 : f32 to vector<24x128xf32>
    %54 = arith.maximumf %52, %53 : vector<24x128xf32>
    %55 = arith.truncf %54 : vector<24x128xf32> to vector<24x128xbf16>
    %c0_35 = arith.constant 0 : index
    %c0_36 = arith.constant 0 : index
    %56 = vector.load %arg13[%c0_35, %c0_36] : memref<128x1024xbf16, #tpu.memory_space<vmem>>, vector<128x1024xbf16>
    %cst_37 = arith.constant dense<0.000000e+00> : vector<24x1024xf32>
    %57 = tpu.matmul %55, %56, %cst_37 {dimension_numbers = #tpu.dot_dimension_numbers<[1], [0], [0], [1], [0, 0, 1, 1], [], []>} : vector<24x128xbf16>, vector<128x1024xbf16>, vector<24x1024xf32> -> vector<24x1024xf32>
    %c0_38 = arith.constant 0 : index
    %c0_39 = arith.constant 0 : index
    %58 = vector.load %arg15[%c0_38, %c0_39] : memref<1x1024xf32, #tpu.memory_space<vmem>>, vector<1x1024xf32>
    %59 = vector.broadcast %58 : vector<1x1024xf32> to vector<24x1024xf32>
    %60 = arith.addf %57, %59 : vector<24x1024xf32>
    %c0_40 = arith.constant 0 : index
    %c0_41 = arith.constant 0 : index
    %61 = vector.load %arg23[%c0_40, %c0_41] : memref<24x1024xf32, #tpu.memory_space<vmem>>, vector<24x1024xf32>
    tpu.vector_store %arg23[%c0_40, %c0_41], %60 {strides = array<i32>} : memref<24x1024xf32, #tpu.memory_space<vmem>>, vector<24x1024xf32>,
    %c0_42 = arith.constant 0 : index
    %c0_43 = arith.constant 0 : index
    %62 = vector.load %arg14[%c0_42, %c0_43] : memref<256x1024xbf16, #tpu.memory_space<vmem>>, vector<256x1024xbf16>
    %c0_44 = arith.constant 0 : index
    %c0_45 = arith.constant 0 : index
    %63 = vector.load %arg23[%c0_44, %c0_45] : memref<24x1024xf32, #tpu.memory_space<vmem>>, vector<8x1024xf32>
    %64 = vector.extract_strided_slice %63 {offsets = [0, 0], sizes = [8, 256], strides = [1, 1]} : vector<8x1024xf32> to vector<8x256xf32>
    %65 = arith.negf %64 : vector<8x256xf32>
    %66 = math.exp %65 : vector<8x256xf32>
    %cst_46 = arith.constant 1.000000e+00 : f32
    %67 = vector.broadcast %cst_46 : f32 to vector<8x256xf32>
    %68 = arith.addf %67, %66 : vector<8x256xf32>
    %69 = arith.divf %67, %68 : vector<8x256xf32>
    %70 = vector.extract_strided_slice %63 {offsets = [0, 512], sizes = [8, 256], strides = [1, 1]} : vector<8x1024xf32> to vector<8x256xf32>
    %71 = math.tanh %70 : vector<8x256xf32>
    %72 = vector.extract_strided_slice %63 {offsets = [0, 768], sizes = [8, 256], strides = [1, 1]} : vector<8x1024xf32> to vector<8x256xf32>
    %73 = arith.negf %72 : vector<8x256xf32>
    %74 = math.exp %73 : vector<8x256xf32>
    %cst_47 = arith.constant 1.000000e+00 : f32
    %75 = vector.broadcast %cst_47 : f32 to vector<8x256xf32>
    %76 = arith.addf %75, %74 : vector<8x256xf32>
    %77 = arith.divf %75, %76 : vector<8x256xf32>
    %78 = arith.mulf %69, %71 : vector<8x256xf32>
    %c0_48 = arith.constant 0 : index
    %c0_49 = arith.constant 0 : index
    %79 = vector.load %arg25[%c0_48, %c0_49] : memref<8x256xf32, #tpu.memory_space<vmem>>, vector<8x256xf32>
    tpu.vector_store %arg25[%c0_48, %c0_49], %78 {strides = array<i32>} : memref<8x256xf32, #tpu.memory_space<vmem>>, vector<8x256xf32>,
    %80 = math.tanh %78 : vector<8x256xf32>
    %81 = arith.mulf %77, %80 : vector<8x256xf32>
    %c0_50 = arith.constant 0 : index
    %c0_51 = arith.constant 0 : index
    %82 = vector.load %arg24[%c0_50, %c0_51] : memref<8x256xf32, #tpu.memory_space<vmem>>, vector<8x256xf32>
    tpu.vector_store %arg24[%c0_50, %c0_51], %81 {strides = array<i32>} : memref<8x256xf32, #tpu.memory_space<vmem>>, vector<8x256xf32>,
    %c8 = arith.constant 8 : index
    %c0_52 = arith.constant 0 : index
    %83 = vector.load %arg23[%c8, %c0_52] : memref<24x1024xf32, #tpu.memory_space<vmem>>, vector<8x1024xf32>
    %c0_53 = arith.constant 0 : index
    %c0_54 = arith.constant 0 : index
    %84 = vector.load %arg24[%c0_53, %c0_54] : memref<8x256xf32, #tpu.memory_space<vmem>>, vector<8x256xf32>
    %85 = arith.truncf %84 : vector<8x256xf32> to vector<8x256xbf16>
    %cst_55 = arith.constant dense<0.000000e+00> : vector<8x1024xf32>
    %86 = tpu.matmul %85, %62, %cst_55 {dimension_numbers = #tpu.dot_dimension_numbers<[1], [0], [0], [1], [0, 0, 1, 1], [], []>} : vector<8x256xbf16>, vector<256x1024xbf16>, vector<8x1024xf32> -> vector<8x1024xf32>
    %87 = arith.addf %83, %86 : vector<8x1024xf32>
    %88 = vector.extract_strided_slice %87 {offsets = [0, 0], sizes = [8, 256], strides = [1, 1]} : vector<8x1024xf32> to vector<8x256xf32>
    %89 = arith.negf %88 : vector<8x256xf32>
    %90 = math.exp %89 : vector<8x256xf32>
    %cst_56 = arith.constant 1.000000e+00 : f32
    %91 = vector.broadcast %cst_56 : f32 to vector<8x256xf32>
    %92 = arith.addf %91, %90 : vector<8x256xf32>
    %93 = arith.divf %91, %92 : vector<8x256xf32>
    %94 = vector.extract_strided_slice %87 {offsets = [0, 256], sizes = [8, 256], strides = [1, 1]} : vector<8x1024xf32> to vector<8x256xf32>
    %95 = arith.negf %94 : vector<8x256xf32>
    %96 = math.exp %95 : vector<8x256xf32>
    %cst_57 = arith.constant 1.000000e+00 : f32
    %97 = vector.broadcast %cst_57 : f32 to vector<8x256xf32>
    %98 = arith.addf %97, %96 : vector<8x256xf32>
    %99 = arith.divf %97, %98 : vector<8x256xf32>
    %100 = vector.extract_strided_slice %87 {offsets = [0, 512], sizes = [8, 256], strides = [1, 1]} : vector<8x1024xf32> to vector<8x256xf32>
    %101 = math.tanh %100 : vector<8x256xf32>
    %102 = vector.extract_strided_slice %87 {offsets = [0, 768], sizes = [8, 256], strides = [1, 1]} : vector<8x1024xf32> to vector<8x256xf32>
    %103 = arith.negf %102 : vector<8x256xf32>
    %104 = math.exp %103 : vector<8x256xf32>
    %cst_58 = arith.constant 1.000000e+00 : f32
    %105 = vector.broadcast %cst_58 : f32 to vector<8x256xf32>
    %106 = arith.addf %105, %104 : vector<8x256xf32>
    %107 = arith.divf %105, %106 : vector<8x256xf32>
    %c0_59 = arith.constant 0 : index
    %c0_60 = arith.constant 0 : index
    %108 = vector.load %arg25[%c0_59, %c0_60] : memref<8x256xf32, #tpu.memory_space<vmem>>, vector<8x256xf32>
    %109 = arith.mulf %99, %108 : vector<8x256xf32>
    %110 = arith.mulf %93, %101 : vector<8x256xf32>
    %111 = arith.addf %109, %110 : vector<8x256xf32>
    %c0_61 = arith.constant 0 : index
    %c0_62 = arith.constant 0 : index
    %112 = vector.load %arg25[%c0_61, %c0_62] : memref<8x256xf32, #tpu.memory_space<vmem>>, vector<8x256xf32>
    tpu.vector_store %arg25[%c0_61, %c0_62], %111 {strides = array<i32>} : memref<8x256xf32, #tpu.memory_space<vmem>>, vector<8x256xf32>,
    %113 = math.tanh %111 : vector<8x256xf32>
    %114 = arith.mulf %107, %113 : vector<8x256xf32>
    %c0_63 = arith.constant 0 : index
    %c0_64 = arith.constant 0 : index
    %115 = vector.load %arg24[%c0_63, %c0_64] : memref<8x256xf32, #tpu.memory_space<vmem>>, vector<8x256xf32>
    tpu.vector_store %arg24[%c0_63, %c0_64], %114 {strides = array<i32>} : memref<8x256xf32, #tpu.memory_space<vmem>>, vector<8x256xf32>,
    %c16 = arith.constant 16 : index
    %c0_65 = arith.constant 0 : index
    %116 = vector.load %arg23[%c16, %c0_65] : memref<24x1024xf32, #tpu.memory_space<vmem>>, vector<8x1024xf32>
    %c0_66 = arith.constant 0 : index
    %c0_67 = arith.constant 0 : index
    %117 = vector.load %arg24[%c0_66, %c0_67] : memref<8x256xf32, #tpu.memory_space<vmem>>, vector<8x256xf32>
    %118 = arith.truncf %117 : vector<8x256xf32> to vector<8x256xbf16>
    %cst_68 = arith.constant dense<0.000000e+00> : vector<8x1024xf32>
    %119 = tpu.matmul %118, %62, %cst_68 {dimension_numbers = #tpu.dot_dimension_numbers<[1], [0], [0], [1], [0, 0, 1, 1], [], []>} : vector<8x256xbf16>, vector<256x1024xbf16>, vector<8x1024xf32> -> vector<8x1024xf32>
    %120 = arith.addf %116, %119 : vector<8x1024xf32>
    %121 = vector.extract_strided_slice %120 {offsets = [0, 0], sizes = [8, 256], strides = [1, 1]} : vector<8x1024xf32> to vector<8x256xf32>
    %122 = arith.negf %121 : vector<8x256xf32>
    %123 = math.exp %122 : vector<8x256xf32>
    %cst_69 = arith.constant 1.000000e+00 : f32
    %124 = vector.broadcast %cst_69 : f32 to vector<8x256xf32>
    %125 = arith.addf %124, %123 : vector<8x256xf32>
    %126 = arith.divf %124, %125 : vector<8x256xf32>
    %127 = vector.extract_strided_slice %120 {offsets = [0, 256], sizes = [8, 256], strides = [1, 1]} : vector<8x1024xf32> to vector<8x256xf32>
    %128 = arith.negf %127 : vector<8x256xf32>
    %129 = math.exp %128 : vector<8x256xf32>
    %cst_70 = arith.constant 1.000000e+00 : f32
    %130 = vector.broadcast %cst_70 : f32 to vector<8x256xf32>
    %131 = arith.addf %130, %129 : vector<8x256xf32>
    %132 = arith.divf %130, %131 : vector<8x256xf32>
    %133 = vector.extract_strided_slice %120 {offsets = [0, 512], sizes = [8, 256], strides = [1, 1]} : vector<8x1024xf32> to vector<8x256xf32>
    %134 = math.tanh %133 : vector<8x256xf32>
    %135 = vector.extract_strided_slice %120 {offsets = [0, 768], sizes = [8, 256], strides = [1, 1]} : vector<8x1024xf32> to vector<8x256xf32>
    %136 = arith.negf %135 : vector<8x256xf32>
    %137 = math.exp %136 : vector<8x256xf32>
    %cst_71 = arith.constant 1.000000e+00 : f32
    %138 = vector.broadcast %cst_71 : f32 to vector<8x256xf32>
    %139 = arith.addf %138, %137 : vector<8x256xf32>
    %140 = arith.divf %138, %139 : vector<8x256xf32>
    %c0_72 = arith.constant 0 : index
    %c0_73 = arith.constant 0 : index
    %141 = vector.load %arg25[%c0_72, %c0_73] : memref<8x256xf32, #tpu.memory_space<vmem>>, vector<8x256xf32>
    %142 = arith.mulf %132, %141 : vector<8x256xf32>
    %143 = arith.mulf %126, %134 : vector<8x256xf32>
    %144 = arith.addf %142, %143 : vector<8x256xf32>
    %c0_74 = arith.constant 0 : index
    %c0_75 = arith.constant 0 : index
    %145 = vector.load %arg25[%c0_74, %c0_75] : memref<8x256xf32, #tpu.memory_space<vmem>>, vector<8x256xf32>
    tpu.vector_store %arg25[%c0_74, %c0_75], %144 {strides = array<i32>} : memref<8x256xf32, #tpu.memory_space<vmem>>, vector<8x256xf32>,
    %146 = math.tanh %144 : vector<8x256xf32>
    %147 = arith.mulf %140, %146 : vector<8x256xf32>
    %c0_76 = arith.constant 0 : index
    %c0_77 = arith.constant 0 : index
    %148 = vector.load %arg24[%c0_76, %c0_77] : memref<8x256xf32, #tpu.memory_space<vmem>>, vector<8x256xf32>
    tpu.vector_store %arg24[%c0_76, %c0_77], %147 {strides = array<i32>} : memref<8x256xf32, #tpu.memory_space<vmem>>, vector<8x256xf32>,
    %c0_78 = arith.constant 0 : index
    %c0_79 = arith.constant 0 : index
    %149 = vector.load %arg24[%c0_78, %c0_79] : memref<8x256xf32, #tpu.memory_space<vmem>>, vector<8x256xf32>
    %150 = arith.truncf %149 : vector<8x256xf32> to vector<8x256xbf16>
    %c0_80 = arith.constant 0 : index
    %c0_81 = arith.constant 0 : index
    %151 = vector.load %arg16[%c0_80, %c0_81] : memref<256x128xbf16, #tpu.memory_space<vmem>>, vector<256x128xbf16>
    %cst_82 = arith.constant dense<0.000000e+00> : vector<8x128xf32>
    %152 = tpu.matmul %150, %151, %cst_82 {dimension_numbers = #tpu.dot_dimension_numbers<[1], [0], [0], [1], [0, 0, 1, 1], [], []>} : vector<8x256xbf16>, vector<256x128xbf16>, vector<8x128xf32> -> vector<8x128xf32>
    %c0_83 = arith.constant 0 : index
    %c0_84 = arith.constant 0 : index
    %153 = vector.load %arg17[%c0_83, %c0_84] : memref<1x128xf32, #tpu.memory_space<vmem>>, vector<1x128xf32>
    %154 = vector.broadcast %153 : vector<1x128xf32> to vector<8x128xf32>
    %155 = arith.addf %152, %154 : vector<8x128xf32>
    %156 = arith.negf %155 : vector<8x128xf32>
    %157 = math.exp %156 : vector<8x128xf32>
    %cst_85 = arith.constant 1.000000e+00 : f32
    %158 = vector.broadcast %cst_85 : f32 to vector<8x128xf32>
    %159 = arith.addf %158, %157 : vector<8x128xf32>
    %160 = arith.divf %158, %159 : vector<8x128xf32>
    %161 = arith.truncf %160 : vector<8x128xf32> to vector<8x128xbf16>
    %c0_86 = arith.constant 0 : index
    %c0_87 = arith.constant 0 : index
    %162 = vector.load %arg18[%c0_86, %c0_87] : memref<128x64xbf16, #tpu.memory_space<vmem>>, vector<128x64xbf16>
    %cst_88 = arith.constant dense<0.000000e+00> : vector<8x64xf32>
    %163 = tpu.matmul %161, %162, %cst_88 {dimension_numbers = #tpu.dot_dimension_numbers<[1], [0], [0], [1], [0, 0, 1, 1], [], []>} : vector<8x128xbf16>, vector<128x64xbf16>, vector<8x64xf32> -> vector<8x64xf32>
    %c0_89 = arith.constant 0 : index
    %c0_90 = arith.constant 0 : index
    %164 = vector.load %arg19[%c0_89, %c0_90] : memref<1x64xf32, #tpu.memory_space<vmem>>, vector<1x64xf32>
    %165 = vector.broadcast %164 : vector<1x64xf32> to vector<8x64xf32>
    %166 = arith.addf %163, %165 : vector<8x64xf32>
    %167 = arith.negf %166 : vector<8x64xf32>
    %168 = math.exp %167 : vector<8x64xf32>
    %cst_91 = arith.constant 1.000000e+00 : f32
    %169 = vector.broadcast %cst_91 : f32 to vector<8x64xf32>
    %170 = arith.addf %169, %168 : vector<8x64xf32>
    %171 = arith.divf %169, %170 : vector<8x64xf32>
    %172 = arith.truncf %171 : vector<8x64xf32> to vector<8x64xbf16>
    %c0_92 = arith.constant 0 : index
    %c0_93 = arith.constant 0 : index
    %173 = vector.load %arg20[%c0_92, %c0_93] : memref<64x1xbf16, #tpu.memory_space<vmem>>, vector<64x1xbf16>
    %cst_94 = arith.constant dense<0.000000e+00> : vector<8x1xf32>
    %174 = tpu.matmul %172, %173, %cst_94 {dimension_numbers = #tpu.dot_dimension_numbers<[1], [0], [0], [1], [0, 0, 1, 1], [], []>} : vector<8x64xbf16>, vector<64x1xbf16>, vector<8x1xf32> -> vector<8x1xf32>
    %c0_95 = arith.constant 0 : index
    %c0_96 = arith.constant 0 : index
    %175 = vector.load %arg21[%c0_95, %c0_96] : memref<1x1xf32, #tpu.memory_space<vmem>>, vector<1x1xf32>
    %176 = vector.broadcast %175 : vector<1x1xf32> to vector<8x1xf32>
    %177 = arith.addf %174, %176 : vector<8x1xf32>
    %178 = arith.negf %177 : vector<8x1xf32>
    %179 = math.exp %178 : vector<8x1xf32>
    %cst_97 = arith.constant 1.000000e+00 : f32
    %180 = vector.broadcast %cst_97 : f32 to vector<8x1xf32>
    %181 = arith.addf %180, %179 : vector<8x1xf32>
    %182 = arith.divf %180, %181 : vector<8x1xf32>
    %c0_98 = arith.constant 0 : index
    %c0_99 = arith.constant 0 : index
    %c0_100 = arith.constant 0 : index
    %183 = vector.load %arg22[%c0_98, %c0_99, %c0_100] : memref<1x8x1xf32, #tpu.memory_space<vmem>>, vector<1x8x1xf32>
    %184 = vector.shape_cast %183 : vector<1x8x1xf32> to vector<8x1xf32>
    %185 = vector.shape_cast %182 : vector<8x1xf32> to vector<1x8x1xf32>
    tpu.vector_store %arg22[%c0_98, %c0_99, %c0_100], %185 {strides = array<i32>} : memref<1x8x1xf32, #tpu.memory_space<vmem>>, vector<1x8x1xf32>,
    return
  }
  func.func @transform_0(%arg0: i32) -> (i32, i32, i32) {
    %c0_i32 = arith.constant 0 : i32
    %c0_i32_0 = arith.constant 0 : i32
    %c0_i32_1 = arith.constant 0 : i32
    return %arg0, %c0_i32, %c0_i32_0 : i32, i32, i32
  }
  func.func @transform_1(%arg0: i32) -> (i32, i32) {
    %c0_i32 = arith.constant 0 : i32
    %c0_i32_0 = arith.constant 0 : i32
    %c0_i32_1 = arith.constant 0 : i32
    return %c0_i32, %c0_i32_0 : i32, i32
  }
  func.func @transform_2(%arg0: i32) -> (i32, i32) {
    %c0_i32 = arith.constant 0 : i32
    %c0_i32_0 = arith.constant 0 : i32
    %c0_i32_1 = arith.constant 0 : i32
    return %c0_i32, %c0_i32_0 : i32, i32
  }
  func.func @transform_3(%arg0: i32) -> (i32, i32) {
    %c0_i32 = arith.constant 0 : i32
    %c0_i32_0 = arith.constant 0 : i32
    %c0_i32_1 = arith.constant 0 : i32
    return %c0_i32, %c0_i32_0 : i32, i32
  }
  func.func @transform_4(%arg0: i32) -> (i32, i32) {
    %c0_i32 = arith.constant 0 : i32
    %c0_i32_0 = arith.constant 0 : i32
    %c0_i32_1 = arith.constant 0 : i32
    return %c0_i32, %c0_i32_0 : i32, i32
  }
  func.func @transform_5(%arg0: i32) -> (i32, i32) {
    %c0_i32 = arith.constant 0 : i32
    %c0_i32_0 = arith.constant 0 : i32
    %c0_i32_1 = arith.constant 0 : i32
    return %c0_i32, %c0_i32_0 : i32, i32
  }
  func.func @transform_6(%arg0: i32) -> (i32, i32) {
    %c0_i32 = arith.constant 0 : i32
    %c0_i32_0 = arith.constant 0 : i32
    %c0_i32_1 = arith.constant 0 : i32
    return %c0_i32, %c0_i32_0 : i32, i32
  }
  func.func @transform_7(%arg0: i32) -> (i32, i32) {
    %c0_i32 = arith.constant 0 : i32
    %c0_i32_0 = arith.constant 0 : i32
    %c0_i32_1 = arith.constant 0 : i32
    return %c0_i32, %c0_i32_0 : i32, i32
  }
  func.func @transform_8(%arg0: i32) -> (i32, i32) {
    %c0_i32 = arith.constant 0 : i32
    %c0_i32_0 = arith.constant 0 : i32
    %c0_i32_1 = arith.constant 0 : i32
    return %c0_i32, %c0_i32_0 : i32, i32
  }
  func.func @transform_9(%arg0: i32) -> (i32, i32) {
    %c0_i32 = arith.constant 0 : i32
    %c0_i32_0 = arith.constant 0 : i32
    %c0_i32_1 = arith.constant 0 : i32
    return %c0_i32, %c0_i32_0 : i32, i32
  }
  func.func @transform_10(%arg0: i32) -> (i32, i32) {
    %c0_i32 = arith.constant 0 : i32
    %c0_i32_0 = arith.constant 0 : i32
    %c0_i32_1 = arith.constant 0 : i32
    return %c0_i32, %c0_i32_0 : i32, i32
  }
  func.func @transform_11(%arg0: i32) -> (i32, i32) {
    %c0_i32 = arith.constant 0 : i32
    %c0_i32_0 = arith.constant 0 : i32
    %c0_i32_1 = arith.constant 0 : i32
    return %c0_i32, %c0_i32_0 : i32, i32
  }
  func.func @transform_12(%arg0: i32) -> (i32, i32) {
    %c0_i32 = arith.constant 0 : i32
    %c0_i32_0 = arith.constant 0 : i32
    %c0_i32_1 = arith.constant 0 : i32
    return %c0_i32, %c0_i32_0 : i32, i32
  }
  func.func @transform_13(%arg0: i32) -> (i32, i32) {
    %c0_i32 = arith.constant 0 : i32
    %c0_i32_0 = arith.constant 0 : i32
    %c0_i32_1 = arith.constant 0 : i32
    return %c0_i32, %c0_i32_0 : i32, i32
  }
  func.func @transform_14(%arg0: i32) -> (i32, i32) {
    %c0_i32 = arith.constant 0 : i32
    %c0_i32_0 = arith.constant 0 : i32
    %c0_i32_1 = arith.constant 0 : i32
    return %c0_i32, %c0_i32_0 : i32, i32
  }
  func.func @transform_15(%arg0: i32) -> (i32, i32) {
    %c0_i32 = arith.constant 0 : i32
    %c0_i32_0 = arith.constant 0 : i32
    %c0_i32_1 = arith.constant 0 : i32
    return %c0_i32, %c0_i32_0 : i32, i32
  }
  func.func @transform_16(%arg0: i32) -> (i32, i32) {
    %c0_i32 = arith.constant 0 : i32
    %c0_i32_0 = arith.constant 0 : i32
    %c0_i32_1 = arith.constant 0 : i32
    return %c0_i32, %c0_i32_0 : i32, i32
  }
  func.func @transform_17(%arg0: i32) -> (i32, i32) {
    %c0_i32 = arith.constant 0 : i32
    %c0_i32_0 = arith.constant 0 : i32
    %c0_i32_1 = arith.constant 0 : i32
    return %c0_i32, %c0_i32_0 : i32, i32
  }
  func.func @transform_18(%arg0: i32) -> (i32, i32) {
    %c0_i32 = arith.constant 0 : i32
    %c0_i32_0 = arith.constant 0 : i32
    %c0_i32_1 = arith.constant 0 : i32
    return %c0_i32, %c0_i32_0 : i32, i32
  }
  func.func @transform_19(%arg0: i32) -> (i32, i32) {
    %c0_i32 = arith.constant 0 : i32
    %c0_i32_0 = arith.constant 0 : i32
    %c0_i32_1 = arith.constant 0 : i32
    return %c0_i32, %c0_i32_0 : i32, i32
  }
  func.func @transform_20(%arg0: i32) -> (i32, i32) {
    %c0_i32 = arith.constant 0 : i32
    %c0_i32_0 = arith.constant 0 : i32
    %c0_i32_1 = arith.constant 0 : i32
    return %c0_i32, %c0_i32_0 : i32, i32
  }
  func.func @transform_21(%arg0: i32) -> (i32, i32, i32) {
    %c0_i32 = arith.constant 0 : i32
    %c0_i32_0 = arith.constant 0 : i32
    %c0_i32_1 = arith.constant 0 : i32
    return %arg0, %c0_i32, %c0_i32_0 : i32, i32, i32
  }
}

</mosaic_0001>

<llo_original>
// kernel: cnn1d_forward.1
$region0: #{cnn1d_forward.1}
  #allocation0 [shape = 'u32[]', space=smem, size = 0x4, offset = 0x4, fixed_abs, tag = 'smem constant byte address 0x4 - core index']
  #allocation1 [shape = 'u32[144,128]{1,0:T(1,128)}', space=vmem, size = 0x12000, scoped, tag = 'internal scratch']
  #allocation2 [shape = 'f32[24,1024]{1,0:T(8,128)}', space=vmem, size = 0x18000, scoped, tag = 'scratch operand']
  #allocation3 [shape = 'f32[8,256]{1,0:T(8,128)}', space=vmem, size = 0x2000, scoped, tag = 'scratch operand']
  #allocation4 [shape = 'f32[8,256]{1,0:T(8,128)}', space=vmem, size = 0x2000, scoped, tag = 'scratch operand']
  #allocation5 [shape = 'f32[1,1]{1,0:T(1,128)S(1)}', space=vmem, size = 0x200, scoped, tag = 'scoped memory for cnn1d_forward.1']
  %s0 = inlined_call_operand.vmem [shape: bf16[1,80,600], index: 0, kind: input, shape index: {}]
  %s1 = inlined_call_operand.vmem [shape: bf16[600,320], index: 1, kind: input, shape index: {}]
  %s2 = inlined_call_operand.vmem [shape: f32[1,320], index: 2, kind: input, shape index: {}]
  %s3 = inlined_call_operand.vmem [shape: bf16[320,32], index: 3, kind: input, shape index: {}]
  %s4 = inlined_call_operand.vmem [shape: bf16[320,32], index: 4, kind: input, shape index: {}]
  %s5 = inlined_call_operand.vmem [shape: bf16[320,32], index: 5, kind: input, shape index: {}]
  %s6 = inlined_call_operand.vmem [shape: f32[1,32], index: 6, kind: input, shape index: {}]
  %s7 = inlined_call_operand.vmem [shape: bf16[32,64], index: 7, kind: input, shape index: {}]
  %s8 = inlined_call_operand.vmem [shape: bf16[32,64], index: 8, kind: input, shape index: {}]
  %s9 = inlined_call_operand.vmem [shape: f32[1,64], index: 9, kind: input, shape index: {}]
  %s10 = inlined_call_operand.vmem [shape: bf16[64,128], index: 10, kind: input, shape index: {}]
  %s11 = inlined_call_operand.vmem [shape: f32[1,128], index: 11, kind: input, shape index: {}]
  %s12 = inlined_call_operand.vmem [shape: bf16[128,1024], index: 12, kind: input, shape index: {}]
  %s13 = inlined_call_operand.vmem [shape: bf16[256,1024], index: 13, kind: input, shape index: {}]
  %s14 = inlined_call_operand.vmem [shape: f32[1,1024], index: 14, kind: input, shape index: {}]
  %s15 = inlined_call_operand.vmem [shape: bf16[256,128], index: 15, kind: input, shape index: {}]
  %s16 = inlined_call_operand.vmem [shape: f32[1,128], index: 16, kind: input, shape index: {}]
  %s17 = inlined_call_operand.vmem [shape: bf16[128,64], index: 17, kind: input, shape index: {}]
  %s18 = inlined_call_operand.vmem [shape: f32[1,64], index: 18, kind: input, shape index: {}]
  %s19 = inlined_call_operand.vmem [shape: bf16[64,1], index: 19, kind: input, shape index: {}]
  %s20 = inlined_call_operand.<no memory space> [shape: f32[1,1], index: 20, kind: input, shape index: {}]
  %s21 = inlined_call_operand.vmem [shape: f32[1,8,1], index: 21, kind: output, shape index: {}]
  %s22 = sld [smem:[#allocation0]]
  $region94: #{cnn1d_forward.1} parent=0
    _
  %s24 = ssub.s32 1, %s22
  %s25 = scalar_select 0, %s24, %s22
  %v26 = vstv %s20
  %27 = vst [vmem:[#allocation5] sm:$0x1] %v26
  // Predicated region
  $region2: #{cnn1d_forward.1} parent=0 // pred_check
    _
  $region3: #{cnn1d_forward.1} parent=0 // pred_check_branch
    %29 = sbr.rel (0) target = $region5
  $region4: #{cnn1d_forward.1} parent=0 // pred_region
    _
  $region5: #{cnn1d_forward.1} parent=0 // pred_fallthru
    _
  // Predicated region
  $region6: #{cnn1d_forward.1} parent=0 // pred_check
    _
  $region7: #{cnn1d_forward.1} parent=0 // pred_check_branch
    %31 = sbr.rel (0) target = $region9
  $region8: #{cnn1d_forward.1} parent=0 // pred_region
    _
  $region9: #{cnn1d_forward.1} parent=0 // pred_fallthru
    _
  // Predicated region
  $region10: #{cnn1d_forward.1} parent=0 // pred_check
    _
  $region11: #{cnn1d_forward.1} parent=0 // pred_check_branch
    %33 = sbr.rel (0) target = $region13
  $region12: #{cnn1d_forward.1} parent=0 // pred_region
    _
  $region13: #{cnn1d_forward.1} parent=0 // pred_fallthru
    _
  // Predicated region
  $region14: #{cnn1d_forward.1} parent=0 // pred_check
    _
  $region15: #{cnn1d_forward.1} parent=0 // pred_check_branch
    %35 = sbr.rel (0) target = $region17
  $region16: #{cnn1d_forward.1} parent=0 // pred_region
    _
  $region17: #{cnn1d_forward.1} parent=0 // pred_fallthru
    _
  // Predicated region
  $region18: #{cnn1d_forward.1} parent=0 // pred_check
    _
  $region19: #{cnn1d_forward.1} parent=0 // pred_check_branch
    %37 = sbr.rel (0) target = $region21
  $region20: #{cnn1d_forward.1} parent=0 // pred_region
    _
  $region21: #{cnn1d_forward.1} parent=0 // pred_fallthru
    _
  // Predicated region
  $region22: #{cnn1d_forward.1} parent=0 // pred_check
    _
  $region23: #{cnn1d_forward.1} parent=0 // pred_check_branch
    %39 = sbr.rel (0) target = $region25
  $region24: #{cnn1d_forward.1} parent=0 // pred_region
    _
  $region25: #{cnn1d_forward.1} parent=0 // pred_fallthru
    _
  // Predicated region
  $region26: #{cnn1d_forward.1} parent=0 // pred_check
    _
  $region27: #{cnn1d_forward.1} parent=0 // pred_check_branch
    %41 = sbr.rel (0) target = $region29
  $region28: #{cnn1d_forward.1} parent=0 // pred_region
    _
  $region29: #{cnn1d_forward.1} parent=0 // pred_fallthru
    _
  // Predicated region
  $region30: #{cnn1d_forward.1} parent=0 // pred_check
    _
  $region31: #{cnn1d_forward.1} parent=0 // pred_check_branch
    %43 = sbr.rel (0) target = $region33
  $region32: #{cnn1d_forward.1} parent=0 // pred_region
    _
  $region33: #{cnn1d_forward.1} parent=0 // pred_fallthru
    _
  // Predicated region
  $region34: #{cnn1d_forward.1} parent=0 // pred_check
    _
  $region35: #{cnn1d_forward.1} parent=0 // pred_check_branch
    %45 = sbr.rel (0) target = $region37
  $region36: #{cnn1d_forward.1} parent=0 // pred_region
    _
  $region37: #{cnn1d_forward.1} parent=0 // pred_fallthru
    _
  // Predicated region
  $region38: #{cnn1d_forward.1} parent=0 // pred_check
    _
  $region39: #{cnn1d_forward.1} parent=0 // pred_check_branch
    %47 = sbr.rel (0) target = $region41
  $region40: #{cnn1d_forward.1} parent=0 // pred_region
    _
  $region41: #{cnn1d_forward.1} parent=0 // pred_fallthru
    _
  // Predicated region
  $region42: #{cnn1d_forward.1} parent=0 // pred_check
    _
  $region43: #{cnn1d_forward.1} parent=0 // pred_check_branch
    %49 = sbr.rel (0) target = $region45
  $region44: #{cnn1d_forward.1} parent=0 // pred_region
    _
  $region45: #{cnn1d_forward.1} parent=0 // pred_fallthru
    _
  // Predicated region
  $region46: #{cnn1d_forward.1} parent=0 // pred_check
    _
  $region47: #{cnn1d_forward.1} parent=0 // pred_check_branch
    %51 = sbr.rel (0) target = $region49
  $region48: #{cnn1d_forward.1} parent=0 // pred_region
    _
  $region49: #{cnn1d_forward.1} parent=0 // pred_fallthru
    _
  // Predicated region
  $region50: #{cnn1d_forward.1} parent=0 // pred_check
    _
  $region51: #{cnn1d_forward.1} parent=0 // pred_check_branch
    %53 = sbr.rel (0) target = $region53
  $region52: #{cnn1d_forward.1} parent=0 // pred_region
    _
  $region53: #{cnn1d_forward.1} parent=0 // pred_fallthru
    _
  // Predicated region
  $region54: #{cnn1d_forward.1} parent=0 // pred_check
    _
  $region55: #{cnn1d_forward.1} parent=0 // pred_check_branch
    %55 = sbr.rel (0) target = $region57
  $region56: #{cnn1d_forward.1} parent=0 // pred_region
    _
  $region57: #{cnn1d_forward.1} parent=0 // pred_fallthru
    _
  // Predicated region
  $region58: #{cnn1d_forward.1} parent=0 // pred_check
    _
  $region59: #{cnn1d_forward.1} parent=0 // pred_check_branch
    %57 = sbr.rel (0) target = $region61
  $region60: #{cnn1d_forward.1} parent=0 // pred_region
    _
  $region61: #{cnn1d_forward.1} parent=0 // pred_fallthru
    _
  // Predicated region
  $region62: #{cnn1d_forward.1} parent=0 // pred_check
    _
  $region63: #{cnn1d_forward.1} parent=0 // pred_check_branch
    %59 = sbr.rel (0) target = $region65
  $region64: #{cnn1d_forward.1} parent=0 // pred_region
    _
  $region65: #{cnn1d_forward.1} parent=0 // pred_fallthru
    _
  // Predicated region
  $region66: #{cnn1d_forward.1} parent=0 // pred_check
    _
  $region67: #{cnn1d_forward.1} parent=0 // pred_check_branch
    %61 = sbr.rel (0) target = $region69
  $region68: #{cnn1d_forward.1} parent=0 // pred_region
    _
  $region69: #{cnn1d_forward.1} parent=0 // pred_fallthru
    _
  // Predicated region
  $region70: #{cnn1d_forward.1} parent=0 // pred_check
    _
  $region71: #{cnn1d_forward.1} parent=0 // pred_check_branch
    %63 = sbr.rel (0) target = $region73
  $region72: #{cnn1d_forward.1} parent=0 // pred_region
    _
  $region73: #{cnn1d_forward.1} parent=0 // pred_fallthru
    _
  // Predicated region
  $region74: #{cnn1d_forward.1} parent=0 // pred_check
    _
  $region75: #{cnn1d_forward.1} parent=0 // pred_check_branch
    %65 = sbr.rel (0) target = $region77
  $region76: #{cnn1d_forward.1} parent=0 // pred_region
    _
  $region77: #{cnn1d_forward.1} parent=0 // pred_fallthru
    _
  // Predicated region
  $region78: #{cnn1d_forward.1} parent=0 // pred_check
    _
  $region79: #{cnn1d_forward.1} parent=0 // pred_check_branch
    %67 = sbr.rel (0) target = $region81
  $region80: #{cnn1d_forward.1} parent=0 // pred_region
    _
  $region81: #{cnn1d_forward.1} parent=0 // pred_fallthru
    _
  // Predicated region
  $region82: #{cnn1d_forward.1} parent=0 // pred_check
    _
  $region83: #{cnn1d_forward.1} parent=0 // pred_check_branch
    %69 = sbr.rel (0) target = $region85
  $region84: #{cnn1d_forward.1} parent=0 // pred_region
    _
  $region85: #{cnn1d_forward.1} parent=0 // pred_fallthru
    _
  %v71 = vld [vmem:[%s0] sm:$0xff]
  %v72 = vld [vmem:[%s0 + $0x8] sm:$0xff]
  %v73 = vld [vmem:[%s0 + $0x10] sm:$0xf]
  %v74 = vld [vmem:[%s0 + $0x14] sm:$0xff]
  %v75 = vld [vmem:[%s0 + $0x1c] sm:$0xff]
  %v76 = vld [vmem:[%s0 + $0x24] sm:$0xf]
  %v77 = vld [vmem:[%s0 + $0x28] sm:$0xff]
  %v78 = vld [vmem:[%s0 + $0x30] sm:$0xff]
  %v79 = vld [vmem:[%s0 + $0x38] sm:$0xf]
  %v80 = vld [vmem:[%s0 + $0x3c] sm:$0xff]
  %v81 = vld [vmem:[%s0 + $0x44] sm:$0xff]
  %v82 = vld [vmem:[%s0 + $0x4c] sm:$0xf]
  %v83 = vld [vmem:[%s0 + $0x50] sm:$0xff]
  %v84 = vld [vmem:[%s0 + $0x58] sm:$0xff]
  %v85 = vld [vmem:[%s0 + $0x60] sm:$0xf]
  %v86 = vld [vmem:[%s0 + $0x64] sm:$0xff]
  %v87 = vld [vmem:[%s0 + $0x6c] sm:$0xff]
  %v88 = vld [vmem:[%s0 + $0x74] sm:$0xf]
  %v89 = vld [vmem:[%s0 + $0x78] sm:$0xff]
  %v90 = vld [vmem:[%s0 + $0x80] sm:$0xff]
  %v91 = vld [vmem:[%s0 + $0x88] sm:$0xf]
  %v92 = vld [vmem:[%s0 + $0x8c] sm:$0xff]
  %v93 = vld [vmem:[%s0 + $0x94] sm:$0xff]
  %v94 = vld [vmem:[%s0 + $0x9c] sm:$0xf]
  %v95 = vld [vmem:[%s0 + $0xa0] sm:$0xff]
  %v96 = vld [vmem:[%s0 + $0xa8] sm:$0xff]
  %v97 = vld [vmem:[%s0 + $0xb0] sm:$0xf]
  %v98 = vld [vmem:[%s0 + $0xb4] sm:$0xff]
  %v99 = vld [vmem:[%s0 + $0xbc] sm:$0xff]
  %v100 = vld [vmem:[%s0 + $0xc4] sm:$0xf]
  %v101 = vld [vmem:[%s1] sm:$0xff]
  %v102 = vld [vmem:[%s1 + $0x8] sm:$0xf]
  %v103 = vld [vmem:[%s1 + $0xc] sm:$0xff]
  %v104 = vld [vmem:[%s1 + $0x14] sm:$0xf]
  %v105 = vld [vmem:[%s1 + $0x18] sm:$0xff]
  %v106 = vld [vmem:[%s1 + $0x20] sm:$0xf]
  %v107 = vld [vmem:[%s1 + $0x24] sm:$0xff]
  %v108 = vld [vmem:[%s1 + $0x2c] sm:$0xf]
  %v109 = vld [vmem:[%s1 + $0x30] sm:$0xff]
  %v110 = vld [vmem:[%s1 + $0x38] sm:$0xf]
  %v111 = vld [vmem:[%s1 + $0x3c] sm:$0xff]
  %v112 = vld [vmem:[%s1 + $0x44] sm:$0xf]
  %v113 = vld [vmem:[%s1 + $0x48] sm:$0xff]
  %v114 = vld [vmem:[%s1 + $0x50] sm:$0xf]
  %v115 = vld [vmem:[%s1 + $0x54] sm:$0xff]
  %v116 = vld [vmem:[%s1 + $0x5c] sm:$0xf]
  %v117 = vld [vmem:[%s1 + $0x60] sm:$0xff]
  %v118 = vld [vmem:[%s1 + $0x68] sm:$0xf]
  %v119 = vld [vmem:[%s1 + $0x6c] sm:$0xff]
  %v120 = vld [vmem:[%s1 + $0x74] sm:$0xf]
  %v121 = vld [vmem:[%s1 + $0x78] sm:$0xff]
  %v122 = vld [vmem:[%s1 + $0x80] sm:$0xf]
  %v123 = vld [vmem:[%s1 + $0x84] sm:$0xff]
  %v124 = vld [vmem:[%s1 + $0x8c] sm:$0xf]
  %v125 = vld [vmem:[%s1 + $0x90] sm:$0xff]
  %v126 = vld [vmem:[%s1 + $0x98] sm:$0xf]
  %v127 = vld [vmem:[%s1 + $0x9c] sm:$0xff]
  %v128 = vld [vmem:[%s1 + $0xa4] sm:$0xf]
  %v129 = vld [vmem:[%s1 + $0xa8] sm:$0xff]
  %v130 = vld [vmem:[%s1 + $0xb0] sm:$0xf]
  %v131 = vld [vmem:[%s1 + $0xb4] sm:$0xff]
  %v132 = vld [vmem:[%s1 + $0xbc] sm:$0xf]
  %v133 = vld [vmem:[%s1 + $0xc0] sm:$0xff]
  %v134 = vld [vmem:[%s1 + $0xc8] sm:$0xf]
  %v135 = vld [vmem:[%s1 + $0xcc] sm:$0xff]
  %v136 = vld [vmem:[%s1 + $0xd4] sm:$0xf]
  %v137 = vld [vmem:[%s1 + $0xd8] sm:$0xff]
  %v138 = vld [vmem:[%s1 + $0xe0] sm:$0xf]
  %v139 = vld [vmem:[%s1 + $0xe4] sm:$0xff]
  %v140 = vld [vmem:[%s1 + $0xec] sm:$0xf]
  %v141 = vld [vmem:[%s1 + $0xf0] sm:$0xff]
  %v142 = vld [vmem:[%s1 + $0xf8] sm:$0xf]
  %v143 = vld [vmem:[%s1 + $0xfc] sm:$0xff]
  %v144 = vld [vmem:[%s1 + $0x104] sm:$0xf]
  %v145 = vld [vmem:[%s1 + $0x108] sm:$0xff]
  %v146 = vld [vmem:[%s1 + $0x110] sm:$0xf]
  %v147 = vld [vmem:[%s1 + $0x114] sm:$0xff]
  %v148 = vld [vmem:[%s1 + $0x11c] sm:$0xf]
  %v149 = vld [vmem:[%s1 + $0x120] sm:$0xff]
  %v150 = vld [vmem:[%s1 + $0x128] sm:$0xf]
  %v151 = vld [vmem:[%s1 + $0x12c] sm:$0xff]
  %v152 = vld [vmem:[%s1 + $0x134] sm:$0xf]
  %v153 = vld [vmem:[%s1 + $0x138] sm:$0xff]
  %v154 = vld [vmem:[%s1 + $0x140] sm:$0xf]
  %v155 = vld [vmem:[%s1 + $0x144] sm:$0xff]
  %v156 = vld [vmem:[%s1 + $0x14c] sm:$0xf]
  %v157 = vld [vmem:[%s1 + $0x150] sm:$0xff]
  %v158 = vld [vmem:[%s1 + $0x158] sm:$0xf]
  %v159 = vld [vmem:[%s1 + $0x15c] sm:$0xff]
  %v160 = vld [vmem:[%s1 + $0x164] sm:$0xf]
  %v161 = vld [vmem:[%s1 + $0x168] sm:$0xff]
  %v162 = vld [vmem:[%s1 + $0x170] sm:$0xf]
  %v163 = vld [vmem:[%s1 + $0x174] sm:$0xff]
  %v164 = vld [vmem:[%s1 + $0x17c] sm:$0xf]
  %v165 = vld [vmem:[%s1 + $0x180] sm:$0xff]
  %v166 = vld [vmem:[%s1 + $0x188] sm:$0xf]
  %v167 = vld [vmem:[%s1 + $0x18c] sm:$0xff]
  %v168 = vld [vmem:[%s1 + $0x194] sm:$0xf]
  %v169 = vld [vmem:[%s1 + $0x198] sm:$0xff]
  %v170 = vld [vmem:[%s1 + $0x1a0] sm:$0xf]
  %v171 = vld [vmem:[%s1 + $0x1a4] sm:$0xff]
  %v172 = vld [vmem:[%s1 + $0x1ac] sm:$0xf]
  %v173 = vld [vmem:[%s1 + $0x1b0] sm:$0xff]
  %v174 = vld [vmem:[%s1 + $0x1b8] sm:$0xf]
  %v175 = vld [vmem:[%s1 + $0x1bc] sm:$0xff]
  %v176 = vld [vmem:[%s1 + $0x1c4] sm:$0xf]
  %v177 = vld [vmem:[%s1 + $0x1c8] sm:$0xff]
  %v178 = vld [vmem:[%s1 + $0x1d0] sm:$0xf]
  %v179 = vld [vmem:[%s1 + $0x1d4] sm:$0xff]
  %v180 = vld [vmem:[%s1 + $0x1dc] sm:$0xf]
  %v181 = vld [vmem:[%s1 + $0x1e0] sm:$0xff]
  %v182 = vld [vmem:[%s1 + $0x1e8] sm:$0xf]
  %v183 = vld [vmem:[%s1 + $0x1ec] sm:$0xff]
  %v184 = vld [vmem:[%s1 + $0x1f4] sm:$0xf]
  %v185 = vld [vmem:[%s1 + $0x1f8] sm:$0xff]
  %v186 = vld [vmem:[%s1 + $0x200] sm:$0xf]
  %v187 = vld [vmem:[%s1 + $0x204] sm:$0xff]
  %v188 = vld [vmem:[%s1 + $0x20c] sm:$0xf]
  %v189 = vld [vmem:[%s1 + $0x210] sm:$0xff]
  %v190 = vld [vmem:[%s1 + $0x218] sm:$0xf]
  %v191 = vld [vmem:[%s1 + $0x21c] sm:$0xff]
  %v192 = vld [vmem:[%s1 + $0x224] sm:$0xf]
  %v193 = vld [vmem:[%s1 + $0x228] sm:$0xff]
  %v194 = vld [vmem:[%s1 + $0x230] sm:$0xf]
  %v195 = vld [vmem:[%s1 + $0x234] sm:$0xff]
  %v196 = vld [vmem:[%s1 + $0x23c] sm:$0xf]
  %v197 = vld [vmem:[%s1 + $0x240] sm:$0xff]
  %v198 = vld [vmem:[%s1 + $0x248] sm:$0xf]
  %v199 = vld [vmem:[%s1 + $0x24c] sm:$0xff]
  %v200 = vld [vmem:[%s1 + $0x254] sm:$0xf]
  %v201 = vld [vmem:[%s1 + $0x258] sm:$0xff]
  %v202 = vld [vmem:[%s1 + $0x260] sm:$0xf]
  %v203 = vld [vmem:[%s1 + $0x264] sm:$0xff]
  %v204 = vld [vmem:[%s1 + $0x26c] sm:$0xf]
  %v205 = vld [vmem:[%s1 + $0x270] sm:$0xff]
  %v206 = vld [vmem:[%s1 + $0x278] sm:$0xf]
  %v207 = vld [vmem:[%s1 + $0x27c] sm:$0xff]
  %v208 = vld [vmem:[%s1 + $0x284] sm:$0xf]
  %v209 = vld [vmem:[%s1 + $0x288] sm:$0xff]
  %v210 = vld [vmem:[%s1 + $0x290] sm:$0xf]
  %v211 = vld [vmem:[%s1 + $0x294] sm:$0xff]
  %v212 = vld [vmem:[%s1 + $0x29c] sm:$0xf]
  %v213 = vld [vmem:[%s1 + $0x2a0] sm:$0xff]
  %v214 = vld [vmem:[%s1 + $0x2a8] sm:$0xf]
  %v215 = vld [vmem:[%s1 + $0x2ac] sm:$0xff]
  %v216 = vld [vmem:[%s1 + $0x2b4] sm:$0xf]
  %v217 = vld [vmem:[%s1 + $0x2b8] sm:$0xff]
  %v218 = vld [vmem:[%s1 + $0x2c0] sm:$0xf]
  %v219 = vld [vmem:[%s1 + $0x2c4] sm:$0xff]
  %v220 = vld [vmem:[%s1 + $0x2cc] sm:$0xf]
  %v221 = vld [vmem:[%s1 + $0x2d0] sm:$0xff]
  %v222 = vld [vmem:[%s1 + $0x2d8] sm:$0xf]
  %v223 = vld [vmem:[%s1 + $0x2dc] sm:$0xff]
  %v224 = vld [vmem:[%s1 + $0x2e4] sm:$0xf]
  %v225 = vld [vmem:[%s1 + $0x2e8] sm:$0xff]
  %v226 = vld [vmem:[%s1 + $0x2f0] sm:$0xf]
  %v227 = vld [vmem:[%s1 + $0x2f4] sm:$0xff]
  %v228 = vld [vmem:[%s1 + $0x2fc] sm:$0xf]
  %v229 = vld [vmem:[%s1 + $0x300] sm:$0xff]
  %v230 = vld [vmem:[%s1 + $0x308] sm:$0xf]
  %v231 = vld [vmem:[%s1 + $0x30c] sm:$0xff]
  %v232 = vld [vmem:[%s1 + $0x314] sm:$0xf]
  %v233 = vld [vmem:[%s1 + $0x318] sm:$0xff]
  %v234 = vld [vmem:[%s1 + $0x320] sm:$0xf]
  %v235 = vld [vmem:[%s1 + $0x324] sm:$0xff]
  %v236 = vld [vmem:[%s1 + $0x32c] sm:$0xf]
  %v237 = vld [vmem:[%s1 + $0x330] sm:$0xff]
  %v238 = vld [vmem:[%s1 + $0x338] sm:$0xf]
  %v239 = vld [vmem:[%s1 + $0x33c] sm:$0xff]
  %v240 = vld [vmem:[%s1 + $0x344] sm:$0xf]
  %v241 = vld [vmem:[%s1 + $0x348] sm:$0xff]
  %v242 = vld [vmem:[%s1 + $0x350] sm:$0xf]
  %v243 = vld [vmem:[%s1 + $0x354] sm:$0xff]
  %v244 = vld [vmem:[%s1 + $0x35c] sm:$0xf]
  %v245 = vld [vmem:[%s1 + $0x360] sm:$0xff]
  %v246 = vld [vmem:[%s1 + $0x368] sm:$0xf]
  %v247 = vld [vmem:[%s1 + $0x36c] sm:$0xff]
  %v248 = vld [vmem:[%s1 + $0x374] sm:$0xf]
  %v249 = vld [vmem:[%s1 + $0x378] sm:$0xff]
  %v250 = vld [vmem:[%s1 + $0x380] sm:$0xf]
  %v251 = vld [vmem:[%s2] sm:$0x7]
  %v253 = vlaneseq
  %v254 = vshrl.u32 %v253, 7
  %v255 = vsub.s32 0, %v254
  %v256 = vrot.slane %v251, %v255
  %v257 = vlaneseq
  %v258 = vshrl.u32 %v257, 7
  %v259 = vsub.s32 1, %v258
  %v260 = vrot.slane %v251, %v259
  %v261 = vlaneseq
  %v262 = vshrl.u32 %v261, 7
  %v263 = vsub.s32 2, %v262
  %v264 = vrot.slane %v251, %v263
  %v298 = vunpack.c.l.b16 %v71
  %v299 = vunpack.c.h.b16 %v71
  %v300 = vunpack.c.l.b16 %v72
  %v301 = vunpack.c.h.b16 %v72
  %v302 = vunpack.c.l.b16 %v73
  %v303 = vunpack.c.l.b16 %v74
  %v304 = vunpack.c.h.b16 %v74
  %v305 = vunpack.c.l.b16 %v75
  %v306 = vunpack.c.h.b16 %v75
  %v307 = vunpack.c.l.b16 %v76
  %v308 = vunpack.c.l.b16 %v77
  %v309 = vunpack.c.h.b16 %v77
  %v310 = vunpack.c.l.b16 %v78
  %v311 = vunpack.c.h.b16 %v78
  %v312 = vunpack.c.l.b16 %v79
  %v313 = vunpack.c.l.b16 %v80
  %v314 = vunpack.c.h.b16 %v80
  %v315 = vunpack.c.l.b16 %v81
  %v316 = vunpack.c.h.b16 %v81
  %v317 = vunpack.c.l.b16 %v82
  %v318 = vunpack.c.l.b16 %v83
  %v319 = vunpack.c.h.b16 %v83
  %v320 = vunpack.c.l.b16 %v84
  %v321 = vunpack.c.h.b16 %v84
  %v322 = vunpack.c.l.b16 %v85
  %v323 = vunpack.c.l.b16 %v86
  %v324 = vunpack.c.h.b16 %v86
  %v325 = vunpack.c.l.b16 %v87
  %v326 = vunpack.c.h.b16 %v87
  %v327 = vunpack.c.l.b16 %v88
  %v328 = vunpack.c.l.b16 %v89
  %v329 = vunpack.c.h.b16 %v89
  %v330 = vunpack.c.l.b16 %v90
  %v331 = vunpack.c.h.b16 %v90
  %v332 = vunpack.c.l.b16 %v91
  %v333 = vunpack.c.l.b16 %v92
  %v334 = vunpack.c.h.b16 %v92
  %v335 = vunpack.c.l.b16 %v93
  %v336 = vunpack.c.h.b16 %v93
  %v337 = vunpack.c.l.b16 %v94
  %v338 = vunpack.c.l.b16 %v95
  %v339 = vunpack.c.h.b16 %v95
  %v340 = vunpack.c.l.b16 %v96
  %v341 = vunpack.c.h.b16 %v96
  %v342 = vunpack.c.l.b16 %v97
  %v343 = vunpack.c.l.b16 %v98
  %v344 = vunpack.c.h.b16 %v98
  %v345 = vunpack.c.l.b16 %v99
  %v346 = vunpack.c.h.b16 %v99
  %v347 = vunpack.c.l.b16 %v100
  %v348 = vpack.c.b16 %v303, %v298
  %v349 = vpack.c.b16 %v304, %v299
  %v350 = vpack.c.b16 %v305, %v300
  %v351 = vpack.c.b16 %v306, %v301
  %v352 = vpack.c.b16 %v307, %v302
  %v353 = vpack.c.b16 %v313, %v308
  %v354 = vpack.c.b16 %v314, %v309
  %v355 = vpack.c.b16 %v315, %v310
  %v356 = vpack.c.b16 %v316, %v311
  %v357 = vpack.c.b16 %v317, %v312
  %v358 = vpack.c.b16 %v323, %v318
  %v359 = vpack.c.b16 %v324, %v319
  %v360 = vpack.c.b16 %v325, %v320
  %v361 = vpack.c.b16 %v326, %v321
  %v362 = vpack.c.b16 %v327, %v322
  %v363 = vpack.c.b16 %v333, %v328
  %v364 = vpack.c.b16 %v334, %v329
  %v365 = vpack.c.b16 %v335, %v330
  %v366 = vpack.c.b16 %v336, %v331
  %v367 = vpack.c.b16 %v337, %v332
  %v368 = vpack.c.b16 %v343, %v338
  %v369 = vpack.c.b16 %v344, %v339
  %v370 = vpack.c.b16 %v345, %v340
  %v371 = vpack.c.b16 %v346, %v341
  %v372 = vpack.c.b16 %v347, %v342
  %v543 = vunpack.c.l.b16 %v101
  %v544 = vunpack.c.h.b16 %v101
  %v545 = vunpack.c.l.b16 %v102
  %v546 = vunpack.c.l.b16 %v103
  %v547 = vunpack.c.h.b16 %v103
  %v548 = vunpack.c.l.b16 %v104
  %v549 = vunpack.c.l.b16 %v105
  %v550 = vunpack.c.h.b16 %v105
  %v551 = vunpack.c.l.b16 %v106
  %v552 = vunpack.c.l.b16 %v107
  %v553 = vunpack.c.h.b16 %v107
  %v554 = vunpack.c.l.b16 %v108
  %v555 = vunpack.c.l.b16 %v109
  %v556 = vunpack.c.h.b16 %v109
  %v557 = vunpack.c.l.b16 %v110
  %v558 = vunpack.c.l.b16 %v111
  %v559 = vunpack.c.h.b16 %v111
  %v560 = vunpack.c.l.b16 %v112
  %v561 = vunpack.c.l.b16 %v113
  %v562 = vunpack.c.h.b16 %v113
  %v563 = vunpack.c.l.b16 %v114
  %v564 = vunpack.c.l.b16 %v115
  %v565 = vunpack.c.h.b16 %v115
  %v566 = vunpack.c.l.b16 %v116
  %v567 = vunpack.c.l.b16 %v117
  %v568 = vunpack.c.h.b16 %v117
  %v569 = vunpack.c.l.b16 %v118
  %v570 = vunpack.c.l.b16 %v119
  %v571 = vunpack.c.h.b16 %v119
  %v572 = vunpack.c.l.b16 %v120
  %v573 = vunpack.c.l.b16 %v121
  %v574 = vunpack.c.h.b16 %v121
  %v575 = vunpack.c.l.b16 %v122
  %v576 = vunpack.c.l.b16 %v123
  %v577 = vunpack.c.h.b16 %v123
  %v578 = vunpack.c.l.b16 %v124
  %v579 = vunpack.c.l.b16 %v125
  %v580 = vunpack.c.h.b16 %v125
  %v581 = vunpack.c.l.b16 %v126
  %v582 = vunpack.c.l.b16 %v127
  %v583 = vunpack.c.h.b16 %v127
  %v584 = vunpack.c.l.b16 %v128
  %v585 = vunpack.c.l.b16 %v129
  %v586 = vunpack.c.h.b16 %v129
  %v587 = vunpack.c.l.b16 %v130
  %v588 = vunpack.c.l.b16 %v131
  %v589 = vunpack.c.h.b16 %v131
  %v590 = vunpack.c.l.b16 %v132
  %v591 = vunpack.c.l.b16 %v133
  %v592 = vunpack.c.h.b16 %v133
  %v593 = vunpack.c.l.b16 %v134
  %v594 = vunpack.c.l.b16 %v135
  %v595 = vunpack.c.h.b16 %v135
  %v596 = vunpack.c.l.b16 %v136
  %v597 = vunpack.c.l.b16 %v137
  %v598 = vunpack.c.h.b16 %v137
  %v599 = vunpack.c.l.b16 %v138
  %v600 = vunpack.c.l.b16 %v139
  %v601 = vunpack.c.h.b16 %v139
  %v602 = vunpack.c.l.b16 %v140
  %v603 = vunpack.c.l.b16 %v141
  %v604 = vunpack.c.h.b16 %v141
  %v605 = vunpack.c.l.b16 %v142
  %v606 = vunpack.c.l.b16 %v143
  %v607 = vunpack.c.h.b16 %v143
  %v608 = vunpack.c.l.b16 %v144
  %v609 = vunpack.c.l.b16 %v145
  %v610 = vunpack.c.h.b16 %v145
  %v611 = vunpack.c.l.b16 %v146
  %v612 = vunpack.c.l.b16 %v147
  %v613 = vunpack.c.h.b16 %v147
  %v614 = vunpack.c.l.b16 %v148
  %v615 = vunpack.c.l.b16 %v149
  %v616 = vunpack.c.h.b16 %v149
  %v617 = vunpack.c.l.b16 %v150
  %v618 = vunpack.c.l.b16 %v151
  %v619 = vunpack.c.h.b16 %v151
  %v620 = vunpack.c.l.b16 %v152
  %v621 = vunpack.c.l.b16 %v153
  %v622 = vunpack.c.h.b16 %v153
  %v623 = vunpack.c.l.b16 %v154
  %v624 = vunpack.c.l.b16 %v155
  %v625 = vunpack.c.h.b16 %v155
  %v626 = vunpack.c.l.b16 %v156
  %v627 = vunpack.c.l.b16 %v157
  %v628 = vunpack.c.h.b16 %v157
  %v629 = vunpack.c.l.b16 %v158
  %v630 = vunpack.c.l.b16 %v159
  %v631 = vunpack.c.h.b16 %v159
  %v632 = vunpack.c.l.b16 %v160
  %v633 = vunpack.c.l.b16 %v161
  %v634 = vunpack.c.h.b16 %v161
  %v635 = vunpack.c.l.b16 %v162
  %v636 = vunpack.c.l.b16 %v163
  %v637 = vunpack.c.h.b16 %v163
  %v638 = vunpack.c.l.b16 %v164
  %v639 = vunpack.c.l.b16 %v165
  %v640 = vunpack.c.h.b16 %v165
  %v641 = vunpack.c.l.b16 %v166
  %v642 = vunpack.c.l.b16 %v167
  %v643 = vunpack.c.h.b16 %v167
  %v644 = vunpack.c.l.b16 %v168
  %v645 = vunpack.c.l.b16 %v169
  %v646 = vunpack.c.h.b16 %v169
  %v647 = vunpack.c.l.b16 %v170
  %v648 = vunpack.c.l.b16 %v171
  %v649 = vunpack.c.h.b16 %v171
  %v650 = vunpack.c.l.b16 %v172
  %v651 = vunpack.c.l.b16 %v173
  %v652 = vunpack.c.h.b16 %v173
  %v653 = vunpack.c.l.b16 %v174
  %v654 = vunpack.c.l.b16 %v175
  %v655 = vunpack.c.h.b16 %v175
  %v656 = vunpack.c.l.b16 %v176
  %v657 = vunpack.c.l.b16 %v177
  %v658 = vunpack.c.h.b16 %v177
  %v659 = vunpack.c.l.b16 %v178
  %v660 = vunpack.c.l.b16 %v179
  %v661 = vunpack.c.h.b16 %v179
  %v662 = vunpack.c.l.b16 %v180
  %v663 = vunpack.c.l.b16 %v181
  %v664 = vunpack.c.h.b16 %v181
  %v665 = vunpack.c.l.b16 %v182
  %v666 = vunpack.c.l.b16 %v183
  %v667 = vunpack.c.h.b16 %v183
  %v668 = vunpack.c.l.b16 %v184
  %v669 = vunpack.c.l.b16 %v185
  %v670 = vunpack.c.h.b16 %v185
  %v671 = vunpack.c.l.b16 %v186
  %v672 = vunpack.c.l.b16 %v187
  %v673 = vunpack.c.h.b16 %v187
  %v674 = vunpack.c.l.b16 %v188
  %v675 = vunpack.c.l.b16 %v189
  %v676 = vunpack.c.h.b16 %v189
  %v677 = vunpack.c.l.b16 %v190
  %v678 = vunpack.c.l.b16 %v191
  %v679 = vunpack.c.h.b16 %v191
  %v680 = vunpack.c.l.b16 %v192
  %v681 = vunpack.c.l.b16 %v193
  %v682 = vunpack.c.h.b16 %v193
  %v683 = vunpack.c.l.b16 %v194
  %v684 = vunpack.c.l.b16 %v195
  %v685 = vunpack.c.h.b16 %v195
  %v686 = vunpack.c.l.b16 %v196
  %v687 = vunpack.c.l.b16 %v197
  %v688 = vunpack.c.h.b16 %v197
  %v689 = vunpack.c.l.b16 %v198
  %v690 = vunpack.c.l.b16 %v199
  %v691 = vunpack.c.h.b16 %v199
  %v692 = vunpack.c.l.b16 %v200
  %v693 = vunpack.c.l.b16 %v201
  %v694 = vunpack.c.h.b16 %v201
  %v695 = vunpack.c.l.b16 %v202
  %v696 = vunpack.c.l.b16 %v203
  %v697 = vunpack.c.h.b16 %v203
  %v698 = vunpack.c.l.b16 %v204
  %v699 = vunpack.c.l.b16 %v205
  %v700 = vunpack.c.h.b16 %v205
  %v701 = vunpack.c.l.b16 %v206
  %v702 = vunpack.c.l.b16 %v207
  %v703 = vunpack.c.h.b16 %v207
  %v704 = vunpack.c.l.b16 %v208
  %v705 = vunpack.c.l.b16 %v209
  %v706 = vunpack.c.h.b16 %v209
  %v707 = vunpack.c.l.b16 %v210
  %v708 = vunpack.c.l.b16 %v211
  %v709 = vunpack.c.h.b16 %v211
  %v710 = vunpack.c.l.b16 %v212
  %v711 = vunpack.c.l.b16 %v213
  %v712 = vunpack.c.h.b16 %v213
  %v713 = vunpack.c.l.b16 %v214
  %v714 = vunpack.c.l.b16 %v215
  %v715 = vunpack.c.h.b16 %v215
  %v716 = vunpack.c.l.b16 %v216
  %v717 = vunpack.c.l.b16 %v217
  %v718 = vunpack.c.h.b16 %v217
  %v719 = vunpack.c.l.b16 %v218
  %v720 = vunpack.c.l.b16 %v219
  %v721 = vunpack.c.h.b16 %v219
  %v722 = vunpack.c.l.b16 %v220
  %v723 = vunpack.c.l.b16 %v221
  %v724 = vunpack.c.h.b16 %v221
  %v725 = vunpack.c.l.b16 %v222
  %v726 = vunpack.c.l.b16 %v223
  %v727 = vunpack.c.h.b16 %v223
  %v728 = vunpack.c.l.b16 %v224
  %v729 = vunpack.c.l.b16 %v225
  %v730 = vunpack.c.h.b16 %v225
  %v731 = vunpack.c.l.b16 %v226
  %v732 = vunpack.c.l.b16 %v227
  %v733 = vunpack.c.h.b16 %v227
  %v734 = vunpack.c.l.b16 %v228
  %v735 = vunpack.c.l.b16 %v229
  %v736 = vunpack.c.h.b16 %v229
  %v737 = vunpack.c.l.b16 %v230
  %v738 = vunpack.c.l.b16 %v231
  %v739 = vunpack.c.h.b16 %v231
  %v740 = vunpack.c.l.b16 %v232
  %v741 = vunpack.c.l.b16 %v233
  %v742 = vunpack.c.h.b16 %v233
  %v743 = vunpack.c.l.b16 %v234
  %v744 = vunpack.c.l.b16 %v235
  %v745 = vunpack.c.h.b16 %v235
  %v746 = vunpack.c.l.b16 %v236
  %v747 = vunpack.c.l.b16 %v237
  %v748 = vunpack.c.h.b16 %v237
  %v749 = vunpack.c.l.b16 %v238
  %v750 = vunpack.c.l.b16 %v239
  %v751 = vunpack.c.h.b16 %v239
  %v752 = vunpack.c.l.b16 %v240
  %v753 = vunpack.c.l.b16 %v241
  %v754 = vunpack.c.h.b16 %v241
  %v755 = vunpack.c.l.b16 %v242
  %v756 = vunpack.c.l.b16 %v243
  %v757 = vunpack.c.h.b16 %v243
  %v758 = vunpack.c.l.b16 %v244
  %v759 = vunpack.c.l.b16 %v245
  %v760 = vunpack.c.h.b16 %v245
  %v761 = vunpack.c.l.b16 %v246
  %v762 = vunpack.c.l.b16 %v247
  %v763 = vunpack.c.h.b16 %v247
  %v764 = vunpack.c.l.b16 %v248
  %v765 = vunpack.c.l.b16 %v249
  %v766 = vunpack.c.h.b16 %v249
  %v767 = vunpack.c.l.b16 %v250
  %v768 = vpack.c.b16 %v546, %v543
  %v769 = vpack.c.b16 %v547, %v544
  %v770 = vpack.c.b16 %v548, %v545
  %v771 = vpack.c.b16 %v552, %v549
  %v772 = vpack.c.b16 %v553, %v550
  %v773 = vpack.c.b16 %v554, %v551
  %v774 = vpack.c.b16 %v558, %v555
  %v775 = vpack.c.b16 %v559, %v556
  %v776 = vpack.c.b16 %v560, %v557
  %v777 = vpack.c.b16 %v564, %v561
  %v778 = vpack.c.b16 %v565, %v562
  %v779 = vpack.c.b16 %v566, %v563
  %v780 = vpack.c.b16 %v570, %v567
  %v781 = vpack.c.b16 %v571, %v568
  %v782 = vpack.c.b16 %v572, %v569
  %v783 = vpack.c.b16 %v576, %v573
  %v784 = vpack.c.b16 %v577, %v574
  %v785 = vpack.c.b16 %v578, %v575
  %v786 = vpack.c.b16 %v582, %v579
  %v787 = vpack.c.b16 %v583, %v580
  %v788 = vpack.c.b16 %v584, %v581
  %v789 = vpack.c.b16 %v588, %v585
  %v790 = vpack.c.b16 %v589, %v586
  %v791 = vpack.c.b16 %v590, %v587
  %v792 = vpack.c.b16 %v594, %v591
  %v793 = vpack.c.b16 %v595, %v592
  %v794 = vpack.c.b16 %v596, %v593
  %v795 = vpack.c.b16 %v600, %v597
  %v796 = vpack.c.b16 %v601, %v598
  %v797 = vpack.c.b16 %v602, %v599
  %v798 = vpack.c.b16 %v606, %v603
  %v799 = vpack.c.b16 %v607, %v604
  %v800 = vpack.c.b16 %v608, %v605
  %v801 = vpack.c.b16 %v612, %v609
  %v802 = vpack.c.b16 %v613, %v610
  %v803 = vpack.c.b16 %v614, %v611
  %v804 = vpack.c.b16 %v618, %v615
  %v805 = vpack.c.b16 %v619, %v616
  %v806 = vpack.c.b16 %v620, %v617
  %v807 = vpack.c.b16 %v624, %v621
  %v808 = vpack.c.b16 %v625, %v622
  %v809 = vpack.c.b16 %v626, %v623
  %v810 = vpack.c.b16 %v630, %v627
  %v811 = vpack.c.b16 %v631, %v628
  %v812 = vpack.c.b16 %v632, %v629
  %v813 = vpack.c.b16 %v636, %v633
  %v814 = vpack.c.b16 %v637, %v634
  %v815 = vpack.c.b16 %v638, %v635
  %v816 = vpack.c.b16 %v642, %v639
  %v817 = vpack.c.b16 %v643, %v640
  %v818 = vpack.c.b16 %v644, %v641
  %v819 = vpack.c.b16 %v648, %v645
  %v820 = vpack.c.b16 %v649, %v646
  %v821 = vpack.c.b16 %v650, %v647
  %v822 = vpack.c.b16 %v654, %v651
  %v823 = vpack.c.b16 %v655, %v652
  %v824 = vpack.c.b16 %v656, %v653
  %v825 = vpack.c.b16 %v660, %v657
  %v826 = vpack.c.b16 %v661, %v658
  %v827 = vpack.c.b16 %v662, %v659
  %v828 = vpack.c.b16 %v666, %v663
  %v829 = vpack.c.b16 %v667, %v664
  %v830 = vpack.c.b16 %v668, %v665
  %v831 = vpack.c.b16 %v672, %v669
  %v832 = vpack.c.b16 %v673, %v670
  %v833 = vpack.c.b16 %v674, %v671
  %v834 = vpack.c.b16 %v678, %v675
  %v835 = vpack.c.b16 %v679, %v676
  %v836 = vpack.c.b16 %v680, %v677
  %v837 = vpack.c.b16 %v684, %v681
  %v838 = vpack.c.b16 %v685, %v682
  %v839 = vpack.c.b16 %v686, %v683
  %v840 = vpack.c.b16 %v690, %v687
  %v841 = vpack.c.b16 %v691, %v688
  %v842 = vpack.c.b16 %v692, %v689
  %v843 = vpack.c.b16 %v696, %v693
  %v844 = vpack.c.b16 %v697, %v694
  %v845 = vpack.c.b16 %v698, %v695
  %v846 = vpack.c.b16 %v702, %v699
  %v847 = vpack.c.b16 %v703, %v700
  %v848 = vpack.c.b16 %v704, %v701
  %v849 = vpack.c.b16 %v708, %v705
  %v850 = vpack.c.b16 %v709, %v706
  %v851 = vpack.c.b16 %v710, %v707
  %v852 = vpack.c.b16 %v714, %v711
  %v853 = vpack.c.b16 %v715, %v712
  %v854 = vpack.c.b16 %v716, %v713
  %v855 = vpack.c.b16 %v720, %v717
  %v856 = vpack.c.b16 %v721, %v718
  %v857 = vpack.c.b16 %v722, %v719
  %v858 = vpack.c.b16 %v726, %v723
  %v859 = vpack.c.b16 %v727, %v724
  %v860 = vpack.c.b16 %v728, %v725
  %v861 = vpack.c.b16 %v732, %v729
  %v862 = vpack.c.b16 %v733, %v730
  %v863 = vpack.c.b16 %v734, %v731
  %v864 = vpack.c.b16 %v738, %v735
  %v865 = vpack.c.b16 %v739, %v736
  %v866 = vpack.c.b16 %v740, %v737
  %v867 = vpack.c.b16 %v744, %v741
  %v868 = vpack.c.b16 %v745, %v742
  %v869 = vpack.c.b16 %v746, %v743
  %v870 = vpack.c.b16 %v750, %v747
  %v871 = vpack.c.b16 %v751, %v748
  %v872 = vpack.c.b16 %v752, %v749
  %v873 = vpack.c.b16 %v756, %v753
  %v874 = vpack.c.b16 %v757, %v754
  %v875 = vpack.c.b16 %v758, %v755
  %v876 = vpack.c.b16 %v762, %v759
  %v877 = vpack.c.b16 %v763, %v760
  %v878 = vpack.c.b16 %v764, %v761
  %v879 = vpack.c.b16 %v765, %v765
  %v880 = vpack.c.b16 %v766, %v766
  %v881 = vpack.c.b16 %v767, %v767
  %vm993 = vcmask 719872
  %v995 = vsel %vm993, %v352, 0
  %v998 = vsel %vm993, %v357, 0
  %v1001 = vsel %vm993, %v362, 0
  %v1004 = vsel %vm993, %v367, 0
  %v1007 = vsel %vm993, %v372, 0
  %vm1009 = vcmask 1043456
  %v1011 = vsel %vm1009, %v879, 0
  %v1014 = vsel %vm1009, %v880, 0
  %v1017 = vsel %vm1009, %v881, 0
  %1019 = vmatprep.subr.bf16.mxu0 %v790
  %1020 = vmatpush1.bf16.msra.mxu0 %v789
  %1021 = vmatprep.subr.bf16.mxu0 %v787
  %1022 = vmatpush1.bf16.msra.mxu0 %v786
  %1023 = vmatprep.subr.bf16.mxu0 %v784
  %1024 = vmatpush1.bf16.msra.mxu0 %v783
  %1025 = vmatprep.subr.bf16.mxu0 %v781
  %1026 = vmatpush1.bf16.msra.mxu0 %v780
  %1027 = vmatprep.subr.bf16.mxu0 %v778
  %1028 = vmatpush1.bf16.msra.mxu0 %v777
  %1029 = vmatprep.subr.bf16.mxu0 %v775
  %1030 = vmatpush1.bf16.msra.mxu0 %v774
  %1031 = vmatprep.subr.bf16.mxu0 %v772
  %1032 = vmatpush1.bf16.msra.mxu0 %v771
  %1033 = vmatprep.subr.bf16.mxu0 %v769
  %1034 = vmatpush1.bf16.msra.mxu0 %v768
  %1035 = vmatprep.subr.bf16.mxu0 %v814
  %1036 = vmatpush2.bf16.msra.mxu0 %v813
  %1037 = vmatprep.subr.bf16.mxu0 %v811
  %1038 = vmatpush2.bf16.msra.mxu0 %v810
  %1039 = vmatprep.subr.bf16.mxu0 %v808
  %1040 = vmatpush2.bf16.msra.mxu0 %v807
  %1041 = vmatprep.subr.bf16.mxu0 %v805
  %1042 = vmatpush2.bf16.msra.mxu0 %v804
  %1043 = vmatprep.subr.bf16.mxu0 %v802
  %1044 = vmatpush2.bf16.msra.mxu0 %v801
  %1045 = vmatprep.subr.bf16.mxu0 %v799
  %1046 = vmatpush2.bf16.msra.mxu0 %v798
  %1047 = vmatprep.subr.bf16.mxu0 %v796
  %1048 = vmatpush2.bf16.msra.mxu0 %v795
  %1049 = vmatprep.subr.bf16.mxu0 %v793
  %1050 = vmatpush2.bf16.msra.mxu0 %v792
  %1051 = vmatprep.mubr.bf16.mxu0 %v349
  %1052 = vmatmul.mubr.bf16.gmra.mxu0 %v348
  %v1053 = vpop.f32.mrf.mxu0
  %v1054 = vadd.f32 %v256, %v1053
  %v1055 = vpop.f32.mrf.mxu0
  %v1056 = vadd.f32 %v260, %v1055
  %v1057 = vpop.f32.mrf.mxu0
  %v1058 = vadd.f32 %v256, %v1057
  %v1059 = vpop.f32.mrf.mxu0
  %v1060 = vadd.f32 %v260, %v1059
  %1061 = vmatprep.mubr.bf16.mxu0 %v354
  %1062 = vmatmul.mubr.bf16.gmra.mxu0 %v353
  %v1063 = vpop.f32.mrf.mxu0
  %v1064 = vadd.f32 %v256, %v1063
  %v1065 = vpop.f32.mrf.mxu0
  %v1066 = vadd.f32 %v260, %v1065
  %v1067 = vpop.f32.mrf.mxu0
  %v1068 = vadd.f32 %v256, %v1067
  %v1069 = vpop.f32.mrf.mxu0
  %v1070 = vadd.f32 %v260, %v1069
  %1071 = vmatprep.mubr.bf16.mxu0 %v359
  %1072 = vmatmul.mubr.bf16.gmra.mxu0 %v358
  %v1073 = vpop.f32.mrf.mxu0
  %v1074 = vadd.f32 %v256, %v1073
  %v1075 = vpop.f32.mrf.mxu0
  %v1076 = vadd.f32 %v260, %v1075
  %v1077 = vpop.f32.mrf.mxu0
  %v1078 = vadd.f32 %v256, %v1077
  %v1079 = vpop.f32.mrf.mxu0
  %v1080 = vadd.f32 %v260, %v1079
  %1081 = vmatprep.mubr.bf16.mxu0 %v364
  %1082 = vmatmul.mubr.bf16.gmra.mxu0 %v363
  %v1083 = vpop.f32.mrf.mxu0
  %v1084 = vadd.f32 %v256, %v1083
  %v1085 = vpop.f32.mrf.mxu0
  %v1086 = vadd.f32 %v260, %v1085
  %v1087 = vpop.f32.mrf.mxu0
  %v1088 = vadd.f32 %v256, %v1087
  %v1089 = vpop.f32.mrf.mxu0
  %v1090 = vadd.f32 %v260, %v1089
  %1091 = vmatprep.mubr.bf16.mxu0 %v369
  %1092 = vmatmul.mubr.bf16.gmra.mxu0 %v368
  %v1093 = vpop.f32.mrf.mxu0
  %v1094 = vadd.f32 %v256, %v1093
  %v1095 = vpop.f32.mrf.mxu0
  %v1096 = vadd.f32 %v260, %v1095
  %v1097 = vpop.f32.mrf.mxu0
  %v1098 = vadd.f32 %v256, %v1097
  %v1099 = vpop.f32.mrf.mxu0
  %v1100 = vadd.f32 %v260, %v1099
  %1101 = vdwg.mxu0
  %1102 = vmatprep.subr.bf16.mxu0 %v838
  %1103 = vmatpush1.bf16.msra.mxu0 %v837
  %1104 = vmatprep.subr.bf16.mxu0 %v835
  %1105 = vmatpush1.bf16.msra.mxu0 %v834
  %1106 = vmatprep.subr.bf16.mxu0 %v832
  %1107 = vmatpush1.bf16.msra.mxu0 %v831
  %1108 = vmatprep.subr.bf16.mxu0 %v829
  %1109 = vmatpush1.bf16.msra.mxu0 %v828
  %1110 = vmatprep.subr.bf16.mxu0 %v826
  %1111 = vmatpush1.bf16.msra.mxu0 %v825
  %1112 = vmatprep.subr.bf16.mxu0 %v823
  %1113 = vmatpush1.bf16.msra.mxu0 %v822
  %1114 = vmatprep.subr.bf16.mxu0 %v820
  %1115 = vmatpush1.bf16.msra.mxu0 %v819
  %1116 = vmatprep.subr.bf16.mxu0 %v817
  %1117 = vmatpush1.bf16.msra.mxu0 %v816
  %1118 = vmatprep.subr.bf16.mxu0 %v862
  %1119 = vmatpush2.bf16.msra.mxu0 %v861
  %1120 = vmatprep.subr.bf16.mxu0 %v859
  %1121 = vmatpush2.bf16.msra.mxu0 %v858
  %1122 = vmatprep.subr.bf16.mxu0 %v856
  %1123 = vmatpush2.bf16.msra.mxu0 %v855
  %1124 = vmatprep.subr.bf16.mxu0 %v853
  %1125 = vmatpush2.bf16.msra.mxu0 %v852
  %1126 = vmatprep.subr.bf16.mxu0 %v850
  %1127 = vmatpush2.bf16.msra.mxu0 %v849
  %1128 = vmatprep.subr.bf16.mxu0 %v847
  %1129 = vmatpush2.bf16.msra.mxu0 %v846
  %1130 = vmatprep.subr.bf16.mxu0 %v844
  %1131 = vmatpush2.bf16.msra.mxu0 %v843
  %1132 = vmatprep.subr.bf16.mxu0 %v841
  %1133 = vmatpush2.bf16.msra.mxu0 %v840
  %1134 = vmatprep.mubr.bf16.mxu0 %v351
  %1135 = vmatmul.mubr.bf16.gmra.mxu0 %v350
  %v1136 = vpop.f32.mrf.mxu0
  %v1137 = vadd.f32 %v1054, %v1136
  %v1138 = vpop.f32.mrf.mxu0
  %v1139 = vadd.f32 %v1056, %v1138
  %v1140 = vpop.f32.mrf.mxu0
  %v1141 = vadd.f32 %v1058, %v1140
  %v1142 = vpop.f32.mrf.mxu0
  %v1143 = vadd.f32 %v1060, %v1142
  %1144 = vmatprep.mubr.bf16.mxu0 %v356
  %1145 = vmatmul.mubr.bf16.gmra.mxu0 %v355
  %v1146 = vpop.f32.mrf.mxu0
  %v1147 = vadd.f32 %v1064, %v1146
  %v1148 = vpop.f32.mrf.mxu0
  %v1149 = vadd.f32 %v1066, %v1148
  %v1150 = vpop.f32.mrf.mxu0
  %v1151 = vadd.f32 %v1068, %v1150
  %v1152 = vpop.f32.mrf.mxu0
  %v1153 = vadd.f32 %v1070, %v1152
  %1154 = vmatprep.mubr.bf16.mxu0 %v361
  %1155 = vmatmul.mubr.bf16.gmra.mxu0 %v360
  %v1156 = vpop.f32.mrf.mxu0
  %v1157 = vadd.f32 %v1074, %v1156
  %v1158 = vpop.f32.mrf.mxu0
  %v1159 = vadd.f32 %v1076, %v1158
  %v1160 = vpop.f32.mrf.mxu0
  %v1161 = vadd.f32 %v1078, %v1160
  %v1162 = vpop.f32.mrf.mxu0
  %v1163 = vadd.f32 %v1080, %v1162
  %1164 = vmatprep.mubr.bf16.mxu0 %v366
  %1165 = vmatmul.mubr.bf16.gmra.mxu0 %v365
  %v1166 = vpop.f32.mrf.mxu0
  %v1167 = vadd.f32 %v1084, %v1166
  %v1168 = vpop.f32.mrf.mxu0
  %v1169 = vadd.f32 %v1086, %v1168
  %v1170 = vpop.f32.mrf.mxu0
  %v1171 = vadd.f32 %v1088, %v1170
  %v1172 = vpop.f32.mrf.mxu0
  %v1173 = vadd.f32 %v1090, %v1172
  %1174 = vmatprep.mubr.bf16.mxu0 %v371
  %1175 = vmatmul.mubr.bf16.gmra.mxu0 %v370
  %v1176 = vpop.f32.mrf.mxu0
  %v1177 = vadd.f32 %v1094, %v1176
  %v1178 = vpop.f32.mrf.mxu0
  %v1179 = vadd.f32 %v1096, %v1178
  %v1180 = vpop.f32.mrf.mxu0
  %v1181 = vadd.f32 %v1098, %v1180
  %v1182 = vpop.f32.mrf.mxu0
  %v1183 = vadd.f32 %v1100, %v1182
  %1184 = vdwg.mxu0
  %1185 = vmatprep.subr.bf16.mxu0 0
  %1186 = vmatpush1.bf16.msra.mxu0 0
  %1187 = vmatprep.subr.bf16.mxu0 0
  %1188 = vmatpush1.bf16.msra.mxu0 0
  %1189 = vmatprep.subr.bf16.mxu0 %v1014
  %1190 = vmatpush1.bf16.msra.mxu0 %v1011
  %1191 = vmatprep.subr.bf16.mxu0 %v877
  %1192 = vmatpush1.bf16.msra.mxu0 %v876
  %1193 = vmatprep.subr.bf16.mxu0 %v874
  %1194 = vmatpush1.bf16.msra.mxu0 %v873
  %1195 = vmatprep.subr.bf16.mxu0 %v871
  %1196 = vmatpush1.bf16.msra.mxu0 %v870
  %1197 = vmatprep.subr.bf16.mxu0 %v868
  %1198 = vmatpush1.bf16.msra.mxu0 %v867
  %1199 = vmatprep.subr.bf16.mxu0 %v865
  %1200 = vmatpush1.bf16.msra.mxu0 %v864
  %1201 = vmatprep.subr.bf16.mxu0 0
  %1202 = vmatpush2.bf16.msra.mxu0 0
  %1203 = vmatprep.subr.bf16.mxu0 0
  %1204 = vmatpush2.bf16.msra.mxu0 0
  %1205 = vmatprep.subr.bf16.mxu0 0
  %1206 = vmatpush2.bf16.msra.mxu0 0
  %1207 = vmatprep.subr.bf16.mxu0 0
  %1208 = vmatpush2.bf16.msra.mxu0 0
  %1209 = vmatprep.subr.bf16.mxu0 0
  %1210 = vmatpush2.bf16.msra.mxu0 0
  %1211 = vmatprep.subr.bf16.mxu0 0
  %1212 = vmatpush2.bf16.msra.mxu0 0
  %1213 = vmatprep.subr.bf16.mxu0 0
  %1214 = vmatpush2.bf16.msra.mxu0 0
  %1215 = vmatprep.subr.bf16.mxu0 0
  %1216 = vmatpush2.bf16.msra.mxu0 0
  %1217 = vmatprep.mubr.bf16.mxu0 0
  %1218 = vmatmul.mubr.bf16.gmra.mxu0 %v995
  %v1219 = vpop.f32.mrf.mxu0
  %v1220 = vadd.f32 %v1137, %v1219
  %v1221 = vpop.f32.mrf.mxu0
  %v1222 = vadd.f32 %v1139, %v1221
  %v1223 = vpop.f32.mrf.mxu0
  %v1224 = vadd.f32 %v1141, %v1223
  %v1225 = vpop.f32.mrf.mxu0
  %v1226 = vadd.f32 %v1143, %v1225
  %1227 = vmatprep.mubr.bf16.mxu0 0
  %1228 = vmatmul.mubr.bf16.gmra.mxu0 %v998
  %v1229 = vpop.f32.mrf.mxu0
  %v1230 = vadd.f32 %v1147, %v1229
  %v1231 = vpop.f32.mrf.mxu0
  %v1232 = vadd.f32 %v1149, %v1231
  %v1233 = vpop.f32.mrf.mxu0
  %v1234 = vadd.f32 %v1151, %v1233
  %v1235 = vpop.f32.mrf.mxu0
  %v1236 = vadd.f32 %v1153, %v1235
  %1237 = vmatprep.mubr.bf16.mxu0 0
  %1238 = vmatmul.mubr.bf16.gmra.mxu0 %v1001
  %v1239 = vpop.f32.mrf.mxu0
  %v1240 = vadd.f32 %v1157, %v1239
  %v1241 = vpop.f32.mrf.mxu0
  %v1242 = vadd.f32 %v1159, %v1241
  %v1243 = vpop.f32.mrf.mxu0
  %v1244 = vadd.f32 %v1161, %v1243
  %v1245 = vpop.f32.mrf.mxu0
  %v1246 = vadd.f32 %v1163, %v1245
  %1247 = vmatprep.mubr.bf16.mxu0 0
  %1248 = vmatmul.mubr.bf16.gmra.mxu0 %v1004
  %v1249 = vpop.f32.mrf.mxu0
  %v1250 = vadd.f32 %v1167, %v1249
  %v1251 = vpop.f32.mrf.mxu0
  %v1252 = vadd.f32 %v1169, %v1251
  %v1253 = vpop.f32.mrf.mxu0
  %v1254 = vadd.f32 %v1171, %v1253
  %v1255 = vpop.f32.mrf.mxu0
  %v1256 = vadd.f32 %v1173, %v1255
  %1257 = vmatprep.mubr.bf16.mxu0 0
  %1258 = vmatmul.mubr.bf16.gmra.mxu0 %v1007
  %v1259 = vpop.f32.mrf.mxu0
  %v1260 = vadd.f32 %v1177, %v1259
  %v1261 = vpop.f32.mrf.mxu0
  %v1262 = vadd.f32 %v1179, %v1261
  %v1263 = vpop.f32.mrf.mxu0
  %v1264 = vadd.f32 %v1181, %v1263
  %v1265 = vpop.f32.mrf.mxu0
  %v1266 = vadd.f32 %v1183, %v1265
  %1267 = vdwg.mxu0
  %1268 = vmatprep.subr.bf16.mxu0 0
  %1269 = vmatpush1.bf16.msra.mxu0 %v791
  %1270 = vmatprep.subr.bf16.mxu0 0
  %1271 = vmatpush1.bf16.msra.mxu0 %v788
  %1272 = vmatprep.subr.bf16.mxu0 0
  %1273 = vmatpush1.bf16.msra.mxu0 %v785
  %1274 = vmatprep.subr.bf16.mxu0 0
  %1275 = vmatpush1.bf16.msra.mxu0 %v782
  %1276 = vmatprep.subr.bf16.mxu0 0
  %1277 = vmatpush1.bf16.msra.mxu0 %v779
  %1278 = vmatprep.subr.bf16.mxu0 0
  %1279 = vmatpush1.bf16.msra.mxu0 %v776
  %1280 = vmatprep.subr.bf16.mxu0 0
  %1281 = vmatpush1.bf16.msra.mxu0 %v773
  %1282 = vmatprep.subr.bf16.mxu0 0
  %1283 = vmatpush1.bf16.msra.mxu0 %v770
  %1284 = vmatprep.subr.bf16.mxu0 0
  %1285 = vmatpush2.bf16.msra.mxu0 %v815
  %1286 = vmatprep.subr.bf16.mxu0 0
  %1287 = vmatpush2.bf16.msra.mxu0 %v812
  %1288 = vmatprep.subr.bf16.mxu0 0
  %1289 = vmatpush2.bf16.msra.mxu0 %v809
  %1290 = vmatprep.subr.bf16.mxu0 0
  %1291 = vmatpush2.bf16.msra.mxu0 %v806
  %1292 = vmatprep.subr.bf16.mxu0 0
  %1293 = vmatpush2.bf16.msra.mxu0 %v803
  %1294 = vmatprep.subr.bf16.mxu0 0
  %1295 = vmatpush2.bf16.msra.mxu0 %v800
  %1296 = vmatprep.subr.bf16.mxu0 0
  %1297 = vmatpush2.bf16.msra.mxu0 %v797
  %1298 = vmatprep.subr.bf16.mxu0 0
  %1299 = vmatpush2.bf16.msra.mxu0 %v794
  %1300 = vmatprep.mubr.bf16.mxu0 %v349
  %1301 = vmatmul.mubr.bf16.gmra.mxu0 %v348
  %v1302 = vpop.f32.mrf.mxu0
  %v1303 = vadd.f32 %v264, %v1302
  %v1304 = vpop.f32.mrf.mxu0
  %v1305 = vpop.f32.mrf.mxu0
  %v1306 = vadd.f32 %v264, %v1305
  %v1307 = vpop.f32.mrf.mxu0
  %1308 = vmatprep.mubr.bf16.mxu0 %v354
  %1309 = vmatmul.mubr.bf16.gmra.mxu0 %v353
  %v1310 = vpop.f32.mrf.mxu0
  %v1311 = vadd.f32 %v264, %v1310
  %v1312 = vpop.f32.mrf.mxu0
  %v1313 = vpop.f32.mrf.mxu0
  %v1314 = vadd.f32 %v264, %v1313
  %v1315 = vpop.f32.mrf.mxu0
  %1316 = vmatprep.mubr.bf16.mxu0 %v359
  %1317 = vmatmul.mubr.bf16.gmra.mxu0 %v358
  %v1318 = vpop.f32.mrf.mxu0
  %v1319 = vadd.f32 %v264, %v1318
  %v1320 = vpop.f32.mrf.mxu0
  %v1321 = vpop.f32.mrf.mxu0
  %v1322 = vadd.f32 %v264, %v1321
  %v1323 = vpop.f32.mrf.mxu0
  %1324 = vmatprep.mubr.bf16.mxu0 %v364
  %1325 = vmatmul.mubr.bf16.gmra.mxu0 %v363
  %v1326 = vpop.f32.mrf.mxu0
  %v1327 = vadd.f32 %v264, %v1326
  %v1328 = vpop.f32.mrf.mxu0
  %v1329 = vpop.f32.mrf.mxu0
  %v1330 = vadd.f32 %v264, %v1329
  %v1331 = vpop.f32.mrf.mxu0
  %1332 = vmatprep.mubr.bf16.mxu0 %v369
  %1333 = vmatmul.mubr.bf16.gmra.mxu0 %v368
  %v1334 = vpop.f32.mrf.mxu0
  %v1335 = vadd.f32 %v264, %v1334
  %v1336 = vpop.f32.mrf.mxu0
  %v1337 = vpop.f32.mrf.mxu0
  %v1338 = vadd.f32 %v264, %v1337
  %v1339 = vpop.f32.mrf.mxu0
  %1340 = vdwg.mxu0
  %1341 = vmatprep.subr.bf16.mxu0 0
  %1342 = vmatpush1.bf16.msra.mxu0 %v839
  %1343 = vmatprep.subr.bf16.mxu0 0
  %1344 = vmatpush1.bf16.msra.mxu0 %v836
  %1345 = vmatprep.subr.bf16.mxu0 0
  %1346 = vmatpush1.bf16.msra.mxu0 %v833
  %1347 = vmatprep.subr.bf16.mxu0 0
  %1348 = vmatpush1.bf16.msra.mxu0 %v830
  %1349 = vmatprep.subr.bf16.mxu0 0
  %1350 = vmatpush1.bf16.msra.mxu0 %v827
  %1351 = vmatprep.subr.bf16.mxu0 0
  %1352 = vmatpush1.bf16.msra.mxu0 %v824
  %1353 = vmatprep.subr.bf16.mxu0 0
  %1354 = vmatpush1.bf16.msra.mxu0 %v821
  %1355 = vmatprep.subr.bf16.mxu0 0
  %1356 = vmatpush1.bf16.msra.mxu0 %v818
  %1357 = vmatprep.subr.bf16.mxu0 0
  %1358 = vmatpush2.bf16.msra.mxu0 %v863
  %1359 = vmatprep.subr.bf16.mxu0 0
  %1360 = vmatpush2.bf16.msra.mxu0 %v860
  %1361 = vmatprep.subr.bf16.mxu0 0
  %1362 = vmatpush2.bf16.msra.mxu0 %v857
  %1363 = vmatprep.subr.bf16.mxu0 0
  %1364 = vmatpush2.bf16.msra.mxu0 %v854
  %1365 = vmatprep.subr.bf16.mxu0 0
  %1366 = vmatpush2.bf16.msra.mxu0 %v851
  %1367 = vmatprep.subr.bf16.mxu0 0
  %1368 = vmatpush2.bf16.msra.mxu0 %v848
  %1369 = vmatprep.subr.bf16.mxu0 0
  %1370 = vmatpush2.bf16.msra.mxu0 %v845
  %1371 = vmatprep.subr.bf16.mxu0 0
  %1372 = vmatpush2.bf16.msra.mxu0 %v842
  %1373 = vmatprep.mubr.bf16.mxu0 %v351
  %1374 = vmatmul.mubr.bf16.gmra.mxu0 %v350
  %v1375 = vpop.f32.mrf.mxu0
  %v1376 = vadd.f32 %v1303, %v1375
  %v1377 = vpop.f32.mrf.mxu0
  %v1378 = vpop.f32.mrf.mxu0
  %v1379 = vadd.f32 %v1306, %v1378
  %v1380 = vpop.f32.mrf.mxu0
  %1381 = vmatprep.mubr.bf16.mxu0 %v356
  %1382 = vmatmul.mubr.bf16.gmra.mxu0 %v355
  %v1383 = vpop.f32.mrf.mxu0
  %v1384 = vadd.f32 %v1311, %v1383
  %v1385 = vpop.f32.mrf.mxu0
  %v1386 = vpop.f32.mrf.mxu0
  %v1387 = vadd.f32 %v1314, %v1386
  %v1388 = vpop.f32.mrf.mxu0
  %1389 = vmatprep.mubr.bf16.mxu0 %v361
  %1390 = vmatmul.mubr.bf16.gmra.mxu0 %v360
  %v1391 = vpop.f32.mrf.mxu0
  %v1392 = vadd.f32 %v1319, %v1391
  %v1393 = vpop.f32.mrf.mxu0
  %v1394 = vpop.f32.mrf.mxu0
  %v1395 = vadd.f32 %v1322, %v1394
  %v1396 = vpop.f32.mrf.mxu0
  %1397 = vmatprep.mubr.bf16.mxu0 %v366
  %1398 = vmatmul.mubr.bf16.gmra.mxu0 %v365
  %v1399 = vpop.f32.mrf.mxu0
  %v1400 = vadd.f32 %v1327, %v1399
  %v1401 = vpop.f32.mrf.mxu0
  %v1402 = vpop.f32.mrf.mxu0
  %v1403 = vadd.f32 %v1330, %v1402
  %v1404 = vpop.f32.mrf.mxu0
  %1405 = vmatprep.mubr.bf16.mxu0 %v371
  %1406 = vmatmul.mubr.bf16.gmra.mxu0 %v370
  %v1407 = vpop.f32.mrf.mxu0
  %v1408 = vadd.f32 %v1335, %v1407
  %v1409 = vpop.f32.mrf.mxu0
  %v1410 = vpop.f32.mrf.mxu0
  %v1411 = vadd.f32 %v1338, %v1410
  %v1412 = vpop.f32.mrf.mxu0
  %1413 = vdwg.mxu0
  %1414 = vmatprep.subr.bf16.mxu0 0
  %1415 = vmatpush1.bf16.msra.mxu0 0
  %1416 = vmatprep.subr.bf16.mxu0 0
  %1417 = vmatpush1.bf16.msra.mxu0 0
  %1418 = vmatprep.subr.bf16.mxu0 0
  %1419 = vmatpush1.bf16.msra.mxu0 %v1017
  %1420 = vmatprep.subr.bf16.mxu0 0
  %1421 = vmatpush1.bf16.msra.mxu0 %v878
  %1422 = vmatprep.subr.bf16.mxu0 0
  %1423 = vmatpush1.bf16.msra.mxu0 %v875
  %1424 = vmatprep.subr.bf16.mxu0 0
  %1425 = vmatpush1.bf16.msra.mxu0 %v872
  %1426 = vmatprep.subr.bf16.mxu0 0
  %1427 = vmatpush1.bf16.msra.mxu0 %v869
  %1428 = vmatprep.subr.bf16.mxu0 0
  %1429 = vmatpush1.bf16.msra.mxu0 %v866
  %1430 = vmatprep.subr.bf16.mxu0 0
  %1431 = vmatpush2.bf16.msra.mxu0 0
  %1432 = vmatprep.subr.bf16.mxu0 0
  %1433 = vmatpush2.bf16.msra.mxu0 0
  %1434 = vmatprep.subr.bf16.mxu0 0
  %1435 = vmatpush2.bf16.msra.mxu0 0
  %1436 = vmatprep.subr.bf16.mxu0 0
  %1437 = vmatpush2.bf16.msra.mxu0 0
  %1438 = vmatprep.subr.bf16.mxu0 0
  %1439 = vmatpush2.bf16.msra.mxu0 0
  %1440 = vmatprep.subr.bf16.mxu0 0
  %1441 = vmatpush2.bf16.msra.mxu0 0
  %1442 = vmatprep.subr.bf16.mxu0 0
  %1443 = vmatpush2.bf16.msra.mxu0 0
  %1444 = vmatprep.subr.bf16.mxu0 0
  %1445 = vmatpush2.bf16.msra.mxu0 0
  %1446 = vmatprep.mubr.bf16.mxu0 0
  %1447 = vmatmul.mubr.bf16.gmra.mxu0 %v995
  %v1448 = vpop.f32.mrf.mxu0
  %v1449 = vadd.f32 %v1376, %v1448
  %v1450 = vpop.f32.mrf.mxu0
  %v1451 = vpop.f32.mrf.mxu0
  %v1452 = vadd.f32 %v1379, %v1451
  %v1453 = vpop.f32.mrf.mxu0
  %1454 = vmatprep.mubr.bf16.mxu0 0
  %1455 = vmatmul.mubr.bf16.gmra.mxu0 %v998
  %v1456 = vpop.f32.mrf.mxu0
  %v1457 = vadd.f32 %v1384, %v1456
  %v1458 = vpop.f32.mrf.mxu0
  %v1459 = vpop.f32.mrf.mxu0
  %v1460 = vadd.f32 %v1387, %v1459
  %v1461 = vpop.f32.mrf.mxu0
  %1462 = vmatprep.mubr.bf16.mxu0 0
  %1463 = vmatmul.mubr.bf16.gmra.mxu0 %v1001
  %v1464 = vpop.f32.mrf.mxu0
  %v1465 = vadd.f32 %v1392, %v1464
  %v1466 = vpop.f32.mrf.mxu0
  %v1467 = vpop.f32.mrf.mxu0
  %v1468 = vadd.f32 %v1395, %v1467
  %v1469 = vpop.f32.mrf.mxu0
  %1470 = vmatprep.mubr.bf16.mxu0 0
  %1471 = vmatmul.mubr.bf16.gmra.mxu0 %v1004
  %v1472 = vpop.f32.mrf.mxu0
  %v1473 = vadd.f32 %v1400, %v1472
  %v1474 = vpop.f32.mrf.mxu0
  %v1475 = vpop.f32.mrf.mxu0
  %v1476 = vadd.f32 %v1403, %v1475
  %v1477 = vpop.f32.mrf.mxu0
  %1478 = vmatprep.mubr.bf16.mxu0 0
  %1479 = vmatmul.mubr.bf16.gmra.mxu0 %v1007
  %v1480 = vpop.f32.mrf.mxu0
  %v1481 = vadd.f32 %v1408, %v1480
  %v1482 = vpop.f32.mrf.mxu0
  %v1483 = vpop.f32.mrf.mxu0
  %v1484 = vadd.f32 %v1411, %v1483
  %v1485 = vpop.f32.mrf.mxu0
  %1486 = vdwg.mxu0
  %v1487 = vmax.f32 %v1220, 0.0
  %v1488 = vmax.f32 %v1222, 0.0
  %v1489 = vmax.f32 %v1449, 0.0
  %v1490 = vmax.f32 %v1224, 0.0
  %v1491 = vmax.f32 %v1226, 0.0
  %v1492 = vmax.f32 %v1452, 0.0
  %v1493 = vmax.f32 %v1230, 0.0
  %v1494 = vmax.f32 %v1232, 0.0
  %v1495 = vmax.f32 %v1457, 0.0
  %v1496 = vmax.f32 %v1234, 0.0
  %v1497 = vmax.f32 %v1236, 0.0
  %v1498 = vmax.f32 %v1460, 0.0
  %v1499 = vmax.f32 %v1240, 0.0
  %v1500 = vmax.f32 %v1242, 0.0
  %v1501 = vmax.f32 %v1465, 0.0
  %v1502 = vmax.f32 %v1244, 0.0
  %v1503 = vmax.f32 %v1246, 0.0
  %v1504 = vmax.f32 %v1468, 0.0
  %v1505 = vmax.f32 %v1250, 0.0
  %v1506 = vmax.f32 %v1252, 0.0
  %v1507 = vmax.f32 %v1473, 0.0
  %v1508 = vmax.f32 %v1254, 0.0
  %v1509 = vmax.f32 %v1256, 0.0
  %v1510 = vmax.f32 %v1476, 0.0
  %v1511 = vmax.f32 %v1260, 0.0
  %v1512 = vmax.f32 %v1262, 0.0
  %v1513 = vmax.f32 %v1481, 0.0
  %v1514 = vmax.f32 %v1264, 0.0
  %v1515 = vmax.f32 %v1266, 0.0
  %v1516 = vmax.f32 %v1484, 0.0
  %v1517 = vmax.f32 %v1487, %v1502
  %v1518 = vmax.f32 %v1488, %v1503
  %v1519 = vmax.f32 %v1489, %v1504
  %v1520 = vmax.f32 %v1490, %v1505
  %v1521 = vmax.f32 %v1491, %v1506
  %v1522 = vmax.f32 %v1492, %v1507
  %v1523 = vmax.f32 %v1493, %v1508
  %v1524 = vmax.f32 %v1494, %v1509
  %v1525 = vmax.f32 %v1495, %v1510
  %v1526 = vmax.f32 %v1496, %v1511
  %v1527 = vmax.f32 %v1497, %v1512
  %v1528 = vmax.f32 %v1498, %v1513
  %v1529 = vmax.f32 %v1499, %v1514
  %v1530 = vmax.f32 %v1500, %v1515
  %v1531 = vmax.f32 %v1501, %v1516
  %v1532 = vpack.c.bf16 %v1520, %v1517
  %v1533 = vpack.c.bf16 %v1521, %v1518
  %v1534 = vpack.c.bf16 %v1522, %v1519
  %v1535 = vpack.c.bf16 %v1526, %v1523
  %v1536 = vpack.c.bf16 %v1527, %v1524
  %v1537 = vpack.c.bf16 %v1528, %v1525
  %v1538 = vpack.c.bf16 %v1523, %v1520
  %v1539 = vpack.c.bf16 %v1524, %v1521
  %v1540 = vpack.c.bf16 %v1525, %v1522
  %v1541 = vpack.c.bf16 %v1529, %v1526
  %v1542 = vpack.c.bf16 %v1530, %v1527
  %v1543 = vpack.c.bf16 %v1531, %v1528
  %v1544 = vld [vmem:[%s6] sm:$0x1]
  %v1545 = vld [vmem:[%s3] sm:$0xf]
  %v1546 = vld [vmem:[%s3 + $0x4] sm:$0xf]
  %v1547 = vld [vmem:[%s3 + $0x8] sm:$0xf]
  %v1548 = vld [vmem:[%s3 + $0xc] sm:$0xf]
  %v1549 = vld [vmem:[%s3 + $0x10] sm:$0xf]
  %v1550 = vld [vmem:[%s3 + $0x14] sm:$0xf]
  %v1551 = vld [vmem:[%s3 + $0x18] sm:$0xf]
  %v1552 = vld [vmem:[%s3 + $0x1c] sm:$0xf]
  %v1553 = vld [vmem:[%s3 + $0x20] sm:$0xf]
  %v1554 = vld [vmem:[%s3 + $0x24] sm:$0xf]
  %v1555 = vld [vmem:[%s3 + $0x28] sm:$0xf]
  %v1556 = vld [vmem:[%s3 + $0x2c] sm:$0xf]
  %v1557 = vld [vmem:[%s3 + $0x30] sm:$0xf]
  %v1558 = vld [vmem:[%s3 + $0x34] sm:$0xf]
  %v1559 = vld [vmem:[%s3 + $0x38] sm:$0xf]
  %v1560 = vld [vmem:[%s3 + $0x3c] sm:$0xf]
  %v1561 = vld [vmem:[%s3 + $0x40] sm:$0xf]
  %v1562 = vld [vmem:[%s3 + $0x44] sm:$0xf]
  %v1563 = vld [vmem:[%s3 + $0x48] sm:$0xf]
  %v1564 = vld [vmem:[%s3 + $0x4c] sm:$0xf]
  %v1565 = vld [vmem:[%s3 + $0x50] sm:$0xf]
  %v1566 = vld [vmem:[%s3 + $0x54] sm:$0xf]
  %v1567 = vld [vmem:[%s3 + $0x58] sm:$0xf]
  %v1568 = vld [vmem:[%s3 + $0x5c] sm:$0xf]
  %v1569 = vld [vmem:[%s3 + $0x60] sm:$0xf]
  %v1570 = vld [vmem:[%s3 + $0x64] sm:$0xf]
  %v1571 = vld [vmem:[%s3 + $0x68] sm:$0xf]
  %v1572 = vld [vmem:[%s3 + $0x6c] sm:$0xf]
  %v1573 = vld [vmem:[%s3 + $0x70] sm:$0xf]
  %v1574 = vld [vmem:[%s3 + $0x74] sm:$0xf]
  %v1575 = vld [vmem:[%s3 + $0x78] sm:$0xf]
  %v1576 = vld [vmem:[%s3 + $0x7c] sm:$0xf]
  %v1577 = vld [vmem:[%s3 + $0x80] sm:$0xf]
  %v1578 = vld [vmem:[%s3 + $0x84] sm:$0xf]
  %v1579 = vld [vmem:[%s3 + $0x88] sm:$0xf]
  %v1580 = vld [vmem:[%s3 + $0x8c] sm:$0xf]
  %v1581 = vld [vmem:[%s3 + $0x90] sm:$0xf]
  %v1582 = vld [vmem:[%s3 + $0x94] sm:$0xf]
  %v1583 = vld [vmem:[%s3 + $0x98] sm:$0xf]
  %v1584 = vld [vmem:[%s3 + $0x9c] sm:$0xf]
  %v1586 = vlaneseq
  %v1587 = vshrl.u32 %v1586, 7
  %v1588 = vsub.s32 0, %v1587
  %v1589 = vrot.slane %v1544, %v1588
  %v1631 = vunpack.c.l.b16 %v1545
  %v1632 = vunpack.c.l.b16 %v1546
  %v1633 = vunpack.c.l.b16 %v1547
  %v1634 = vunpack.c.l.b16 %v1548
  %v1635 = vunpack.c.l.b16 %v1549
  %v1636 = vunpack.c.l.b16 %v1550
  %v1637 = vunpack.c.l.b16 %v1551
  %v1638 = vunpack.c.l.b16 %v1552
  %v1639 = vunpack.c.l.b16 %v1553
  %v1640 = vunpack.c.l.b16 %v1554
  %v1641 = vunpack.c.l.b16 %v1555
  %v1642 = vunpack.c.l.b16 %v1556
  %v1643 = vunpack.c.l.b16 %v1557
  %v1644 = vunpack.c.l.b16 %v1558
  %v1645 = vunpack.c.l.b16 %v1559
  %v1646 = vunpack.c.l.b16 %v1560
  %v1647 = vunpack.c.l.b16 %v1561
  %v1648 = vunpack.c.l.b16 %v1562
  %v1649 = vunpack.c.l.b16 %v1563
  %v1650 = vunpack.c.l.b16 %v1564
  %v1651 = vunpack.c.l.b16 %v1565
  %v1652 = vunpack.c.l.b16 %v1566
  %v1653 = vunpack.c.l.b16 %v1567
  %v1654 = vunpack.c.l.b16 %v1568
  %v1655 = vunpack.c.l.b16 %v1569
  %v1656 = vunpack.c.l.b16 %v1570
  %v1657 = vunpack.c.l.b16 %v1571
  %v1658 = vunpack.c.l.b16 %v1572
  %v1659 = vunpack.c.l.b16 %v1573
  %v1660 = vunpack.c.l.b16 %v1574
  %v1661 = vunpack.c.l.b16 %v1575
  %v1662 = vunpack.c.l.b16 %v1576
  %v1663 = vunpack.c.l.b16 %v1577
  %v1664 = vunpack.c.l.b16 %v1578
  %v1665 = vunpack.c.l.b16 %v1579
  %v1666 = vunpack.c.l.b16 %v1580
  %v1667 = vunpack.c.l.b16 %v1581
  %v1668 = vunpack.c.l.b16 %v1582
  %v1669 = vunpack.c.l.b16 %v1583
  %v1670 = vunpack.c.l.b16 %v1584
  %v1671 = vpack.c.b16 %v1632, %v1631
  %v1672 = vpack.c.b16 %v1634, %v1633
  %v1673 = vpack.c.b16 %v1636, %v1635
  %v1674 = vpack.c.b16 %v1638, %v1637
  %v1675 = vpack.c.b16 %v1640, %v1639
  %v1676 = vpack.c.b16 %v1642, %v1641
  %v1677 = vpack.c.b16 %v1644, %v1643
  %v1678 = vpack.c.b16 %v1646, %v1645
  %v1679 = vpack.c.b16 %v1648, %v1647
  %v1680 = vpack.c.b16 %v1650, %v1649
  %v1681 = vpack.c.b16 %v1652, %v1651
  %v1682 = vpack.c.b16 %v1654, %v1653
  %v1683 = vpack.c.b16 %v1656, %v1655
  %v1684 = vpack.c.b16 %v1658, %v1657
  %v1685 = vpack.c.b16 %v1660, %v1659
  %v1686 = vpack.c.b16 %v1662, %v1661
  %v1687 = vpack.c.b16 %v1664, %v1663
  %v1688 = vpack.c.b16 %v1666, %v1665
  %v1689 = vpack.c.b16 %v1668, %v1667
  %v1690 = vpack.c.b16 %v1670, %v1669
  %vm1711 = vcmask 523264
  %v1713 = vsel %vm1711, %v1534, 0
  %v1716 = vsel %vm1711, %v1537, 0
  %1718 = vmatprep.subr.bf16.mxu0 0
  %1719 = vmatpush1.bf16.msra.mxu0 %v1678
  %1720 = vmatprep.subr.bf16.mxu0 0
  %1721 = vmatpush1.bf16.msra.mxu0 %v1677
  %1722 = vmatprep.subr.bf16.mxu0 0
  %1723 = vmatpush1.bf16.msra.mxu0 %v1676
  %1724 = vmatprep.subr.bf16.mxu0 0
  %1725 = vmatpush1.bf16.msra.mxu0 %v1675
  %1726 = vmatprep.subr.bf16.mxu0 0
  %1727 = vmatpush1.bf16.msra.mxu0 %v1674
  %1728 = vmatprep.subr.bf16.mxu0 0
  %1729 = vmatpush1.bf16.msra.mxu0 %v1673
  %1730 = vmatprep.subr.bf16.mxu0 0
  %1731 = vmatpush1.bf16.msra.mxu0 %v1672
  %1732 = vmatprep.subr.bf16.mxu0 0
  %1733 = vmatpush1.bf16.msra.mxu0 %v1671
  %1734 = vmatprep.subr.bf16.mxu0 0
  %1735 = vmatpush2.bf16.msra.mxu0 %v1686
  %1736 = vmatprep.subr.bf16.mxu0 0
  %1737 = vmatpush2.bf16.msra.mxu0 %v1685
  %1738 = vmatprep.subr.bf16.mxu0 0
  %1739 = vmatpush2.bf16.msra.mxu0 %v1684
  %1740 = vmatprep.subr.bf16.mxu0 0
  %1741 = vmatpush2.bf16.msra.mxu0 %v1683
  %1742 = vmatprep.subr.bf16.mxu0 0
  %1743 = vmatpush2.bf16.msra.mxu0 %v1682
  %1744 = vmatprep.subr.bf16.mxu0 0
  %1745 = vmatpush2.bf16.msra.mxu0 %v1681
  %1746 = vmatprep.subr.bf16.mxu0 0
  %1747 = vmatpush2.bf16.msra.mxu0 %v1680
  %1748 = vmatprep.subr.bf16.mxu0 0
  %1749 = vmatpush2.bf16.msra.mxu0 %v1679
  %1750 = vmatprep.mubr.bf16.mxu0 %v1533
  %1751 = vmatmul.mubr.bf16.gmra.mxu0 %v1532
  %v1752 = vpop.f32.mrf.mxu0
  %v1753 = vadd.f32 %v1589, %v1752
  %v1754 = vpop.f32.mrf.mxu0
  %v1755 = vpop.f32.mrf.mxu0
  %v1756 = vadd.f32 %v1589, %v1755
  %v1757 = vpop.f32.mrf.mxu0
  %1758 = vmatprep.mubr.bf16.mxu0 %v1536
  %1759 = vmatmul.mubr.bf16.gmra.mxu0 %v1535
  %v1760 = vpop.f32.mrf.mxu0
  %v1761 = vadd.f32 %v1589, %v1760
  %v1762 = vpop.f32.mrf.mxu0
  %v1763 = vpop.f32.mrf.mxu0
  %v1764 = vadd.f32 %v1589, %v1763
  %v1765 = vpop.f32.mrf.mxu0
  %1766 = vdwg.mxu0
  %1767 = vmatprep.subr.bf16.mxu0 0
  %1768 = vmatpush1.bf16.msra.mxu0 0
  %1769 = vmatprep.subr.bf16.mxu0 0
  %1770 = vmatpush1.bf16.msra.mxu0 0
  %1771 = vmatprep.subr.bf16.mxu0 0
  %1772 = vmatpush1.bf16.msra.mxu0 0
  %1773 = vmatprep.subr.bf16.mxu0 0
  %1774 = vmatpush1.bf16.msra.mxu0 0
  %1775 = vmatprep.subr.bf16.mxu0 0
  %1776 = vmatpush1.bf16.msra.mxu0 %v1690
  %1777 = vmatprep.subr.bf16.mxu0 0
  %1778 = vmatpush1.bf16.msra.mxu0 %v1689
  %1779 = vmatprep.subr.bf16.mxu0 0
  %1780 = vmatpush1.bf16.msra.mxu0 %v1688
  %1781 = vmatprep.subr.bf16.mxu0 0
  %1782 = vmatpush1.bf16.msra.mxu0 %v1687
  %1783 = vmatprep.subr.bf16.mxu0 0
  %1784 = vmatpush2.bf16.msra.mxu0 0
  %1785 = vmatprep.subr.bf16.mxu0 0
  %1786 = vmatpush2.bf16.msra.mxu0 0
  %1787 = vmatprep.subr.bf16.mxu0 0
  %1788 = vmatpush2.bf16.msra.mxu0 0
  %1789 = vmatprep.subr.bf16.mxu0 0
  %1790 = vmatpush2.bf16.msra.mxu0 0
  %1791 = vmatprep.subr.bf16.mxu0 0
  %1792 = vmatpush2.bf16.msra.mxu0 0
  %1793 = vmatprep.subr.bf16.mxu0 0
  %1794 = vmatpush2.bf16.msra.mxu0 0
  %1795 = vmatprep.subr.bf16.mxu0 0
  %1796 = vmatpush2.bf16.msra.mxu0 0
  %1797 = vmatprep.subr.bf16.mxu0 0
  %1798 = vmatpush2.bf16.msra.mxu0 0
  %1799 = vmatprep.mubr.bf16.mxu0 0
  %1800 = vmatmul.mubr.bf16.gmra.mxu0 %v1713
  %v1801 = vpop.f32.mrf.mxu0
  %v1802 = vadd.f32 %v1753, %v1801
  %v1803 = vpop.f32.mrf.mxu0
  %v1804 = vpop.f32.mrf.mxu0
  %v1805 = vadd.f32 %v1756, %v1804
  %v1806 = vpop.f32.mrf.mxu0
  %1807 = vmatprep.mubr.bf16.mxu0 0
  %1808 = vmatmul.mubr.bf16.gmra.mxu0 %v1716
  %v1809 = vpop.f32.mrf.mxu0
  %v1810 = vadd.f32 %v1761, %v1809
  %v1811 = vpop.f32.mrf.mxu0
  %v1812 = vpop.f32.mrf.mxu0
  %v1813 = vadd.f32 %v1764, %v1812
  %v1814 = vpop.f32.mrf.mxu0
  %1815 = vdwg.mxu0
  %v1816 = vld [vmem:[%s4] sm:$0xf]
  %v1817 = vld [vmem:[%s4 + $0x4] sm:$0xf]
  %v1818 = vld [vmem:[%s4 + $0x8] sm:$0xf]
  %v1819 = vld [vmem:[%s4 + $0xc] sm:$0xf]
  %v1820 = vld [vmem:[%s4 + $0x10] sm:$0xf]
  %v1821 = vld [vmem:[%s4 + $0x14] sm:$0xf]
  %v1822 = vld [vmem:[%s4 + $0x18] sm:$0xf]
  %v1823 = vld [vmem:[%s4 + $0x1c] sm:$0xf]
  %v1824 = vld [vmem:[%s4 + $0x20] sm:$0xf]
  %v1825 = vld [vmem:[%s4 + $0x24] sm:$0xf]
  %v1826 = vld [vmem:[%s4 + $0x28] sm:$0xf]
  %v1827 = vld [vmem:[%s4 + $0x2c] sm:$0xf]
  %v1828 = vld [vmem:[%s4 + $0x30] sm:$0xf]
  %v1829 = vld [vmem:[%s4 + $0x34] sm:$0xf]
  %v1830 = vld [vmem:[%s4 + $0x38] sm:$0xf]
  %v1831 = vld [vmem:[%s4 + $0x3c] sm:$0xf]
  %v1832 = vld [vmem:[%s4 + $0x40] sm:$0xf]
  %v1833 = vld [vmem:[%s4 + $0x44] sm:$0xf]
  %v1834 = vld [vmem:[%s4 + $0x48] sm:$0xf]
  %v1835 = vld [vmem:[%s4 + $0x4c] sm:$0xf]
  %v1836 = vld [vmem:[%s4 + $0x50] sm:$0xf]
  %v1837 = vld [vmem:[%s4 + $0x54] sm:$0xf]
  %v1838 = vld [vmem:[%s4 + $0x58] sm:$0xf]
  %v1839 = vld [vmem:[%s4 + $0x5c] sm:$0xf]
  %v1840 = vld [vmem:[%s4 + $0x60] sm:$0xf]
  %v1841 = vld [vmem:[%s4 + $0x64] sm:$0xf]
  %v1842 = vld [vmem:[%s4 + $0x68] sm:$0xf]
  %v1843 = vld [vmem:[%s4 + $0x6c] sm:$0xf]
  %v1844 = vld [vmem:[%s4 + $0x70] sm:$0xf]
  %v1845 = vld [vmem:[%s4 + $0x74] sm:$0xf]
  %v1846 = vld [vmem:[%s4 + $0x78] sm:$0xf]
  %v1847 = vld [vmem:[%s4 + $0x7c] sm:$0xf]
  %v1848 = vld [vmem:[%s4 + $0x80] sm:$0xf]
  %v1849 = vld [vmem:[%s4 + $0x84] sm:$0xf]
  %v1850 = vld [vmem:[%s4 + $0x88] sm:$0xf]
  %v1851 = vld [vmem:[%s4 + $0x8c] sm:$0xf]
  %v1852 = vld [vmem:[%s4 + $0x90] sm:$0xf]
  %v1853 = vld [vmem:[%s4 + $0x94] sm:$0xf]
  %v1854 = vld [vmem:[%s4 + $0x98] sm:$0xf]
  %v1855 = vld [vmem:[%s4 + $0x9c] sm:$0xf]
  %v1856 = vld [vmem:[%s5] sm:$0xf]
  %v1857 = vld [vmem:[%s5 + $0x4] sm:$0xf]
  %v1858 = vld [vmem:[%s5 + $0x8] sm:$0xf]
  %v1859 = vld [vmem:[%s5 + $0xc] sm:$0xf]
  %v1860 = vld [vmem:[%s5 + $0x10] sm:$0xf]
  %v1861 = vld [vmem:[%s5 + $0x14] sm:$0xf]
  %v1862 = vld [vmem:[%s5 + $0x18] sm:$0xf]
  %v1863 = vld [vmem:[%s5 + $0x1c] sm:$0xf]
  %v1864 = vld [vmem:[%s5 + $0x20] sm:$0xf]
  %v1865 = vld [vmem:[%s5 + $0x24] sm:$0xf]
  %v1866 = vld [vmem:[%s5 + $0x28] sm:$0xf]
  %v1867 = vld [vmem:[%s5 + $0x2c] sm:$0xf]
  %v1868 = vld [vmem:[%s5 + $0x30] sm:$0xf]
  %v1869 = vld [vmem:[%s5 + $0x34] sm:$0xf]
  %v1870 = vld [vmem:[%s5 + $0x38] sm:$0xf]
  %v1871 = vld [vmem:[%s5 + $0x3c] sm:$0xf]
  %v1872 = vld [vmem:[%s5 + $0x40] sm:$0xf]
  %v1873 = vld [vmem:[%s5 + $0x44] sm:$0xf]
  %v1874 = vld [vmem:[%s5 + $0x48] sm:$0xf]
  %v1875 = vld [vmem:[%s5 + $0x4c] sm:$0xf]
  %v1876 = vld [vmem:[%s5 + $0x50] sm:$0xf]
  %v1877 = vld [vmem:[%s5 + $0x54] sm:$0xf]
  %v1878 = vld [vmem:[%s5 + $0x58] sm:$0xf]
  %v1879 = vld [vmem:[%s5 + $0x5c] sm:$0xf]
  %v1880 = vld [vmem:[%s5 + $0x60] sm:$0xf]
  %v1881 = vld [vmem:[%s5 + $0x64] sm:$0xf]
  %v1882 = vld [vmem:[%s5 + $0x68] sm:$0xf]
  %v1883 = vld [vmem:[%s5 + $0x6c] sm:$0xf]
  %v1884 = vld [vmem:[%s5 + $0x70] sm:$0xf]
  %v1885 = vld [vmem:[%s5 + $0x74] sm:$0xf]
  %v1886 = vld [vmem:[%s5 + $0x78] sm:$0xf]
  %v1887 = vld [vmem:[%s5 + $0x7c] sm:$0xf]
  %v1888 = vld [vmem:[%s5 + $0x80] sm:$0xf]
  %v1889 = vld [vmem:[%s5 + $0x84] sm:$0xf]
  %v1890 = vld [vmem:[%s5 + $0x88] sm:$0xf]
  %v1891 = vld [vmem:[%s5 + $0x8c] sm:$0xf]
  %v1892 = vld [vmem:[%s5 + $0x90] sm:$0xf]
  %v1893 = vld [vmem:[%s5 + $0x94] sm:$0xf]
  %v1894 = vld [vmem:[%s5 + $0x98] sm:$0xf]
  %v1895 = vld [vmem:[%s5 + $0x9c] sm:$0xf]
  %v1936 = vunpack.c.l.b16 %v1856
  %v1937 = vunpack.c.l.b16 %v1857
  %v1938 = vunpack.c.l.b16 %v1858
  %v1939 = vunpack.c.l.b16 %v1859
  %v1940 = vunpack.c.l.b16 %v1860
  %v1941 = vunpack.c.l.b16 %v1861
  %v1942 = vunpack.c.l.b16 %v1862
  %v1943 = vunpack.c.l.b16 %v1863
  %v1944 = vunpack.c.l.b16 %v1864
  %v1945 = vunpack.c.l.b16 %v1865
  %v1946 = vunpack.c.l.b16 %v1866
  %v1947 = vunpack.c.l.b16 %v1867
  %v1948 = vunpack.c.l.b16 %v1868
  %v1949 = vunpack.c.l.b16 %v1869
  %v1950 = vunpack.c.l.b16 %v1870
  %v1951 = vunpack.c.l.b16 %v1871
  %v1952 = vunpack.c.l.b16 %v1872
  %v1953 = vunpack.c.l.b16 %v1873
  %v1954 = vunpack.c.l.b16 %v1874
  %v1955 = vunpack.c.l.b16 %v1875
  %v1956 = vunpack.c.l.b16 %v1876
  %v1957 = vunpack.c.l.b16 %v1877
  %v1958 = vunpack.c.l.b16 %v1878
  %v1959 = vunpack.c.l.b16 %v1879
  %v1960 = vunpack.c.l.b16 %v1880
  %v1961 = vunpack.c.l.b16 %v1881
  %v1962 = vunpack.c.l.b16 %v1882
  %v1963 = vunpack.c.l.b16 %v1883
  %v1964 = vunpack.c.l.b16 %v1884
  %v1965 = vunpack.c.l.b16 %v1885
  %v1966 = vunpack.c.l.b16 %v1886
  %v1967 = vunpack.c.l.b16 %v1887
  %v1968 = vunpack.c.l.b16 %v1888
  %v1969 = vunpack.c.l.b16 %v1889
  %v1970 = vunpack.c.l.b16 %v1890
  %v1971 = vunpack.c.l.b16 %v1891
  %v1972 = vunpack.c.l.b16 %v1892
  %v1973 = vunpack.c.l.b16 %v1893
  %v1974 = vunpack.c.l.b16 %v1894
  %v1975 = vunpack.c.l.b16 %v1895
  %v1976 = vpack.c.b16 %v1937, %v1936
  %v1977 = vpack.c.b16 %v1939, %v1938
  %v1978 = vpack.c.b16 %v1941, %v1940
  %v1979 = vpack.c.b16 %v1943, %v1942
  %v1980 = vpack.c.b16 %v1945, %v1944
  %v1981 = vpack.c.b16 %v1947, %v1946
  %v1982 = vpack.c.b16 %v1949, %v1948
  %v1983 = vpack.c.b16 %v1951, %v1950
  %v1984 = vpack.c.b16 %v1953, %v1952
  %v1985 = vpack.c.b16 %v1955, %v1954
  %v1986 = vpack.c.b16 %v1957, %v1956
  %v1987 = vpack.c.b16 %v1959, %v1958
  %v1988 = vpack.c.b16 %v1961, %v1960
  %v1989 = vpack.c.b16 %v1963, %v1962
  %v1990 = vpack.c.b16 %v1965, %v1964
  %v1991 = vpack.c.b16 %v1967, %v1966
  %v1992 = vpack.c.b16 %v1969, %v1968
  %v1993 = vpack.c.b16 %v1971, %v1970
  %v1994 = vpack.c.b16 %v1973, %v1972
  %v1995 = vpack.c.b16 %v1975, %v1974
  %v2017 = vsel %vm1711, %v1540, 0
  %v2020 = vsel %vm1711, %v1543, 0
  %2022 = vmatprep.subr.bf16.mxu0 0
  %2023 = vmatpush1.bf16.msra.mxu0 %v1983
  %2024 = vmatprep.subr.bf16.mxu0 0
  %2025 = vmatpush1.bf16.msra.mxu0 %v1982
  %2026 = vmatprep.subr.bf16.mxu0 0
  %2027 = vmatpush1.bf16.msra.mxu0 %v1981
  %2028 = vmatprep.subr.bf16.mxu0 0
  %2029 = vmatpush1.bf16.msra.mxu0 %v1980
  %2030 = vmatprep.subr.bf16.mxu0 0
  %2031 = vmatpush1.bf16.msra.mxu0 %v1979
  %2032 = vmatprep.subr.bf16.mxu0 0
  %2033 = vmatpush1.bf16.msra.mxu0 %v1978
  %2034 = vmatprep.subr.bf16.mxu0 0
  %2035 = vmatpush1.bf16.msra.mxu0 %v1977
  %2036 = vmatprep.subr.bf16.mxu0 0
  %2037 = vmatpush1.bf16.msra.mxu0 %v1976
  %2038 = vmatprep.subr.bf16.mxu0 0
  %2039 = vmatpush2.bf16.msra.mxu0 %v1991
  %2040 = vmatprep.subr.bf16.mxu0 0
  %2041 = vmatpush2.bf16.msra.mxu0 %v1990
  %2042 = vmatprep.subr.bf16.mxu0 0
  %2043 = vmatpush2.bf16.msra.mxu0 %v1989
  %2044 = vmatprep.subr.bf16.mxu0 0
  %2045 = vmatpush2.bf16.msra.mxu0 %v1988
  %2046 = vmatprep.subr.bf16.mxu0 0
  %2047 = vmatpush2.bf16.msra.mxu0 %v1987
  %2048 = vmatprep.subr.bf16.mxu0 0
  %2049 = vmatpush2.bf16.msra.mxu0 %v1986
  %2050 = vmatprep.subr.bf16.mxu0 0
  %2051 = vmatpush2.bf16.msra.mxu0 %v1985
  %2052 = vmatprep.subr.bf16.mxu0 0
  %2053 = vmatpush2.bf16.msra.mxu0 %v1984
  %2054 = vmatprep.mubr.bf16.mxu0 %v1539
  %2055 = vmatmul.mubr.bf16.gmra.mxu0 %v1538
  %v2056 = vpop.f32.mrf.mxu0
  %v2057 = vadd.f32 0.0, %v2056
  %v2058 = vpop.f32.mrf.mxu0
  %v2059 = vpop.f32.mrf.mxu0
  %v2060 = vadd.f32 0.0, %v2059
  %v2061 = vpop.f32.mrf.mxu0
  %2062 = vmatprep.mubr.bf16.mxu0 %v1542
  %2063 = vmatmul.mubr.bf16.gmra.mxu0 %v1541
  %v2064 = vpop.f32.mrf.mxu0
  %v2065 = vadd.f32 0.0, %v2064
  %v2066 = vpop.f32.mrf.mxu0
  %v2067 = vpop.f32.mrf.mxu0
  %v2068 = vadd.f32 0.0, %v2067
  %v2069 = vpop.f32.mrf.mxu0
  %2070 = vdwg.mxu0
  %2071 = vmatprep.subr.bf16.mxu0 0
  %2072 = vmatpush1.bf16.msra.mxu0 0
  %2073 = vmatprep.subr.bf16.mxu0 0
  %2074 = vmatpush1.bf16.msra.mxu0 0
  %2075 = vmatprep.subr.bf16.mxu0 0
  %2076 = vmatpush1.bf16.msra.mxu0 0
  %2077 = vmatprep.subr.bf16.mxu0 0
  %2078 = vmatpush1.bf16.msra.mxu0 0
  %2079 = vmatprep.subr.bf16.mxu0 0
  %2080 = vmatpush1.bf16.msra.mxu0 %v1995
  %2081 = vmatprep.subr.bf16.mxu0 0
  %2082 = vmatpush1.bf16.msra.mxu0 %v1994
  %2083 = vmatprep.subr.bf16.mxu0 0
  %2084 = vmatpush1.bf16.msra.mxu0 %v1993
  %2085 = vmatprep.subr.bf16.mxu0 0
  %2086 = vmatpush1.bf16.msra.mxu0 %v1992
  %2087 = vmatprep.subr.bf16.mxu0 0
  %2088 = vmatpush2.bf16.msra.mxu0 0
  %2089 = vmatprep.subr.bf16.mxu0 0
  %2090 = vmatpush2.bf16.msra.mxu0 0
  %2091 = vmatprep.subr.bf16.mxu0 0
  %2092 = vmatpush2.bf16.msra.mxu0 0
  %2093 = vmatprep.subr.bf16.mxu0 0
  %2094 = vmatpush2.bf16.msra.mxu0 0
  %2095 = vmatprep.subr.bf16.mxu0 0
  %2096 = vmatpush2.bf16.msra.mxu0 0
  %2097 = vmatprep.subr.bf16.mxu0 0
  %2098 = vmatpush2.bf16.msra.mxu0 0
  %2099 = vmatprep.subr.bf16.mxu0 0
  %2100 = vmatpush2.bf16.msra.mxu0 0
  %2101 = vmatprep.subr.bf16.mxu0 0
  %2102 = vmatpush2.bf16.msra.mxu0 0
  %2103 = vmatprep.mubr.bf16.mxu0 0
  %2104 = vmatmul.mubr.bf16.gmra.mxu0 %v2017
  %v2105 = vpop.f32.mrf.mxu0
  %v2106 = vadd.f32 %v2057, %v2105
  %v2107 = vpop.f32.mrf.mxu0
  %v2108 = vpop.f32.mrf.mxu0
  %v2109 = vadd.f32 %v2060, %v2108
  %v2110 = vpop.f32.mrf.mxu0
  %2111 = vmatprep.mubr.bf16.mxu0 0
  %2112 = vmatmul.mubr.bf16.gmra.mxu0 %v2020
  %v2113 = vpop.f32.mrf.mxu0
  %v2114 = vadd.f32 %v2065, %v2113
  %v2115 = vpop.f32.mrf.mxu0
  %v2116 = vpop.f32.mrf.mxu0
  %v2117 = vadd.f32 %v2068, %v2116
  %v2118 = vpop.f32.mrf.mxu0
  %2119 = vdwg.mxu0
  %v2160 = vunpack.c.l.b16 %v1816
  %v2161 = vunpack.c.l.b16 %v1817
  %v2162 = vunpack.c.l.b16 %v1818
  %v2163 = vunpack.c.l.b16 %v1819
  %v2164 = vunpack.c.l.b16 %v1820
  %v2165 = vunpack.c.l.b16 %v1821
  %v2166 = vunpack.c.l.b16 %v1822
  %v2167 = vunpack.c.l.b16 %v1823
  %v2168 = vunpack.c.l.b16 %v1824
  %v2169 = vunpack.c.l.b16 %v1825
  %v2170 = vunpack.c.l.b16 %v1826
  %v2171 = vunpack.c.l.b16 %v1827
  %v2172 = vunpack.c.l.b16 %v1828
  %v2173 = vunpack.c.l.b16 %v1829
  %v2174 = vunpack.c.l.b16 %v1830
  %v2175 = vunpack.c.l.b16 %v1831
  %v2176 = vunpack.c.l.b16 %v1832
  %v2177 = vunpack.c.l.b16 %v1833
  %v2178 = vunpack.c.l.b16 %v1834
  %v2179 = vunpack.c.l.b16 %v1835
  %v2180 = vunpack.c.l.b16 %v1836
  %v2181 = vunpack.c.l.b16 %v1837
  %v2182 = vunpack.c.l.b16 %v1838
  %v2183 = vunpack.c.l.b16 %v1839
  %v2184 = vunpack.c.l.b16 %v1840
  %v2185 = vunpack.c.l.b16 %v1841
  %v2186 = vunpack.c.l.b16 %v1842
  %v2187 = vunpack.c.l.b16 %v1843
  %v2188 = vunpack.c.l.b16 %v1844
  %v2189 = vunpack.c.l.b16 %v1845
  %v2190 = vunpack.c.l.b16 %v1846
  %v2191 = vunpack.c.l.b16 %v1847
  %v2192 = vunpack.c.l.b16 %v1848
  %v2193 = vunpack.c.l.b16 %v1849
  %v2194 = vunpack.c.l.b16 %v1850
  %v2195 = vunpack.c.l.b16 %v1851
  %v2196 = vunpack.c.l.b16 %v1852
  %v2197 = vunpack.c.l.b16 %v1853
  %v2198 = vunpack.c.l.b16 %v1854
  %v2199 = vunpack.c.l.b16 %v1855
  %v2200 = vpack.c.b16 %v2161, %v2160
  %v2201 = vpack.c.b16 %v2163, %v2162
  %v2202 = vpack.c.b16 %v2165, %v2164
  %v2203 = vpack.c.b16 %v2167, %v2166
  %v2204 = vpack.c.b16 %v2169, %v2168
  %v2205 = vpack.c.b16 %v2171, %v2170
  %v2206 = vpack.c.b16 %v2173, %v2172
  %v2207 = vpack.c.b16 %v2175, %v2174
  %v2208 = vpack.c.b16 %v2177, %v2176
  %v2209 = vpack.c.b16 %v2179, %v2178
  %v2210 = vpack.c.b16 %v2181, %v2180
  %v2211 = vpack.c.b16 %v2183, %v2182
  %v2212 = vpack.c.b16 %v2185, %v2184
  %v2213 = vpack.c.b16 %v2187, %v2186
  %v2214 = vpack.c.b16 %v2189, %v2188
  %v2215 = vpack.c.b16 %v2191, %v2190
  %v2216 = vpack.c.b16 %v2193, %v2192
  %v2217 = vpack.c.b16 %v2195, %v2194
  %v2218 = vpack.c.b16 %v2197, %v2196
  %v2219 = vpack.c.b16 %v2199, %v2198
  %2240 = vmatprep.subr.bf16.mxu0 0
  %2241 = vmatpush1.bf16.msra.mxu0 %v2207
  %2242 = vmatprep.subr.bf16.mxu0 0
  %2243 = vmatpush1.bf16.msra.mxu0 %v2206
  %2244 = vmatprep.subr.bf16.mxu0 0
  %2245 = vmatpush1.bf16.msra.mxu0 %v2205
  %2246 = vmatprep.subr.bf16.mxu0 0
  %2247 = vmatpush1.bf16.msra.mxu0 %v2204
  %2248 = vmatprep.subr.bf16.mxu0 0
  %2249 = vmatpush1.bf16.msra.mxu0 %v2203
  %2250 = vmatprep.subr.bf16.mxu0 0
  %2251 = vmatpush1.bf16.msra.mxu0 %v2202
  %2252 = vmatprep.subr.bf16.mxu0 0
  %2253 = vmatpush1.bf16.msra.mxu0 %v2201
  %2254 = vmatprep.subr.bf16.mxu0 0
  %2255 = vmatpush1.bf16.msra.mxu0 %v2200
  %2256 = vmatprep.subr.bf16.mxu0 0
  %2257 = vmatpush2.bf16.msra.mxu0 %v2215
  %2258 = vmatprep.subr.bf16.mxu0 0
  %2259 = vmatpush2.bf16.msra.mxu0 %v2214
  %2260 = vmatprep.subr.bf16.mxu0 0
  %2261 = vmatpush2.bf16.msra.mxu0 %v2213
  %2262 = vmatprep.subr.bf16.mxu0 0
  %2263 = vmatpush2.bf16.msra.mxu0 %v2212
  %2264 = vmatprep.subr.bf16.mxu0 0
  %2265 = vmatpush2.bf16.msra.mxu0 %v2211
  %2266 = vmatprep.subr.bf16.mxu0 0
  %2267 = vmatpush2.bf16.msra.mxu0 %v2210
  %2268 = vmatprep.subr.bf16.mxu0 0
  %2269 = vmatpush2.bf16.msra.mxu0 %v2209
  %2270 = vmatprep.subr.bf16.mxu0 0
  %2271 = vmatpush2.bf16.msra.mxu0 %v2208
  %2272 = vmatprep.mubr.bf16.mxu0 %v1533
  %2273 = vmatmul.mubr.bf16.gmra.mxu0 %v1532
  %v2274 = vpop.f32.mrf.mxu0
  %v2275 = vadd.f32 %v2106, %v2274
  %v2276 = vpop.f32.mrf.mxu0
  %v2277 = vpop.f32.mrf.mxu0
  %v2278 = vadd.f32 %v2109, %v2277
  %v2279 = vpop.f32.mrf.mxu0
  %2280 = vmatprep.mubr.bf16.mxu0 %v1536
  %2281 = vmatmul.mubr.bf16.gmra.mxu0 %v1535
  %v2282 = vpop.f32.mrf.mxu0
  %v2283 = vadd.f32 %v2114, %v2282
  %v2284 = vpop.f32.mrf.mxu0
  %v2285 = vpop.f32.mrf.mxu0
  %v2286 = vadd.f32 %v2117, %v2285
  %v2287 = vpop.f32.mrf.mxu0
  %2288 = vdwg.mxu0
  %2289 = vmatprep.subr.bf16.mxu0 0
  %2290 = vmatpush1.bf16.msra.mxu0 0
  %2291 = vmatprep.subr.bf16.mxu0 0
  %2292 = vmatpush1.bf16.msra.mxu0 0
  %2293 = vmatprep.subr.bf16.mxu0 0
  %2294 = vmatpush1.bf16.msra.mxu0 0
  %2295 = vmatprep.subr.bf16.mxu0 0
  %2296 = vmatpush1.bf16.msra.mxu0 0
  %2297 = vmatprep.subr.bf16.mxu0 0
  %2298 = vmatpush1.bf16.msra.mxu0 %v2219
  %2299 = vmatprep.subr.bf16.mxu0 0
  %2300 = vmatpush1.bf16.msra.mxu0 %v2218
  %2301 = vmatprep.subr.bf16.mxu0 0
  %2302 = vmatpush1.bf16.msra.mxu0 %v2217
  %2303 = vmatprep.subr.bf16.mxu0 0
  %2304 = vmatpush1.bf16.msra.mxu0 %v2216
  %2305 = vmatprep.subr.bf16.mxu0 0
  %2306 = vmatpush2.bf16.msra.mxu0 0
  %2307 = vmatprep.subr.bf16.mxu0 0
  %2308 = vmatpush2.bf16.msra.mxu0 0
  %2309 = vmatprep.subr.bf16.mxu0 0
  %2310 = vmatpush2.bf16.msra.mxu0 0
  %2311 = vmatprep.subr.bf16.mxu0 0
  %2312 = vmatpush2.bf16.msra.mxu0 0
  %2313 = vmatprep.subr.bf16.mxu0 0
  %2314 = vmatpush2.bf16.msra.mxu0 0
  %2315 = vmatprep.subr.bf16.mxu0 0
  %2316 = vmatpush2.bf16.msra.mxu0 0
  %2317 = vmatprep.subr.bf16.mxu0 0
  %2318 = vmatpush2.bf16.msra.mxu0 0
  %2319 = vmatprep.subr.bf16.mxu0 0
  %2320 = vmatpush2.bf16.msra.mxu0 0
  %2321 = vmatprep.mubr.bf16.mxu0 0
  %2322 = vmatmul.mubr.bf16.gmra.mxu0 %v1713
  %v2323 = vpop.f32.mrf.mxu0
  %v2324 = vadd.f32 %v2275, %v2323
  %v2325 = vpop.f32.mrf.mxu0
  %v2326 = vpop.f32.mrf.mxu0
  %v2327 = vadd.f32 %v2278, %v2326
  %v2328 = vpop.f32.mrf.mxu0
  %2329 = vmatprep.mubr.bf16.mxu0 0
  %2330 = vmatmul.mubr.bf16.gmra.mxu0 %v1716
  %v2331 = vpop.f32.mrf.mxu0
  %v2332 = vadd.f32 %v2283, %v2331
  %v2333 = vpop.f32.mrf.mxu0
  %v2334 = vpop.f32.mrf.mxu0
  %v2335 = vadd.f32 %v2286, %v2334
  %v2336 = vpop.f32.mrf.mxu0
  %2337 = vdwg.mxu0
  %v2338 = vadd.f32 %v2324, %v1589
  %v2339 = vadd.f32 %v2327, %v1589
  %v2340 = vadd.f32 %v2332, %v1589
  %v2341 = vadd.f32 %v2335, %v1589
  %v2342 = vmax.f32 %v1802, 0.0
  %v2343 = vmax.f32 %v1805, 0.0
  %v2344 = vmax.f32 %v1810, 0.0
  %v2345 = vmax.f32 %v1813, 0.0
  %v2346 = vmax.f32 %v2338, 0.0
  %v2347 = vmax.f32 %v2339, 0.0
  %v2348 = vmax.f32 %v2340, 0.0
  %v2349 = vmax.f32 %v2341, 0.0
  %v2350 = vmax.f32 %v2342, %v2346
  %v2351 = vmax.f32 %v2343, %v2347
  %v2352 = vmax.f32 %v2344, %v2348
  %v2353 = vmax.f32 %v2345, %v2349
  %v2354 = vpack.c.bf16 %v2351, %v2350
  %v2355 = vpack.c.bf16 %v2352, %v2352
  %v2356 = vpack.c.bf16 %v2352, %v2351
  %v2357 = vpack.c.bf16 %v2353, %v2353
  %v2358 = vld [vmem:[%s7] sm:$0xf]
  %v2359 = vld [vmem:[%s7 + $0x4] sm:$0xf]
  %v2360 = vld [vmem:[%s7 + $0x8] sm:$0xf]
  %v2361 = vld [vmem:[%s7 + $0xc] sm:$0xf]
  %v2362 = vld [vmem:[%s8] sm:$0xf]
  %v2363 = vld [vmem:[%s8 + $0x4] sm:$0xf]
  %v2364 = vld [vmem:[%s8 + $0x8] sm:$0xf]
  %v2365 = vld [vmem:[%s8 + $0xc] sm:$0xf]
  %v2370 = vunpack.c.l.b16 %v2362
  %v2371 = vunpack.c.l.b16 %v2363
  %v2372 = vunpack.c.l.b16 %v2364
  %v2373 = vunpack.c.l.b16 %v2365
  %v2374 = vpack.c.b16 %v2371, %v2370
  %v2375 = vpack.c.b16 %v2373, %v2372
  %vm2378 = vcmask 261120
  %v2380 = vsel %vm2378, %v2356, 0
  %v2383 = vsel %vm2378, %v2357, 0
  %2385 = vmatprep.subr.bf16.mxu0 0
  %2386 = vmatpush1.bf16.msra.mxu0 0
  %2387 = vmatprep.subr.bf16.mxu0 0
  %2388 = vmatpush1.bf16.msra.mxu0 0
  %2389 = vmatprep.subr.bf16.mxu0 0
  %2390 = vmatpush1.bf16.msra.mxu0 0
  %2391 = vmatprep.subr.bf16.mxu0 0
  %2392 = vmatpush1.bf16.msra.mxu0 0
  %2393 = vmatprep.subr.bf16.mxu0 0
  %2394 = vmatpush1.bf16.msra.mxu0 0
  %2395 = vmatprep.subr.bf16.mxu0 0
  %2396 = vmatpush1.bf16.msra.mxu0 0
  %2397 = vmatprep.subr.bf16.mxu0 0
  %2398 = vmatpush1.bf16.msra.mxu0 %v2375
  %2399 = vmatprep.subr.bf16.mxu0 0
  %2400 = vmatpush1.bf16.msra.mxu0 %v2374
  %2401 = vmatprep.subr.bf16.mxu0 0
  %2402 = vmatpush2.bf16.msra.mxu0 0
  %2403 = vmatprep.subr.bf16.mxu0 0
  %2404 = vmatpush2.bf16.msra.mxu0 0
  %2405 = vmatprep.subr.bf16.mxu0 0
  %2406 = vmatpush2.bf16.msra.mxu0 0
  %2407 = vmatprep.subr.bf16.mxu0 0
  %2408 = vmatpush2.bf16.msra.mxu0 0
  %2409 = vmatprep.subr.bf16.mxu0 0
  %2410 = vmatpush2.bf16.msra.mxu0 0
  %2411 = vmatprep.subr.bf16.mxu0 0
  %2412 = vmatpush2.bf16.msra.mxu0 0
  %2413 = vmatprep.subr.bf16.mxu0 0
  %2414 = vmatpush2.bf16.msra.mxu0 0
  %2415 = vmatprep.subr.bf16.mxu0 0
  %2416 = vmatpush2.bf16.msra.mxu0 0
  %2417 = vmatprep.mubr.bf16.mxu0 0
  %2418 = vmatmul.mubr.bf16.gmra.mxu0 %v2380
  %v2419 = vpop.f32.mrf.mxu0
  %v2420 = vadd.f32 0.0, %v2419
  %v2421 = vpop.f32.mrf.mxu0
  %v2422 = vpop.f32.mrf.mxu0
  %v2423 = vadd.f32 0.0, %v2422
  %v2424 = vpop.f32.mrf.mxu0
  %2425 = vmatprep.mubr.bf16.mxu0 0
  %2426 = vmatmul.mubr.bf16.gmra.mxu0 %v2383
  %v2427 = vpop.f32.mrf.mxu0
  %v2428 = vadd.f32 0.0, %v2427
  %v2429 = vpop.f32.mrf.mxu0
  %v2430 = vpop.f32.mrf.mxu0
  %v2431 = vpop.f32.mrf.mxu0
  %2432 = vdwg.mxu0
  %v2437 = vunpack.c.l.b16 %v2358
  %v2438 = vunpack.c.l.b16 %v2359
  %v2439 = vunpack.c.l.b16 %v2360
  %v2440 = vunpack.c.l.b16 %v2361
  %v2441 = vpack.c.b16 %v2438, %v2437
  %v2442 = vpack.c.b16 %v2440, %v2439
  %v2446 = vsel %vm2378, %v2354, 0
  %v2449 = vsel %vm2378, %v2355, 0
  %2451 = vmatprep.subr.bf16.mxu0 0
  %2452 = vmatpush1.bf16.msra.mxu0 0
  %2453 = vmatprep.subr.bf16.mxu0 0
  %2454 = vmatpush1.bf16.msra.mxu0 0
  %2455 = vmatprep.subr.bf16.mxu0 0
  %2456 = vmatpush1.bf16.msra.mxu0 0
  %2457 = vmatprep.subr.bf16.mxu0 0
  %2458 = vmatpush1.bf16.msra.mxu0 0
  %2459 = vmatprep.subr.bf16.mxu0 0
  %2460 = vmatpush1.bf16.msra.mxu0 0
  %2461 = vmatprep.subr.bf16.mxu0 0
  %2462 = vmatpush1.bf16.msra.mxu0 0
  %2463 = vmatprep.subr.bf16.mxu0 0
  %2464 = vmatpush1.bf16.msra.mxu0 %v2442
  %2465 = vmatprep.subr.bf16.mxu0 0
  %2466 = vmatpush1.bf16.msra.mxu0 %v2441
  %2467 = vmatprep.subr.bf16.mxu0 0
  %2468 = vmatpush2.bf16.msra.mxu0 0
  %2469 = vmatprep.subr.bf16.mxu0 0
  %2470 = vmatpush2.bf16.msra.mxu0 0
  %2471 = vmatprep.subr.bf16.mxu0 0
  %2472 = vmatpush2.bf16.msra.mxu0 0
  %2473 = vmatprep.subr.bf16.mxu0 0
  %2474 = vmatpush2.bf16.msra.mxu0 0
  %2475 = vmatprep.subr.bf16.mxu0 0
  %2476 = vmatpush2.bf16.msra.mxu0 0
  %2477 = vmatprep.subr.bf16.mxu0 0
  %2478 = vmatpush2.bf16.msra.mxu0 0
  %2479 = vmatprep.subr.bf16.mxu0 0
  %2480 = vmatpush2.bf16.msra.mxu0 0
  %2481 = vmatprep.subr.bf16.mxu0 0
  %2482 = vmatpush2.bf16.msra.mxu0 0
  %2483 = vmatprep.mubr.bf16.mxu0 0
  %2484 = vmatmul.mubr.bf16.gmra.mxu0 %v2446
  %v2485 = vpop.f32.mrf.mxu0
  %v2486 = vadd.f32 %v2420, %v2485
  %v2487 = vpop.f32.mrf.mxu0
  %v2488 = vpop.f32.mrf.mxu0
  %v2489 = vadd.f32 %v2423, %v2488
  %v2490 = vpop.f32.mrf.mxu0
  %2491 = vmatprep.mubr.bf16.mxu0 0
  %2492 = vmatmul.mubr.bf16.gmra.mxu0 %v2449
  %v2493 = vpop.f32.mrf.mxu0
  %v2494 = vadd.f32 %v2428, %v2493
  %v2495 = vpop.f32.mrf.mxu0
  %v2496 = vpop.f32.mrf.mxu0
  %v2497 = vpop.f32.mrf.mxu0
  %2498 = vdwg.mxu0
  %v2499 = vld [vmem:[%s9] sm:$0x1]
  %v2501 = vlaneseq
  %v2502 = vshrl.u32 %v2501, 7
  %v2503 = vsub.s32 0, %v2502
  %v2504 = vrot.slane %v2499, %v2503
  %v2506 = vadd.f32 %v2486, %v2504
  %v2507 = vadd.f32 %v2489, %v2504
  %v2508 = vadd.f32 %v2494, %v2504
  %v2509 = vmax.f32 %v2506, 0.0
  %v2510 = vmax.f32 %v2507, 0.0
  %v2511 = vmax.f32 %v2508, 0.0
  %v2512 = vpack.c.bf16 %v2510, %v2509
  %v2513 = vpack.c.bf16 %v2511, %v2511
  %v2514 = vld [vmem:[%s10] sm:$0xf]
  %v2515 = vld [vmem:[%s10 + $0x4] sm:$0xf]
  %v2516 = vld [vmem:[%s10 + $0x8] sm:$0xf]
  %v2517 = vld [vmem:[%s10 + $0xc] sm:$0xf]
  %v2518 = vld [vmem:[%s10 + $0x10] sm:$0xf]
  %v2519 = vld [vmem:[%s10 + $0x14] sm:$0xf]
  %v2520 = vld [vmem:[%s10 + $0x18] sm:$0xf]
  %v2521 = vld [vmem:[%s10 + $0x1c] sm:$0xf]
  %v2522 = vld [vmem:[%s11] sm:$0x1]
  %v2524 = vlaneseq
  %v2525 = vshrl.u32 %v2524, 7
  %v2526 = vsub.s32 0, %v2525
  %v2527 = vrot.slane %v2522, %v2526
  %v2537 = vunpack.c.l.b16 %v2514
  %v2538 = vunpack.c.l.b16 %v2515
  %v2539 = vunpack.c.l.b16 %v2516
  %v2540 = vunpack.c.l.b16 %v2517
  %v2541 = vunpack.c.l.b16 %v2518
  %v2542 = vunpack.c.l.b16 %v2519
  %v2543 = vunpack.c.l.b16 %v2520
  %v2544 = vunpack.c.l.b16 %v2521
  %v2545 = vpack.c.b16 %v2538, %v2537
  %v2546 = vpack.c.b16 %v2540, %v2539
  %v2547 = vpack.c.b16 %v2542, %v2541
  %v2548 = vpack.c.b16 %v2544, %v2543
  %v2554 = vsel %vm1711, %v2512, 0
  %v2557 = vsel %vm1711, %v2513, 0
  %2559 = vmatprep.subr.bf16.mxu0 0
  %2560 = vmatpush1.bf16.msra.mxu0 0
  %2561 = vmatprep.subr.bf16.mxu0 0
  %2562 = vmatpush1.bf16.msra.mxu0 0
  %2563 = vmatprep.subr.bf16.mxu0 0
  %2564 = vmatpush1.bf16.msra.mxu0 0
  %2565 = vmatprep.subr.bf16.mxu0 0
  %2566 = vmatpush1.bf16.msra.mxu0 0
  %2567 = vmatprep.subr.bf16.mxu0 0
  %2568 = vmatpush1.bf16.msra.mxu0 %v2548
  %2569 = vmatprep.subr.bf16.mxu0 0
  %2570 = vmatpush1.bf16.msra.mxu0 %v2547
  %2571 = vmatprep.subr.bf16.mxu0 0
  %2572 = vmatpush1.bf16.msra.mxu0 %v2546
  %2573 = vmatprep.subr.bf16.mxu0 0
  %2574 = vmatpush1.bf16.msra.mxu0 %v2545
  %2575 = vmatprep.subr.bf16.mxu0 0
  %2576 = vmatpush2.bf16.msra.mxu0 0
  %2577 = vmatprep.subr.bf16.mxu0 0
  %2578 = vmatpush2.bf16.msra.mxu0 0
  %2579 = vmatprep.subr.bf16.mxu0 0
  %2580 = vmatpush2.bf16.msra.mxu0 0
  %2581 = vmatprep.subr.bf16.mxu0 0
  %2582 = vmatpush2.bf16.msra.mxu0 0
  %2583 = vmatprep.subr.bf16.mxu0 0
  %2584 = vmatpush2.bf16.msra.mxu0 0
  %2585 = vmatprep.subr.bf16.mxu0 0
  %2586 = vmatpush2.bf16.msra.mxu0 0
  %2587 = vmatprep.subr.bf16.mxu0 0
  %2588 = vmatpush2.bf16.msra.mxu0 0
  %2589 = vmatprep.subr.bf16.mxu0 0
  %2590 = vmatpush2.bf16.msra.mxu0 0
  %2591 = vmatprep.mubr.bf16.mxu0 0
  %2592 = vmatmul.mubr.bf16.gmra.mxu0 %v2554
  %v2593 = vpop.f32.mrf.mxu0
  %v2594 = vadd.f32 %v2527, %v2593
  %v2595 = vpop.f32.mrf.mxu0
  %v2596 = vpop.f32.mrf.mxu0
  %v2597 = vadd.f32 %v2527, %v2596
  %v2598 = vpop.f32.mrf.mxu0
  %2599 = vmatprep.mubr.bf16.mxu0 0
  %2600 = vmatmul.mubr.bf16.gmra.mxu0 %v2557
  %v2601 = vpop.f32.mrf.mxu0
  %v2602 = vadd.f32 %v2527, %v2601
  %v2603 = vpop.f32.mrf.mxu0
  %v2604 = vpop.f32.mrf.mxu0
  %v2605 = vpop.f32.mrf.mxu0
  %2606 = vdwg.mxu0
  %v2607 = vmax.f32 %v2594, 0.0
  %v2608 = vmax.f32 %v2597, 0.0
  %v2609 = vmax.f32 %v2602, 0.0
  %v2610 = vpack.c.bf16 %v2608, %v2607
  %v2611 = vpack.c.bf16 %v2609, %v2609
  %v2612 = vld [vmem:[%s12] sm:$0xff]
  %v2613 = vld [vmem:[%s12 + $0x8] sm:$0xff]
  %v2614 = vld [vmem:[%s12 + $0x10] sm:$0xff]
  %v2615 = vld [vmem:[%s12 + $0x18] sm:$0xff]
  %v2616 = vld [vmem:[%s12 + $0x20] sm:$0xff]
  %v2617 = vld [vmem:[%s12 + $0x28] sm:$0xff]
  %v2618 = vld [vmem:[%s12 + $0x30] sm:$0xff]
  %v2619 = vld [vmem:[%s12 + $0x38] sm:$0xff]
  %v2620 = vld [vmem:[%s12 + $0x40] sm:$0xff]
  %v2621 = vld [vmem:[%s12 + $0x48] sm:$0xff]
  %v2622 = vld [vmem:[%s12 + $0x50] sm:$0xff]
  %v2623 = vld [vmem:[%s12 + $0x58] sm:$0xff]
  %v2624 = vld [vmem:[%s12 + $0x60] sm:$0xff]
  %v2625 = vld [vmem:[%s12 + $0x68] sm:$0xff]
  %v2626 = vld [vmem:[%s12 + $0x70] sm:$0xff]
  %v2627 = vld [vmem:[%s12 + $0x78] sm:$0xff]
  %v2628 = vld [vmem:[%s12 + $0x80] sm:$0xff]
  %v2629 = vld [vmem:[%s12 + $0x88] sm:$0xff]
  %v2630 = vld [vmem:[%s12 + $0x90] sm:$0xff]
  %v2631 = vld [vmem:[%s12 + $0x98] sm:$0xff]
  %v2632 = vld [vmem:[%s12 + $0xa0] sm:$0xff]
  %v2633 = vld [vmem:[%s12 + $0xa8] sm:$0xff]
  %v2634 = vld [vmem:[%s12 + $0xb0] sm:$0xff]
  %v2635 = vld [vmem:[%s12 + $0xb8] sm:$0xff]
  %v2636 = vld [vmem:[%s12 + $0xc0] sm:$0xff]
  %v2637 = vld [vmem:[%s12 + $0xc8] sm:$0xff]
  %v2638 = vld [vmem:[%s12 + $0xd0] sm:$0xff]
  %v2639 = vld [vmem:[%s12 + $0xd8] sm:$0xff]
  %v2640 = vld [vmem:[%s12 + $0xe0] sm:$0xff]
  %v2641 = vld [vmem:[%s12 + $0xe8] sm:$0xff]
  %v2642 = vld [vmem:[%s12 + $0xf0] sm:$0xff]
  %v2643 = vld [vmem:[%s12 + $0xf8] sm:$0xff]
  %v2644 = vld [vmem:[%s12 + $0x100] sm:$0xff]
  %v2645 = vld [vmem:[%s12 + $0x108] sm:$0xff]
  %v2646 = vld [vmem:[%s12 + $0x110] sm:$0xff]
  %v2647 = vld [vmem:[%s12 + $0x118] sm:$0xff]
  %v2648 = vld [vmem:[%s12 + $0x120] sm:$0xff]
  %v2649 = vld [vmem:[%s12 + $0x128] sm:$0xff]
  %v2650 = vld [vmem:[%s12 + $0x130] sm:$0xff]
  %v2651 = vld [vmem:[%s12 + $0x138] sm:$0xff]
  %v2652 = vld [vmem:[%s12 + $0x140] sm:$0xff]
  %v2653 = vld [vmem:[%s12 + $0x148] sm:$0xff]
  %v2654 = vld [vmem:[%s12 + $0x150] sm:$0xff]
  %v2655 = vld [vmem:[%s12 + $0x158] sm:$0xff]
  %v2656 = vld [vmem:[%s12 + $0x160] sm:$0xff]
  %v2657 = vld [vmem:[%s12 + $0x168] sm:$0xff]
  %v2658 = vld [vmem:[%s12 + $0x170] sm:$0xff]
  %v2659 = vld [vmem:[%s12 + $0x178] sm:$0xff]
  %v2660 = vld [vmem:[%s12 + $0x180] sm:$0xff]
  %v2661 = vld [vmem:[%s12 + $0x188] sm:$0xff]
  %v2662 = vld [vmem:[%s12 + $0x190] sm:$0xff]
  %v2663 = vld [vmem:[%s12 + $0x198] sm:$0xff]
  %v2664 = vld [vmem:[%s12 + $0x1a0] sm:$0xff]
  %v2665 = vld [vmem:[%s12 + $0x1a8] sm:$0xff]
  %v2666 = vld [vmem:[%s12 + $0x1b0] sm:$0xff]
  %v2667 = vld [vmem:[%s12 + $0x1b8] sm:$0xff]
  %v2668 = vld [vmem:[%s12 + $0x1c0] sm:$0xff]
  %v2669 = vld [vmem:[%s12 + $0x1c8] sm:$0xff]
  %v2670 = vld [vmem:[%s12 + $0x1d0] sm:$0xff]
  %v2671 = vld [vmem:[%s12 + $0x1d8] sm:$0xff]
  %v2672 = vld [vmem:[%s12 + $0x1e0] sm:$0xff]
  %v2673 = vld [vmem:[%s12 + $0x1e8] sm:$0xff]
  %v2674 = vld [vmem:[%s12 + $0x1f0] sm:$0xff]
  %v2675 = vld [vmem:[%s12 + $0x1f8] sm:$0xff]
  %v2676 = vld [vmem:[%s14] sm:$0xff]
  %v2678 = vlaneseq
  %v2679 = vshrl.u32 %v2678, 7
  %v2680 = vsub.s32 0, %v2679
  %v2681 = vrot.slane %v2676, %v2680
  %v2682 = vlaneseq
  %v2683 = vshrl.u32 %v2682, 7
  %v2684 = vsub.s32 1, %v2683
  %v2685 = vrot.slane %v2676, %v2684
  %v2686 = vlaneseq
  %v2687 = vshrl.u32 %v2686, 7
  %v2688 = vsub.s32 2, %v2687
  %v2689 = vrot.slane %v2676, %v2688
  %v2690 = vlaneseq
  %v2691 = vshrl.u32 %v2690, 7
  %v2692 = vsub.s32 3, %v2691
  %v2693 = vrot.slane %v2676, %v2692
  %v2694 = vlaneseq
  %v2695 = vshrl.u32 %v2694, 7
  %v2696 = vsub.s32 4, %v2695
  %v2697 = vrot.slane %v2676, %v2696
  %v2698 = vlaneseq
  %v2699 = vshrl.u32 %v2698, 7
  %v2700 = vsub.s32 5, %v2699
  %v2701 = vrot.slane %v2676, %v2700
  %v2702 = vlaneseq
  %v2703 = vshrl.u32 %v2702, 7
  %v2704 = vsub.s32 6, %v2703
  %v2705 = vrot.slane %v2676, %v2704
  %v2706 = vlaneseq
  %v2707 = vshrl.u32 %v2706, 7
  %v2708 = vsub.s32 7, %v2707
  %v2709 = vrot.slane %v2676, %v2708
  %v2782 = vunpack.c.l.b16 %v2612
  %v2783 = vunpack.c.h.b16 %v2612
  %v2784 = vunpack.c.l.b16 %v2613
  %v2785 = vunpack.c.h.b16 %v2613
  %v2786 = vunpack.c.l.b16 %v2614
  %v2787 = vunpack.c.h.b16 %v2614
  %v2788 = vunpack.c.l.b16 %v2615
  %v2789 = vunpack.c.h.b16 %v2615
  %v2790 = vunpack.c.l.b16 %v2616
  %v2791 = vunpack.c.h.b16 %v2616
  %v2792 = vunpack.c.l.b16 %v2617
  %v2793 = vunpack.c.h.b16 %v2617
  %v2794 = vunpack.c.l.b16 %v2618
  %v2795 = vunpack.c.h.b16 %v2618
  %v2796 = vunpack.c.l.b16 %v2619
  %v2797 = vunpack.c.h.b16 %v2619
  %v2798 = vunpack.c.l.b16 %v2620
  %v2799 = vunpack.c.h.b16 %v2620
  %v2800 = vunpack.c.l.b16 %v2621
  %v2801 = vunpack.c.h.b16 %v2621
  %v2802 = vunpack.c.l.b16 %v2622
  %v2803 = vunpack.c.h.b16 %v2622
  %v2804 = vunpack.c.l.b16 %v2623
  %v2805 = vunpack.c.h.b16 %v2623
  %v2806 = vunpack.c.l.b16 %v2624
  %v2807 = vunpack.c.h.b16 %v2624
  %v2808 = vunpack.c.l.b16 %v2625
  %v2809 = vunpack.c.h.b16 %v2625
  %v2810 = vunpack.c.l.b16 %v2626
  %v2811 = vunpack.c.h.b16 %v2626
  %v2812 = vunpack.c.l.b16 %v2627
  %v2813 = vunpack.c.h.b16 %v2627
  %v2814 = vunpack.c.l.b16 %v2628
  %v2815 = vunpack.c.h.b16 %v2628
  %v2816 = vunpack.c.l.b16 %v2629
  %v2817 = vunpack.c.h.b16 %v2629
  %v2818 = vunpack.c.l.b16 %v2630
  %v2819 = vunpack.c.h.b16 %v2630
  %v2820 = vunpack.c.l.b16 %v2631
  %v2821 = vunpack.c.h.b16 %v2631
  %v2822 = vunpack.c.l.b16 %v2632
  %v2823 = vunpack.c.h.b16 %v2632
  %v2824 = vunpack.c.l.b16 %v2633
  %v2825 = vunpack.c.h.b16 %v2633
  %v2826 = vunpack.c.l.b16 %v2634
  %v2827 = vunpack.c.h.b16 %v2634
  %v2828 = vunpack.c.l.b16 %v2635
  %v2829 = vunpack.c.h.b16 %v2635
  %v2830 = vunpack.c.l.b16 %v2636
  %v2831 = vunpack.c.h.b16 %v2636
  %v2832 = vunpack.c.l.b16 %v2637
  %v2833 = vunpack.c.h.b16 %v2637
  %v2834 = vunpack.c.l.b16 %v2638
  %v2835 = vunpack.c.h.b16 %v2638
  %v2836 = vunpack.c.l.b16 %v2639
  %v2837 = vunpack.c.h.b16 %v2639
  %v2838 = vunpack.c.l.b16 %v2640
  %v2839 = vunpack.c.h.b16 %v2640
  %v2840 = vunpack.c.l.b16 %v2641
  %v2841 = vunpack.c.h.b16 %v2641
  %v2842 = vunpack.c.l.b16 %v2642
  %v2843 = vunpack.c.h.b16 %v2642
  %v2844 = vunpack.c.l.b16 %v2643
  %v2845 = vunpack.c.h.b16 %v2643
  %v2846 = vunpack.c.l.b16 %v2644
  %v2847 = vunpack.c.h.b16 %v2644
  %v2848 = vunpack.c.l.b16 %v2645
  %v2849 = vunpack.c.h.b16 %v2645
  %v2850 = vunpack.c.l.b16 %v2646
  %v2851 = vunpack.c.h.b16 %v2646
  %v2852 = vunpack.c.l.b16 %v2647
  %v2853 = vunpack.c.h.b16 %v2647
  %v2854 = vunpack.c.l.b16 %v2648
  %v2855 = vunpack.c.h.b16 %v2648
  %v2856 = vunpack.c.l.b16 %v2649
  %v2857 = vunpack.c.h.b16 %v2649
  %v2858 = vunpack.c.l.b16 %v2650
  %v2859 = vunpack.c.h.b16 %v2650
  %v2860 = vunpack.c.l.b16 %v2651
  %v2861 = vunpack.c.h.b16 %v2651
  %v2862 = vunpack.c.l.b16 %v2652
  %v2863 = vunpack.c.h.b16 %v2652
  %v2864 = vunpack.c.l.b16 %v2653
  %v2865 = vunpack.c.h.b16 %v2653
  %v2866 = vunpack.c.l.b16 %v2654
  %v2867 = vunpack.c.h.b16 %v2654
  %v2868 = vunpack.c.l.b16 %v2655
  %v2869 = vunpack.c.h.b16 %v2655
  %v2870 = vunpack.c.l.b16 %v2656
  %v2871 = vunpack.c.h.b16 %v2656
  %v2872 = vunpack.c.l.b16 %v2657
  %v2873 = vunpack.c.h.b16 %v2657
  %v2874 = vunpack.c.l.b16 %v2658
  %v2875 = vunpack.c.h.b16 %v2658
  %v2876 = vunpack.c.l.b16 %v2659
  %v2877 = vunpack.c.h.b16 %v2659
  %v2878 = vunpack.c.l.b16 %v2660
  %v2879 = vunpack.c.h.b16 %v2660
  %v2880 = vunpack.c.l.b16 %v2661
  %v2881 = vunpack.c.h.b16 %v2661
  %v2882 = vunpack.c.l.b16 %v2662
  %v2883 = vunpack.c.h.b16 %v2662
  %v2884 = vunpack.c.l.b16 %v2663
  %v2885 = vunpack.c.h.b16 %v2663
  %v2886 = vunpack.c.l.b16 %v2664
  %v2887 = vunpack.c.h.b16 %v2664
  %v2888 = vunpack.c.l.b16 %v2665
  %v2889 = vunpack.c.h.b16 %v2665
  %v2890 = vunpack.c.l.b16 %v2666
  %v2891 = vunpack.c.h.b16 %v2666
  %v2892 = vunpack.c.l.b16 %v2667
  %v2893 = vunpack.c.h.b16 %v2667
  %v2894 = vunpack.c.l.b16 %v2668
  %v2895 = vunpack.c.h.b16 %v2668
  %v2896 = vunpack.c.l.b16 %v2669
  %v2897 = vunpack.c.h.b16 %v2669
  %v2898 = vunpack.c.l.b16 %v2670
  %v2899 = vunpack.c.h.b16 %v2670
  %v2900 = vunpack.c.l.b16 %v2671
  %v2901 = vunpack.c.h.b16 %v2671
  %v2902 = vunpack.c.l.b16 %v2672
  %v2903 = vunpack.c.h.b16 %v2672
  %v2904 = vunpack.c.l.b16 %v2673
  %v2905 = vunpack.c.h.b16 %v2673
  %v2906 = vunpack.c.l.b16 %v2674
  %v2907 = vunpack.c.h.b16 %v2674
  %v2908 = vunpack.c.l.b16 %v2675
  %v2909 = vunpack.c.h.b16 %v2675
  %v2910 = vpack.c.b16 %v2790, %v2782
  %v2911 = vpack.c.b16 %v2791, %v2783
  %v2912 = vpack.c.b16 %v2792, %v2784
  %v2913 = vpack.c.b16 %v2793, %v2785
  %v2914 = vpack.c.b16 %v2794, %v2786
  %v2915 = vpack.c.b16 %v2795, %v2787
  %v2916 = vpack.c.b16 %v2796, %v2788
  %v2917 = vpack.c.b16 %v2797, %v2789
  %v2918 = vpack.c.b16 %v2806, %v2798
  %v2919 = vpack.c.b16 %v2807, %v2799
  %v2920 = vpack.c.b16 %v2808, %v2800
  %v2921 = vpack.c.b16 %v2809, %v2801
  %v2922 = vpack.c.b16 %v2810, %v2802
  %v2923 = vpack.c.b16 %v2811, %v2803
  %v2924 = vpack.c.b16 %v2812, %v2804
  %v2925 = vpack.c.b16 %v2813, %v2805
  %v2926 = vpack.c.b16 %v2822, %v2814
  %v2927 = vpack.c.b16 %v2823, %v2815
  %v2928 = vpack.c.b16 %v2824, %v2816
  %v2929 = vpack.c.b16 %v2825, %v2817
  %v2930 = vpack.c.b16 %v2826, %v2818
  %v2931 = vpack.c.b16 %v2827, %v2819
  %v2932 = vpack.c.b16 %v2828, %v2820
  %v2933 = vpack.c.b16 %v2829, %v2821
  %v2934 = vpack.c.b16 %v2838, %v2830
  %v2935 = vpack.c.b16 %v2839, %v2831
  %v2936 = vpack.c.b16 %v2840, %v2832
  %v2937 = vpack.c.b16 %v2841, %v2833
  %v2938 = vpack.c.b16 %v2842, %v2834
  %v2939 = vpack.c.b16 %v2843, %v2835
  %v2940 = vpack.c.b16 %v2844, %v2836
  %v2941 = vpack.c.b16 %v2845, %v2837
  %v2942 = vpack.c.b16 %v2854, %v2846
  %v2943 = vpack.c.b16 %v2855, %v2847
  %v2944 = vpack.c.b16 %v2856, %v2848
  %v2945 = vpack.c.b16 %v2857, %v2849
  %v2946 = vpack.c.b16 %v2858, %v2850
  %v2947 = vpack.c.b16 %v2859, %v2851
  %v2948 = vpack.c.b16 %v2860, %v2852
  %v2949 = vpack.c.b16 %v2861, %v2853
  %v2950 = vpack.c.b16 %v2870, %v2862
  %v2951 = vpack.c.b16 %v2871, %v2863
  %v2952 = vpack.c.b16 %v2872, %v2864
  %v2953 = vpack.c.b16 %v2873, %v2865
  %v2954 = vpack.c.b16 %v2874, %v2866
  %v2955 = vpack.c.b16 %v2875, %v2867
  %v2956 = vpack.c.b16 %v2876, %v2868
  %v2957 = vpack.c.b16 %v2877, %v2869
  %v2958 = vpack.c.b16 %v2886, %v2878
  %v2959 = vpack.c.b16 %v2887, %v2879
  %v2960 = vpack.c.b16 %v2888, %v2880
  %v2961 = vpack.c.b16 %v2889, %v2881
  %v2962 = vpack.c.b16 %v2890, %v2882
  %v2963 = vpack.c.b16 %v2891, %v2883
  %v2964 = vpack.c.b16 %v2892, %v2884
  %v2965 = vpack.c.b16 %v2893, %v2885
  %v2966 = vpack.c.b16 %v2902, %v2894
  %v2967 = vpack.c.b16 %v2903, %v2895
  %v2968 = vpack.c.b16 %v2904, %v2896
  %v2969 = vpack.c.b16 %v2905, %v2897
  %v2970 = vpack.c.b16 %v2906, %v2898
  %v2971 = vpack.c.b16 %v2907, %v2899
  %v2972 = vpack.c.b16 %v2908, %v2900
  %v2973 = vpack.c.b16 %v2909, %v2901
  %3038 = vmatprep.subr.bf16.mxu0 %v2967
  %3039 = vmatpush1.bf16.msra.mxu0 %v2966
  %3040 = vmatprep.subr.bf16.mxu0 %v2959
  %3041 = vmatpush1.bf16.msra.mxu0 %v2958
  %3042 = vmatprep.subr.bf16.mxu0 %v2951
  %3043 = vmatpush1.bf16.msra.mxu0 %v2950
  %3044 = vmatprep.subr.bf16.mxu0 %v2943
  %3045 = vmatpush1.bf16.msra.mxu0 %v2942
  %3046 = vmatprep.subr.bf16.mxu0 %v2935
  %3047 = vmatpush1.bf16.msra.mxu0 %v2934
  %3048 = vmatprep.subr.bf16.mxu0 %v2927
  %3049 = vmatpush1.bf16.msra.mxu0 %v2926
  %3050 = vmatprep.subr.bf16.mxu0 %v2919
  %3051 = vmatpush1.bf16.msra.mxu0 %v2918
  %3052 = vmatprep.subr.bf16.mxu0 %v2911
  %3053 = vmatpush1.bf16.msra.mxu0 %v2910
  %3054 = vmatprep.subr.bf16.mxu0 0
  %3055 = vmatpush2.bf16.msra.mxu0 0
  %3056 = vmatprep.subr.bf16.mxu0 0
  %3057 = vmatpush2.bf16.msra.mxu0 0
  %3058 = vmatprep.subr.bf16.mxu0 0
  %3059 = vmatpush2.bf16.msra.mxu0 0
  %3060 = vmatprep.subr.bf16.mxu0 0
  %3061 = vmatpush2.bf16.msra.mxu0 0
  %3062 = vmatprep.subr.bf16.mxu0 0
  %3063 = vmatpush2.bf16.msra.mxu0 0
  %3064 = vmatprep.subr.bf16.mxu0 0
  %3065 = vmatpush2.bf16.msra.mxu0 0
  %3066 = vmatprep.subr.bf16.mxu0 0
  %3067 = vmatpush2.bf16.msra.mxu0 0
  %3068 = vmatprep.subr.bf16.mxu0 0
  %3069 = vmatpush2.bf16.msra.mxu0 0
  %3070 = vmatprep.mubr.bf16.mxu0 0
  %3071 = vmatmul.mubr.bf16.gmra.mxu0 %v2610
  %v3072 = vpop.f32.mrf.mxu0
  %v3073 = vadd.f32 %v2681, %v3072
  %v3074 = vpop.f32.mrf.mxu0
  %v3075 = vadd.f32 %v2685, %v3074
  %v3076 = vpop.f32.mrf.mxu0
  %v3077 = vadd.f32 %v2681, %v3076
  %v3078 = vpop.f32.mrf.mxu0
  %v3079 = vadd.f32 %v2685, %v3078
  %3080 = vmatprep.mubr.bf16.mxu0 0
  %3081 = vmatmul.mubr.bf16.gmra.mxu0 %v2611
  %v3082 = vpop.f32.mrf.mxu0
  %v3083 = vadd.f32 %v2681, %v3082
  %v3084 = vpop.f32.mrf.mxu0
  %v3085 = vadd.f32 %v2685, %v3084
  %v3086 = vpop.f32.mrf.mxu0
  %v3087 = vpop.f32.mrf.mxu0
  %3088 = vdwg.mxu0
  %3089 = vmatprep.subr.bf16.mxu0 %v2969
  %3090 = vmatpush1.bf16.msra.mxu0 %v2968
  %3091 = vmatprep.subr.bf16.mxu0 %v2961
  %3092 = vmatpush1.bf16.msra.mxu0 %v2960
  %3093 = vmatprep.subr.bf16.mxu0 %v2953
  %3094 = vmatpush1.bf16.msra.mxu0 %v2952
  %3095 = vmatprep.subr.bf16.mxu0 %v2945
  %3096 = vmatpush1.bf16.msra.mxu0 %v2944
  %3097 = vmatprep.subr.bf16.mxu0 %v2937
  %3098 = vmatpush1.bf16.msra.mxu0 %v2936
  %3099 = vmatprep.subr.bf16.mxu0 %v2929
  %3100 = vmatpush1.bf16.msra.mxu0 %v2928
  %3101 = vmatprep.subr.bf16.mxu0 %v2921
  %3102 = vmatpush1.bf16.msra.mxu0 %v2920
  %3103 = vmatprep.subr.bf16.mxu0 %v2913
  %3104 = vmatpush1.bf16.msra.mxu0 %v2912
  %3105 = vmatprep.subr.bf16.mxu0 0
  %3106 = vmatpush2.bf16.msra.mxu0 0
  %3107 = vmatprep.subr.bf16.mxu0 0
  %3108 = vmatpush2.bf16.msra.mxu0 0
  %3109 = vmatprep.subr.bf16.mxu0 0
  %3110 = vmatpush2.bf16.msra.mxu0 0
  %3111 = vmatprep.subr.bf16.mxu0 0
  %3112 = vmatpush2.bf16.msra.mxu0 0
  %3113 = vmatprep.subr.bf16.mxu0 0
  %3114 = vmatpush2.bf16.msra.mxu0 0
  %3115 = vmatprep.subr.bf16.mxu0 0
  %3116 = vmatpush2.bf16.msra.mxu0 0
  %3117 = vmatprep.subr.bf16.mxu0 0
  %3118 = vmatpush2.bf16.msra.mxu0 0
  %3119 = vmatprep.subr.bf16.mxu0 0
  %3120 = vmatpush2.bf16.msra.mxu0 0
  %3121 = vmatprep.mubr.bf16.mxu0 0
  %3122 = vmatmul.mubr.bf16.gmra.mxu0 %v2610
  %v3123 = vpop.f32.mrf.mxu0
  %v3124 = vadd.f32 %v2689, %v3123
  %v3125 = vpop.f32.mrf.mxu0
  %v3126 = vadd.f32 %v2693, %v3125
  %v3127 = vpop.f32.mrf.mxu0
  %v3128 = vadd.f32 %v2689, %v3127
  %v3129 = vpop.f32.mrf.mxu0
  %v3130 = vadd.f32 %v2693, %v3129
  %3131 = vmatprep.mubr.bf16.mxu0 0
  %3132 = vmatmul.mubr.bf16.gmra.mxu0 %v2611
  %v3133 = vpop.f32.mrf.mxu0
  %v3134 = vadd.f32 %v2689, %v3133
  %v3135 = vpop.f32.mrf.mxu0
  %v3136 = vadd.f32 %v2693, %v3135
  %v3137 = vpop.f32.mrf.mxu0
  %v3138 = vpop.f32.mrf.mxu0
  %3139 = vdwg.mxu0
  %3140 = vmatprep.subr.bf16.mxu0 %v2971
  %3141 = vmatpush1.bf16.msra.mxu0 %v2970
  %3142 = vmatprep.subr.bf16.mxu0 %v2963
  %3143 = vmatpush1.bf16.msra.mxu0 %v2962
  %3144 = vmatprep.subr.bf16.mxu0 %v2955
  %3145 = vmatpush1.bf16.msra.mxu0 %v2954
  %3146 = vmatprep.subr.bf16.mxu0 %v2947
  %3147 = vmatpush1.bf16.msra.mxu0 %v2946
  %3148 = vmatprep.subr.bf16.mxu0 %v2939
  %3149 = vmatpush1.bf16.msra.mxu0 %v2938
  %3150 = vmatprep.subr.bf16.mxu0 %v2931
  %3151 = vmatpush1.bf16.msra.mxu0 %v2930
  %3152 = vmatprep.subr.bf16.mxu0 %v2923
  %3153 = vmatpush1.bf16.msra.mxu0 %v2922
  %3154 = vmatprep.subr.bf16.mxu0 %v2915
  %3155 = vmatpush1.bf16.msra.mxu0 %v2914
  %3156 = vmatprep.subr.bf16.mxu0 0
  %3157 = vmatpush2.bf16.msra.mxu0 0
  %3158 = vmatprep.subr.bf16.mxu0 0
  %3159 = vmatpush2.bf16.msra.mxu0 0
  %3160 = vmatprep.subr.bf16.mxu0 0
  %3161 = vmatpush2.bf16.msra.mxu0 0
  %3162 = vmatprep.subr.bf16.mxu0 0
  %3163 = vmatpush2.bf16.msra.mxu0 0
  %3164 = vmatprep.subr.bf16.mxu0 0
  %3165 = vmatpush2.bf16.msra.mxu0 0
  %3166 = vmatprep.subr.bf16.mxu0 0
  %3167 = vmatpush2.bf16.msra.mxu0 0
  %3168 = vmatprep.subr.bf16.mxu0 0
  %3169 = vmatpush2.bf16.msra.mxu0 0
  %3170 = vmatprep.subr.bf16.mxu0 0
  %3171 = vmatpush2.bf16.msra.mxu0 0
  %3172 = vmatprep.mubr.bf16.mxu0 0
  %3173 = vmatmul.mubr.bf16.gmra.mxu0 %v2610
  %v3174 = vpop.f32.mrf.mxu0
  %v3175 = vadd.f32 %v2697, %v3174
  %v3176 = vpop.f32.mrf.mxu0
  %v3177 = vadd.f32 %v2701, %v3176
  %v3178 = vpop.f32.mrf.mxu0
  %v3179 = vadd.f32 %v2697, %v3178
  %v3180 = vpop.f32.mrf.mxu0
  %v3181 = vadd.f32 %v2701, %v3180
  %3182 = vmatprep.mubr.bf16.mxu0 0
  %3183 = vmatmul.mubr.bf16.gmra.mxu0 %v2611
  %v3184 = vpop.f32.mrf.mxu0
  %v3185 = vadd.f32 %v2697, %v3184
  %v3186 = vpop.f32.mrf.mxu0
  %v3187 = vadd.f32 %v2701, %v3186
  %v3188 = vpop.f32.mrf.mxu0
  %v3189 = vpop.f32.mrf.mxu0
  %3190 = vdwg.mxu0
  %3191 = vmatprep.subr.bf16.mxu0 %v2973
  %3192 = vmatpush1.bf16.msra.mxu0 %v2972
  %3193 = vmatprep.subr.bf16.mxu0 %v2965
  %3194 = vmatpush1.bf16.msra.mxu0 %v2964
  %3195 = vmatprep.subr.bf16.mxu0 %v2957
  %3196 = vmatpush1.bf16.msra.mxu0 %v2956
  %3197 = vmatprep.subr.bf16.mxu0 %v2949
  %3198 = vmatpush1.bf16.msra.mxu0 %v2948
  %3199 = vmatprep.subr.bf16.mxu0 %v2941
  %3200 = vmatpush1.bf16.msra.mxu0 %v2940
  %3201 = vmatprep.subr.bf16.mxu0 %v2933
  %3202 = vmatpush1.bf16.msra.mxu0 %v2932
  %3203 = vmatprep.subr.bf16.mxu0 %v2925
  %3204 = vmatpush1.bf16.msra.mxu0 %v2924
  %3205 = vmatprep.subr.bf16.mxu0 %v2917
  %3206 = vmatpush1.bf16.msra.mxu0 %v2916
  %3207 = vmatprep.subr.bf16.mxu0 0
  %3208 = vmatpush2.bf16.msra.mxu0 0
  %3209 = vmatprep.subr.bf16.mxu0 0
  %3210 = vmatpush2.bf16.msra.mxu0 0
  %3211 = vmatprep.subr.bf16.mxu0 0
  %3212 = vmatpush2.bf16.msra.mxu0 0
  %3213 = vmatprep.subr.bf16.mxu0 0
  %3214 = vmatpush2.bf16.msra.mxu0 0
  %3215 = vmatprep.subr.bf16.mxu0 0
  %3216 = vmatpush2.bf16.msra.mxu0 0
  %3217 = vmatprep.subr.bf16.mxu0 0
  %3218 = vmatpush2.bf16.msra.mxu0 0
  %3219 = vmatprep.subr.bf16.mxu0 0
  %3220 = vmatpush2.bf16.msra.mxu0 0
  %3221 = vmatprep.subr.bf16.mxu0 0
  %3222 = vmatpush2.bf16.msra.mxu0 0
  %3223 = vmatprep.mubr.bf16.mxu0 0
  %3224 = vmatmul.mubr.bf16.gmra.mxu0 %v2610
  %v3225 = vpop.f32.mrf.mxu0
  %v3226 = vadd.f32 %v2705, %v3225
  %v3227 = vpop.f32.mrf.mxu0
  %v3228 = vadd.f32 %v2709, %v3227
  %v3229 = vpop.f32.mrf.mxu0
  %v3230 = vadd.f32 %v2705, %v3229
  %v3231 = vpop.f32.mrf.mxu0
  %v3232 = vadd.f32 %v2709, %v3231
  %3233 = vmatprep.mubr.bf16.mxu0 0
  %3234 = vmatmul.mubr.bf16.gmra.mxu0 %v2611
  %v3235 = vpop.f32.mrf.mxu0
  %v3236 = vadd.f32 %v2705, %v3235
  %v3237 = vpop.f32.mrf.mxu0
  %v3238 = vadd.f32 %v2709, %v3237
  %v3239 = vpop.f32.mrf.mxu0
  %v3240 = vpop.f32.mrf.mxu0
  %3241 = vdwg.mxu0
  %3242 = vst [vmem:[#allocation2] sm:$0xff] %v3073
  %3243 = vst [vmem:[#allocation2 + $0x8] sm:$0xff] %v3075
  %3244 = vst [vmem:[#allocation2 + $0x10] sm:$0xff] %v3124
  %3245 = vst [vmem:[#allocation2 + $0x18] sm:$0xff] %v3126
  %3246 = vst [vmem:[#allocation2 + $0x20] sm:$0xff] %v3175
  %3247 = vst [vmem:[#allocation2 + $0x28] sm:$0xff] %v3177
  %3248 = vst [vmem:[#allocation2 + $0x30] sm:$0xff] %v3226
  %3249 = vst [vmem:[#allocation2 + $0x38] sm:$0xff] %v3228
  %3250 = vst [vmem:[#allocation2 + $0x40] sm:$0xff] %v3077
  %3251 = vst [vmem:[#allocation2 + $0x48] sm:$0xff] %v3079
  %3252 = vst [vmem:[#allocation2 + $0x50] sm:$0xff] %v3128
  %3253 = vst [vmem:[#allocation2 + $0x58] sm:$0xff] %v3130
  %3254 = vst [vmem:[#allocation2 + $0x60] sm:$0xff] %v3179
  %3255 = vst [vmem:[#allocation2 + $0x68] sm:$0xff] %v3181
  %3256 = vst [vmem:[#allocation2 + $0x70] sm:$0xff] %v3230
  %3257 = vst [vmem:[#allocation2 + $0x78] sm:$0xff] %v3232
  %3258 = vst [vmem:[#allocation2 + $0x80] sm:$0xff] %v3083
  %3259 = vst [vmem:[#allocation2 + $0x88] sm:$0xff] %v3085
  %3260 = vst [vmem:[#allocation2 + $0x90] sm:$0xff] %v3134
  %3261 = vst [vmem:[#allocation2 + $0x98] sm:$0xff] %v3136
  %3262 = vst [vmem:[#allocation2 + $0xa0] sm:$0xff] %v3185
  %3263 = vst [vmem:[#allocation2 + $0xa8] sm:$0xff] %v3187
  %3264 = vst [vmem:[#allocation2 + $0xb0] sm:$0xff] %v3236
  %3265 = vst [vmem:[#allocation2 + $0xb8] sm:$0xff] %v3238
  %v3266 = vld [vmem:[%s13] sm:$0xff]
  %v3267 = vld [vmem:[%s13 + $0x8] sm:$0xff]
  %v3268 = vld [vmem:[%s13 + $0x10] sm:$0xff]
  %v3269 = vld [vmem:[%s13 + $0x18] sm:$0xff]
  %v3270 = vld [vmem:[%s13 + $0x20] sm:$0xff]
  %v3271 = vld [vmem:[%s13 + $0x28] sm:$0xff]
  %v3272 = vld [vmem:[%s13 + $0x30] sm:$0xff]
  %v3273 = vld [vmem:[%s13 + $0x38] sm:$0xff]
  %v3274 = vld [vmem:[%s13 + $0x40] sm:$0xff]
  %v3275 = vld [vmem:[%s13 + $0x48] sm:$0xff]
  %v3276 = vld [vmem:[%s13 + $0x50] sm:$0xff]
  %v3277 = vld [vmem:[%s13 + $0x58] sm:$0xff]
  %v3278 = vld [vmem:[%s13 + $0x60] sm:$0xff]
  %v3279 = vld [vmem:[%s13 + $0x68] sm:$0xff]
  %v3280 = vld [vmem:[%s13 + $0x70] sm:$0xff]
  %v3281 = vld [vmem:[%s13 + $0x78] sm:$0xff]
  %v3282 = vld [vmem:[%s13 + $0x80] sm:$0xff]
  %v3283 = vld [vmem:[%s13 + $0x88] sm:$0xff]
  %v3284 = vld [vmem:[%s13 + $0x90] sm:$0xff]
  %v3285 = vld [vmem:[%s13 + $0x98] sm:$0xff]
  %v3286 = vld [vmem:[%s13 + $0xa0] sm:$0xff]
  %v3287 = vld [vmem:[%s13 + $0xa8] sm:$0xff]
  %v3288 = vld [vmem:[%s13 + $0xb0] sm:$0xff]
  %v3289 = vld [vmem:[%s13 + $0xb8] sm:$0xff]
  %v3290 = vld [vmem:[%s13 + $0xc0] sm:$0xff]
  %v3291 = vld [vmem:[%s13 + $0xc8] sm:$0xff]
  %v3292 = vld [vmem:[%s13 + $0xd0] sm:$0xff]
  %v3293 = vld [vmem:[%s13 + $0xd8] sm:$0xff]
  %v3294 = vld [vmem:[%s13 + $0xe0] sm:$0xff]
  %v3295 = vld [vmem:[%s13 + $0xe8] sm:$0xff]
  %v3296 = vld [vmem:[%s13 + $0xf0] sm:$0xff]
  %v3297 = vld [vmem:[%s13 + $0xf8] sm:$0xff]
  %v3298 = vld [vmem:[%s13 + $0x100] sm:$0xff]
  %v3299 = vld [vmem:[%s13 + $0x108] sm:$0xff]
  %v3300 = vld [vmem:[%s13 + $0x110] sm:$0xff]
  %v3301 = vld [vmem:[%s13 + $0x118] sm:$0xff]
  %v3302 = vld [vmem:[%s13 + $0x120] sm:$0xff]
  %v3303 = vld [vmem:[%s13 + $0x128] sm:$0xff]
  %v3304 = vld [vmem:[%s13 + $0x130] sm:$0xff]
  %v3305 = vld [vmem:[%s13 + $0x138] sm:$0xff]
  %v3306 = vld [vmem:[%s13 + $0x140] sm:$0xff]
  %v3307 = vld [vmem:[%s13 + $0x148] sm:$0xff]
  %v3308 = vld [vmem:[%s13 + $0x150] sm:$0xff]
  %v3309 = vld [vmem:[%s13 + $0x158] sm:$0xff]
  %v3310 = vld [vmem:[%s13 + $0x160] sm:$0xff]
  %v3311 = vld [vmem:[%s13 + $0x168] sm:$0xff]
  %v3312 = vld [vmem:[%s13 + $0x170] sm:$0xff]
  %v3313 = vld [vmem:[%s13 + $0x178] sm:$0xff]
  %v3314 = vld [vmem:[%s13 + $0x180] sm:$0xff]
  %v3315 = vld [vmem:[%s13 + $0x188] sm:$0xff]
  %v3316 = vld [vmem:[%s13 + $0x190] sm:$0xff]
  %v3317 = vld [vmem:[%s13 + $0x198] sm:$0xff]
  %v3318 = vld [vmem:[%s13 + $0x1a0] sm:$0xff]
  %v3319 = vld [vmem:[%s13 + $0x1a8] sm:$0xff]
  %v3320 = vld [vmem:[%s13 + $0x1b0] sm:$0xff]
  %v3321 = vld [vmem:[%s13 + $0x1b8] sm:$0xff]
  %v3322 = vld [vmem:[%s13 + $0x1c0] sm:$0xff]
  %v3323 = vld [vmem:[%s13 + $0x1c8] sm:$0xff]
  %v3324 = vld [vmem:[%s13 + $0x1d0] sm:$0xff]
  %v3325 = vld [vmem:[%s13 + $0x1d8] sm:$0xff]
  %v3326 = vld [vmem:[%s13 + $0x1e0] sm:$0xff]
  %v3327 = vld [vmem:[%s13 + $0x1e8] sm:$0xff]
  %v3328 = vld [vmem:[%s13 + $0x1f0] sm:$0xff]
  %v3329 = vld [vmem:[%s13 + $0x1f8] sm:$0xff]
  %v3330 = vld [vmem:[%s13 + $0x200] sm:$0xff]
  %v3331 = vld [vmem:[%s13 + $0x208] sm:$0xff]
  %v3332 = vld [vmem:[%s13 + $0x210] sm:$0xff]
  %v3333 = vld [vmem:[%s13 + $0x218] sm:$0xff]
  %v3334 = vld [vmem:[%s13 + $0x220] sm:$0xff]
  %v3335 = vld [vmem:[%s13 + $0x228] sm:$0xff]
  %v3336 = vld [vmem:[%s13 + $0x230] sm:$0xff]
  %v3337 = vld [vmem:[%s13 + $0x238] sm:$0xff]
  %v3338 = vld [vmem:[%s13 + $0x240] sm:$0xff]
  %v3339 = vld [vmem:[%s13 + $0x248] sm:$0xff]
  %v3340 = vld [vmem:[%s13 + $0x250] sm:$0xff]
  %v3341 = vld [vmem:[%s13 + $0x258] sm:$0xff]
  %v3342 = vld [vmem:[%s13 + $0x260] sm:$0xff]
  %v3343 = vld [vmem:[%s13 + $0x268] sm:$0xff]
  %v3344 = vld [vmem:[%s13 + $0x270] sm:$0xff]
  %v3345 = vld [vmem:[%s13 + $0x278] sm:$0xff]
  %v3346 = vld [vmem:[%s13 + $0x280] sm:$0xff]
  %v3347 = vld [vmem:[%s13 + $0x288] sm:$0xff]
  %v3348 = vld [vmem:[%s13 + $0x290] sm:$0xff]
  %v3349 = vld [vmem:[%s13 + $0x298] sm:$0xff]
  %v3350 = vld [vmem:[%s13 + $0x2a0] sm:$0xff]
  %v3351 = vld [vmem:[%s13 + $0x2a8] sm:$0xff]
  %v3352 = vld [vmem:[%s13 + $0x2b0] sm:$0xff]
  %v3353 = vld [vmem:[%s13 + $0x2b8] sm:$0xff]
  %v3354 = vld [vmem:[%s13 + $0x2c0] sm:$0xff]
  %v3355 = vld [vmem:[%s13 + $0x2c8] sm:$0xff]
  %v3356 = vld [vmem:[%s13 + $0x2d0] sm:$0xff]
  %v3357 = vld [vmem:[%s13 + $0x2d8] sm:$0xff]
  %v3358 = vld [vmem:[%s13 + $0x2e0] sm:$0xff]
  %v3359 = vld [vmem:[%s13 + $0x2e8] sm:$0xff]
  %v3360 = vld [vmem:[%s13 + $0x2f0] sm:$0xff]
  %v3361 = vld [vmem:[%s13 + $0x2f8] sm:$0xff]
  %v3362 = vld [vmem:[%s13 + $0x300] sm:$0xff]
  %v3363 = vld [vmem:[%s13 + $0x308] sm:$0xff]
  %v3364 = vld [vmem:[%s13 + $0x310] sm:$0xff]
  %v3365 = vld [vmem:[%s13 + $0x318] sm:$0xff]
  %v3366 = vld [vmem:[%s13 + $0x320] sm:$0xff]
  %v3367 = vld [vmem:[%s13 + $0x328] sm:$0xff]
  %v3368 = vld [vmem:[%s13 + $0x330] sm:$0xff]
  %v3369 = vld [vmem:[%s13 + $0x338] sm:$0xff]
  %v3370 = vld [vmem:[%s13 + $0x340] sm:$0xff]
  %v3371 = vld [vmem:[%s13 + $0x348] sm:$0xff]
  %v3372 = vld [vmem:[%s13 + $0x350] sm:$0xff]
  %v3373 = vld [vmem:[%s13 + $0x358] sm:$0xff]
  %v3374 = vld [vmem:[%s13 + $0x360] sm:$0xff]
  %v3375 = vld [vmem:[%s13 + $0x368] sm:$0xff]
  %v3376 = vld [vmem:[%s13 + $0x370] sm:$0xff]
  %v3377 = vld [vmem:[%s13 + $0x378] sm:$0xff]
  %v3378 = vld [vmem:[%s13 + $0x380] sm:$0xff]
  %v3379 = vld [vmem:[%s13 + $0x388] sm:$0xff]
  %v3380 = vld [vmem:[%s13 + $0x390] sm:$0xff]
  %v3381 = vld [vmem:[%s13 + $0x398] sm:$0xff]
  %v3382 = vld [vmem:[%s13 + $0x3a0] sm:$0xff]
  %v3383 = vld [vmem:[%s13 + $0x3a8] sm:$0xff]
  %v3384 = vld [vmem:[%s13 + $0x3b0] sm:$0xff]
  %v3385 = vld [vmem:[%s13 + $0x3b8] sm:$0xff]
  %v3386 = vld [vmem:[%s13 + $0x3c0] sm:$0xff]
  %v3387 = vld [vmem:[%s13 + $0x3c8] sm:$0xff]
  %v3388 = vld [vmem:[%s13 + $0x3d0] sm:$0xff]
  %v3389 = vld [vmem:[%s13 + $0x3d8] sm:$0xff]
  %v3390 = vld [vmem:[%s13 + $0x3e0] sm:$0xff]
  %v3391 = vld [vmem:[%s13 + $0x3e8] sm:$0xff]
  %v3392 = vld [vmem:[%s13 + $0x3f0] sm:$0xff]
  %v3393 = vld [vmem:[%s13 + $0x3f8] sm:$0xff]
  %v3394 = vld [vmem:[#allocation2] sm:$0xff]
  %v3395 = vld [vmem:[#allocation2 + $0x8] sm:$0xff]
  %v3396 = vld [vmem:[#allocation2 + $0x20] sm:$0xff]
  %v3397 = vld [vmem:[#allocation2 + $0x28] sm:$0xff]
  %v3398 = vld [vmem:[#allocation2 + $0x30] sm:$0xff]
  %v3399 = vld [vmem:[#allocation2 + $0x38] sm:$0xff]
  %v3400 = vxor.u32 %v3394, 2147483648
  %v3401 = vxor.u32 %v3395, 2147483648
  %v3402 = vmul.f32 %v3400, 1.442695
  %v3403 = vpow.pop %v3402
  %v3404 = vmul.f32 %v3401, 1.442695
  %v3405 = vpow.pop %v3404
  %v3406 = vadd.f32 %v3403, 1.0
  %v3407 = vadd.f32 %v3405, 1.0
  %v3408 = vrcp.pop %v3406
  %v3409 = vmul.f32 1.0, %v3408
  %v3410 = vrcp.pop %v3407
  %v3411 = vmul.f32 1.0, %v3410
  %v3412 = vtanh.pop %v3396
  %v3413 = vtanh.pop %v3397
  %v3414 = vxor.u32 %v3398, 2147483648
  %v3415 = vxor.u32 %v3399, 2147483648
  %v3416 = vmul.f32 %v3414, 1.442695
  %v3417 = vpow.pop %v3416
  %v3418 = vmul.f32 %v3415, 1.442695
  %v3419 = vpow.pop %v3418
  %v3420 = vadd.f32 %v3417, 1.0
  %v3421 = vadd.f32 %v3419, 1.0
  %v3422 = vrcp.pop %v3420
  %v3423 = vmul.f32 1.0, %v3422
  %v3424 = vrcp.pop %v3421
  %v3425 = vmul.f32 1.0, %v3424
  %v3426 = vmul.f32 %v3409, %v3412
  %v3427 = vmul.f32 %v3411, %v3413
  %3428 = vst [vmem:[#allocation4] sm:$0xff] %v3426
  %3429 = vst [vmem:[#allocation4 + $0x8] sm:$0xff] %v3427
  %v3430 = vtanh.pop %v3426
  %v3431 = vtanh.pop %v3427
  %v3432 = vmul.f32 %v3423, %v3430
  %v3433 = vmul.f32 %v3425, %v3431
  %3434 = vst [vmem:[#allocation3] sm:$0xff] %v3432
  %3435 = vst [vmem:[#allocation3 + $0x8] sm:$0xff] %v3433
  %v3436 = vld [vmem:[#allocation2 + $0x40] sm:$0xff]
  %v3437 = vld [vmem:[#allocation2 + $0x48] sm:$0xff]
  %v3438 = vld [vmem:[#allocation2 + $0x50] sm:$0xff]
  %v3439 = vld [vmem:[#allocation2 + $0x58] sm:$0xff]
  %v3440 = vld [vmem:[#allocation2 + $0x60] sm:$0xff]
  %v3441 = vld [vmem:[#allocation2 + $0x68] sm:$0xff]
  %v3442 = vld [vmem:[#allocation2 + $0x70] sm:$0xff]
  %v3443 = vld [vmem:[#allocation2 + $0x78] sm:$0xff]
  %v3444 = vld [vmem:[#allocation3] sm:$0xff]
  %v3445 = vld [vmem:[#allocation3 + $0x8] sm:$0xff]
  %v3446 = vpack.c.bf16 %v3444, %v3444
  %v3447 = vpack.c.bf16 %v3445, %v3445
  %v3576 = vunpack.c.l.b16 %v3266
  %v3577 = vunpack.c.h.b16 %v3266
  %v3578 = vunpack.c.l.b16 %v3267
  %v3579 = vunpack.c.h.b16 %v3267
  %v3580 = vunpack.c.l.b16 %v3268
  %v3581 = vunpack.c.h.b16 %v3268
  %v3582 = vunpack.c.l.b16 %v3269
  %v3583 = vunpack.c.h.b16 %v3269
  %v3584 = vunpack.c.l.b16 %v3270
  %v3585 = vunpack.c.h.b16 %v3270
  %v3586 = vunpack.c.l.b16 %v3271
  %v3587 = vunpack.c.h.b16 %v3271
  %v3588 = vunpack.c.l.b16 %v3272
  %v3589 = vunpack.c.h.b16 %v3272
  %v3590 = vunpack.c.l.b16 %v3273
  %v3591 = vunpack.c.h.b16 %v3273
  %v3592 = vunpack.c.l.b16 %v3274
  %v3593 = vunpack.c.h.b16 %v3274
  %v3594 = vunpack.c.l.b16 %v3275
  %v3595 = vunpack.c.h.b16 %v3275
  %v3596 = vunpack.c.l.b16 %v3276
  %v3597 = vunpack.c.h.b16 %v3276
  %v3598 = vunpack.c.l.b16 %v3277
  %v3599 = vunpack.c.h.b16 %v3277
  %v3600 = vunpack.c.l.b16 %v3278
  %v3601 = vunpack.c.h.b16 %v3278
  %v3602 = vunpack.c.l.b16 %v3279
  %v3603 = vunpack.c.h.b16 %v3279
  %v3604 = vunpack.c.l.b16 %v3280
  %v3605 = vunpack.c.h.b16 %v3280
  %v3606 = vunpack.c.l.b16 %v3281
  %v3607 = vunpack.c.h.b16 %v3281
  %v3608 = vunpack.c.l.b16 %v3282
  %v3609 = vunpack.c.h.b16 %v3282
  %v3610 = vunpack.c.l.b16 %v3283
  %v3611 = vunpack.c.h.b16 %v3283
  %v3612 = vunpack.c.l.b16 %v3284
  %v3613 = vunpack.c.h.b16 %v3284
  %v3614 = vunpack.c.l.b16 %v3285
  %v3615 = vunpack.c.h.b16 %v3285
  %v3616 = vunpack.c.l.b16 %v3286
  %v3617 = vunpack.c.h.b16 %v3286
  %v3618 = vunpack.c.l.b16 %v3287
  %v3619 = vunpack.c.h.b16 %v3287
  %v3620 = vunpack.c.l.b16 %v3288
  %v3621 = vunpack.c.h.b16 %v3288
  %v3622 = vunpack.c.l.b16 %v3289
  %v3623 = vunpack.c.h.b16 %v3289
  %v3624 = vunpack.c.l.b16 %v3290
  %v3625 = vunpack.c.h.b16 %v3290
  %v3626 = vunpack.c.l.b16 %v3291
  %v3627 = vunpack.c.h.b16 %v3291
  %v3628 = vunpack.c.l.b16 %v3292
  %v3629 = vunpack.c.h.b16 %v3292
  %v3630 = vunpack.c.l.b16 %v3293
  %v3631 = vunpack.c.h.b16 %v3293
  %v3632 = vunpack.c.l.b16 %v3294
  %v3633 = vunpack.c.h.b16 %v3294
  %v3634 = vunpack.c.l.b16 %v3295
  %v3635 = vunpack.c.h.b16 %v3295
  %v3636 = vunpack.c.l.b16 %v3296
  %v3637 = vunpack.c.h.b16 %v3296
  %v3638 = vunpack.c.l.b16 %v3297
  %v3639 = vunpack.c.h.b16 %v3297
  %v3640 = vunpack.c.l.b16 %v3298
  %v3641 = vunpack.c.h.b16 %v3298
  %v3642 = vunpack.c.l.b16 %v3299
  %v3643 = vunpack.c.h.b16 %v3299
  %v3644 = vunpack.c.l.b16 %v3300
  %v3645 = vunpack.c.h.b16 %v3300
  %v3646 = vunpack.c.l.b16 %v3301
  %v3647 = vunpack.c.h.b16 %v3301
  %v3648 = vunpack.c.l.b16 %v3302
  %v3649 = vunpack.c.h.b16 %v3302
  %v3650 = vunpack.c.l.b16 %v3303
  %v3651 = vunpack.c.h.b16 %v3303
  %v3652 = vunpack.c.l.b16 %v3304
  %v3653 = vunpack.c.h.b16 %v3304
  %v3654 = vunpack.c.l.b16 %v3305
  %v3655 = vunpack.c.h.b16 %v3305
  %v3656 = vunpack.c.l.b16 %v3306
  %v3657 = vunpack.c.h.b16 %v3306
  %v3658 = vunpack.c.l.b16 %v3307
  %v3659 = vunpack.c.h.b16 %v3307
  %v3660 = vunpack.c.l.b16 %v3308
  %v3661 = vunpack.c.h.b16 %v3308
  %v3662 = vunpack.c.l.b16 %v3309
  %v3663 = vunpack.c.h.b16 %v3309
  %v3664 = vunpack.c.l.b16 %v3310
  %v3665 = vunpack.c.h.b16 %v3310
  %v3666 = vunpack.c.l.b16 %v3311
  %v3667 = vunpack.c.h.b16 %v3311
  %v3668 = vunpack.c.l.b16 %v3312
  %v3669 = vunpack.c.h.b16 %v3312
  %v3670 = vunpack.c.l.b16 %v3313
  %v3671 = vunpack.c.h.b16 %v3313
  %v3672 = vunpack.c.l.b16 %v3314
  %v3673 = vunpack.c.h.b16 %v3314
  %v3674 = vunpack.c.l.b16 %v3315
  %v3675 = vunpack.c.h.b16 %v3315
  %v3676 = vunpack.c.l.b16 %v3316
  %v3677 = vunpack.c.h.b16 %v3316
  %v3678 = vunpack.c.l.b16 %v3317
  %v3679 = vunpack.c.h.b16 %v3317
  %v3680 = vunpack.c.l.b16 %v3318
  %v3681 = vunpack.c.h.b16 %v3318
  %v3682 = vunpack.c.l.b16 %v3319
  %v3683 = vunpack.c.h.b16 %v3319
  %v3684 = vunpack.c.l.b16 %v3320
  %v3685 = vunpack.c.h.b16 %v3320
  %v3686 = vunpack.c.l.b16 %v3321
  %v3687 = vunpack.c.h.b16 %v3321
  %v3688 = vunpack.c.l.b16 %v3322
  %v3689 = vunpack.c.h.b16 %v3322
  %v3690 = vunpack.c.l.b16 %v3323
  %v3691 = vunpack.c.h.b16 %v3323
  %v3692 = vunpack.c.l.b16 %v3324
  %v3693 = vunpack.c.h.b16 %v3324
  %v3694 = vunpack.c.l.b16 %v3325
  %v3695 = vunpack.c.h.b16 %v3325
  %v3696 = vunpack.c.l.b16 %v3326
  %v3697 = vunpack.c.h.b16 %v3326
  %v3698 = vunpack.c.l.b16 %v3327
  %v3699 = vunpack.c.h.b16 %v3327
  %v3700 = vunpack.c.l.b16 %v3328
  %v3701 = vunpack.c.h.b16 %v3328
  %v3702 = vunpack.c.l.b16 %v3329
  %v3703 = vunpack.c.h.b16 %v3329
  %v3704 = vunpack.c.l.b16 %v3330
  %v3705 = vunpack.c.h.b16 %v3330
  %v3706 = vunpack.c.l.b16 %v3331
  %v3707 = vunpack.c.h.b16 %v3331
  %v3708 = vunpack.c.l.b16 %v3332
  %v3709 = vunpack.c.h.b16 %v3332
  %v3710 = vunpack.c.l.b16 %v3333
  %v3711 = vunpack.c.h.b16 %v3333
  %v3712 = vunpack.c.l.b16 %v3334
  %v3713 = vunpack.c.h.b16 %v3334
  %v3714 = vunpack.c.l.b16 %v3335
  %v3715 = vunpack.c.h.b16 %v3335
  %v3716 = vunpack.c.l.b16 %v3336
  %v3717 = vunpack.c.h.b16 %v3336
  %v3718 = vunpack.c.l.b16 %v3337
  %v3719 = vunpack.c.h.b16 %v3337
  %v3720 = vunpack.c.l.b16 %v3338
  %v3721 = vunpack.c.h.b16 %v3338
  %v3722 = vunpack.c.l.b16 %v3339
  %v3723 = vunpack.c.h.b16 %v3339
  %v3724 = vunpack.c.l.b16 %v3340
  %v3725 = vunpack.c.h.b16 %v3340
  %v3726 = vunpack.c.l.b16 %v3341
  %v3727 = vunpack.c.h.b16 %v3341
  %v3728 = vunpack.c.l.b16 %v3342
  %v3729 = vunpack.c.h.b16 %v3342
  %v3730 = vunpack.c.l.b16 %v3343
  %v3731 = vunpack.c.h.b16 %v3343
  %v3732 = vunpack.c.l.b16 %v3344
  %v3733 = vunpack.c.h.b16 %v3344
  %v3734 = vunpack.c.l.b16 %v3345
  %v3735 = vunpack.c.h.b16 %v3345
  %v3736 = vunpack.c.l.b16 %v3346
  %v3737 = vunpack.c.h.b16 %v3346
  %v3738 = vunpack.c.l.b16 %v3347
  %v3739 = vunpack.c.h.b16 %v3347
  %v3740 = vunpack.c.l.b16 %v3348
  %v3741 = vunpack.c.h.b16 %v3348
  %v3742 = vunpack.c.l.b16 %v3349
  %v3743 = vunpack.c.h.b16 %v3349
  %v3744 = vunpack.c.l.b16 %v3350
  %v3745 = vunpack.c.h.b16 %v3350
  %v3746 = vunpack.c.l.b16 %v3351
  %v3747 = vunpack.c.h.b16 %v3351
  %v3748 = vunpack.c.l.b16 %v3352
  %v3749 = vunpack.c.h.b16 %v3352
  %v3750 = vunpack.c.l.b16 %v3353
  %v3751 = vunpack.c.h.b16 %v3353
  %v3752 = vunpack.c.l.b16 %v3354
  %v3753 = vunpack.c.h.b16 %v3354
  %v3754 = vunpack.c.l.b16 %v3355
  %v3755 = vunpack.c.h.b16 %v3355
  %v3756 = vunpack.c.l.b16 %v3356
  %v3757 = vunpack.c.h.b16 %v3356
  %v3758 = vunpack.c.l.b16 %v3357
  %v3759 = vunpack.c.h.b16 %v3357
  %v3760 = vunpack.c.l.b16 %v3358
  %v3761 = vunpack.c.h.b16 %v3358
  %v3762 = vunpack.c.l.b16 %v3359
  %v3763 = vunpack.c.h.b16 %v3359
  %v3764 = vunpack.c.l.b16 %v3360
  %v3765 = vunpack.c.h.b16 %v3360
  %v3766 = vunpack.c.l.b16 %v3361
  %v3767 = vunpack.c.h.b16 %v3361
  %v3768 = vunpack.c.l.b16 %v3362
  %v3769 = vunpack.c.h.b16 %v3362
  %v3770 = vunpack.c.l.b16 %v3363
  %v3771 = vunpack.c.h.b16 %v3363
  %v3772 = vunpack.c.l.b16 %v3364
  %v3773 = vunpack.c.h.b16 %v3364
  %v3774 = vunpack.c.l.b16 %v3365
  %v3775 = vunpack.c.h.b16 %v3365
  %v3776 = vunpack.c.l.b16 %v3366
  %v3777 = vunpack.c.h.b16 %v3366
  %v3778 = vunpack.c.l.b16 %v3367
  %v3779 = vunpack.c.h.b16 %v3367
  %v3780 = vunpack.c.l.b16 %v3368
  %v3781 = vunpack.c.h.b16 %v3368
  %v3782 = vunpack.c.l.b16 %v3369
  %v3783 = vunpack.c.h.b16 %v3369
  %v3784 = vunpack.c.l.b16 %v3370
  %v3785 = vunpack.c.h.b16 %v3370
  %v3786 = vunpack.c.l.b16 %v3371
  %v3787 = vunpack.c.h.b16 %v3371
  %v3788 = vunpack.c.l.b16 %v3372
  %v3789 = vunpack.c.h.b16 %v3372
  %v3790 = vunpack.c.l.b16 %v3373
  %v3791 = vunpack.c.h.b16 %v3373
  %v3792 = vunpack.c.l.b16 %v3374
  %v3793 = vunpack.c.h.b16 %v3374
  %v3794 = vunpack.c.l.b16 %v3375
  %v3795 = vunpack.c.h.b16 %v3375
  %v3796 = vunpack.c.l.b16 %v3376
  %v3797 = vunpack.c.h.b16 %v3376
  %v3798 = vunpack.c.l.b16 %v3377
  %v3799 = vunpack.c.h.b16 %v3377
  %v3800 = vunpack.c.l.b16 %v3378
  %v3801 = vunpack.c.h.b16 %v3378
  %v3802 = vunpack.c.l.b16 %v3379
  %v3803 = vunpack.c.h.b16 %v3379
  %v3804 = vunpack.c.l.b16 %v3380
  %v3805 = vunpack.c.h.b16 %v3380
  %v3806 = vunpack.c.l.b16 %v3381
  %v3807 = vunpack.c.h.b16 %v3381
  %v3808 = vunpack.c.l.b16 %v3382
  %v3809 = vunpack.c.h.b16 %v3382
  %v3810 = vunpack.c.l.b16 %v3383
  %v3811 = vunpack.c.h.b16 %v3383
  %v3812 = vunpack.c.l.b16 %v3384
  %v3813 = vunpack.c.h.b16 %v3384
  %v3814 = vunpack.c.l.b16 %v3385
  %v3815 = vunpack.c.h.b16 %v3385
  %v3816 = vunpack.c.l.b16 %v3386
  %v3817 = vunpack.c.h.b16 %v3386
  %v3818 = vunpack.c.l.b16 %v3387
  %v3819 = vunpack.c.h.b16 %v3387
  %v3820 = vunpack.c.l.b16 %v3388
  %v3821 = vunpack.c.h.b16 %v3388
  %v3822 = vunpack.c.l.b16 %v3389
  %v3823 = vunpack.c.h.b16 %v3389
  %v3824 = vunpack.c.l.b16 %v3390
  %v3825 = vunpack.c.h.b16 %v3390
  %v3826 = vunpack.c.l.b16 %v3391
  %v3827 = vunpack.c.h.b16 %v3391
  %v3828 = vunpack.c.l.b16 %v3392
  %v3829 = vunpack.c.h.b16 %v3392
  %v3830 = vunpack.c.l.b16 %v3393
  %v3831 = vunpack.c.h.b16 %v3393
  %v3832 = vpack.c.b16 %v3584, %v3576
  %v3833 = vpack.c.b16 %v3585, %v3577
  %v3834 = vpack.c.b16 %v3586, %v3578
  %v3835 = vpack.c.b16 %v3587, %v3579
  %v3836 = vpack.c.b16 %v3588, %v3580
  %v3837 = vpack.c.b16 %v3589, %v3581
  %v3838 = vpack.c.b16 %v3590, %v3582
  %v3839 = vpack.c.b16 %v3591, %v3583
  %v3840 = vpack.c.b16 %v3600, %v3592
  %v3841 = vpack.c.b16 %v3601, %v3593
  %v3842 = vpack.c.b16 %v3602, %v3594
  %v3843 = vpack.c.b16 %v3603, %v3595
  %v3844 = vpack.c.b16 %v3604, %v3596
  %v3845 = vpack.c.b16 %v3605, %v3597
  %v3846 = vpack.c.b16 %v3606, %v3598
  %v3847 = vpack.c.b16 %v3607, %v3599
  %v3848 = vpack.c.b16 %v3616, %v3608
  %v3849 = vpack.c.b16 %v3617, %v3609
  %v3850 = vpack.c.b16 %v3618, %v3610
  %v3851 = vpack.c.b16 %v3619, %v3611
  %v3852 = vpack.c.b16 %v3620, %v3612
  %v3853 = vpack.c.b16 %v3621, %v3613
  %v3854 = vpack.c.b16 %v3622, %v3614
  %v3855 = vpack.c.b16 %v3623, %v3615
  %v3856 = vpack.c.b16 %v3632, %v3624
  %v3857 = vpack.c.b16 %v3633, %v3625
  %v3858 = vpack.c.b16 %v3634, %v3626
  %v3859 = vpack.c.b16 %v3635, %v3627
  %v3860 = vpack.c.b16 %v3636, %v3628
  %v3861 = vpack.c.b16 %v3637, %v3629
  %v3862 = vpack.c.b16 %v3638, %v3630
  %v3863 = vpack.c.b16 %v3639, %v3631
  %v3864 = vpack.c.b16 %v3648, %v3640
  %v3865 = vpack.c.b16 %v3649, %v3641
  %v3866 = vpack.c.b16 %v3650, %v3642
  %v3867 = vpack.c.b16 %v3651, %v3643
  %v3868 = vpack.c.b16 %v3652, %v3644
  %v3869 = vpack.c.b16 %v3653, %v3645
  %v3870 = vpack.c.b16 %v3654, %v3646
  %v3871 = vpack.c.b16 %v3655, %v3647
  %v3872 = vpack.c.b16 %v3664, %v3656
  %v3873 = vpack.c.b16 %v3665, %v3657
  %v3874 = vpack.c.b16 %v3666, %v3658
  %v3875 = vpack.c.b16 %v3667, %v3659
  %v3876 = vpack.c.b16 %v3668, %v3660
  %v3877 = vpack.c.b16 %v3669, %v3661
  %v3878 = vpack.c.b16 %v3670, %v3662
  %v3879 = vpack.c.b16 %v3671, %v3663
  %v3880 = vpack.c.b16 %v3680, %v3672
  %v3881 = vpack.c.b16 %v3681, %v3673
  %v3882 = vpack.c.b16 %v3682, %v3674
  %v3883 = vpack.c.b16 %v3683, %v3675
  %v3884 = vpack.c.b16 %v3684, %v3676
  %v3885 = vpack.c.b16 %v3685, %v3677
  %v3886 = vpack.c.b16 %v3686, %v3678
  %v3887 = vpack.c.b16 %v3687, %v3679
  %v3888 = vpack.c.b16 %v3696, %v3688
  %v3889 = vpack.c.b16 %v3697, %v3689
  %v3890 = vpack.c.b16 %v3698, %v3690
  %v3891 = vpack.c.b16 %v3699, %v3691
  %v3892 = vpack.c.b16 %v3700, %v3692
  %v3893 = vpack.c.b16 %v3701, %v3693
  %v3894 = vpack.c.b16 %v3702, %v3694
  %v3895 = vpack.c.b16 %v3703, %v3695
  %v3896 = vpack.c.b16 %v3712, %v3704
  %v3897 = vpack.c.b16 %v3713, %v3705
  %v3898 = vpack.c.b16 %v3714, %v3706
  %v3899 = vpack.c.b16 %v3715, %v3707
  %v3900 = vpack.c.b16 %v3716, %v3708
  %v3901 = vpack.c.b16 %v3717, %v3709
  %v3902 = vpack.c.b16 %v3718, %v3710
  %v3903 = vpack.c.b16 %v3719, %v3711
  %v3904 = vpack.c.b16 %v3728, %v3720
  %v3905 = vpack.c.b16 %v3729, %v3721
  %v3906 = vpack.c.b16 %v3730, %v3722
  %v3907 = vpack.c.b16 %v3731, %v3723
  %v3908 = vpack.c.b16 %v3732, %v3724
  %v3909 = vpack.c.b16 %v3733, %v3725
  %v3910 = vpack.c.b16 %v3734, %v3726
  %v3911 = vpack.c.b16 %v3735, %v3727
  %v3912 = vpack.c.b16 %v3744, %v3736
  %v3913 = vpack.c.b16 %v3745, %v3737
  %v3914 = vpack.c.b16 %v3746, %v3738
  %v3915 = vpack.c.b16 %v3747, %v3739
  %v3916 = vpack.c.b16 %v3748, %v3740
  %v3917 = vpack.c.b16 %v3749, %v3741
  %v3918 = vpack.c.b16 %v3750, %v3742
  %v3919 = vpack.c.b16 %v3751, %v3743
  %v3920 = vpack.c.b16 %v3760, %v3752
  %v3921 = vpack.c.b16 %v3761, %v3753
  %v3922 = vpack.c.b16 %v3762, %v3754
  %v3923 = vpack.c.b16 %v3763, %v3755
  %v3924 = vpack.c.b16 %v3764, %v3756
  %v3925 = vpack.c.b16 %v3765, %v3757
  %v3926 = vpack.c.b16 %v3766, %v3758
  %v3927 = vpack.c.b16 %v3767, %v3759
  %v3928 = vpack.c.b16 %v3776, %v3768
  %v3929 = vpack.c.b16 %v3777, %v3769
  %v3930 = vpack.c.b16 %v3778, %v3770
  %v3931 = vpack.c.b16 %v3779, %v3771
  %v3932 = vpack.c.b16 %v3780, %v3772
  %v3933 = vpack.c.b16 %v3781, %v3773
  %v3934 = vpack.c.b16 %v3782, %v3774
  %v3935 = vpack.c.b16 %v3783, %v3775
  %v3936 = vpack.c.b16 %v3792, %v3784
  %v3937 = vpack.c.b16 %v3793, %v3785
  %v3938 = vpack.c.b16 %v3794, %v3786
  %v3939 = vpack.c.b16 %v3795, %v3787
  %v3940 = vpack.c.b16 %v3796, %v3788
  %v3941 = vpack.c.b16 %v3797, %v3789
  %v3942 = vpack.c.b16 %v3798, %v3790
  %v3943 = vpack.c.b16 %v3799, %v3791
  %v3944 = vpack.c.b16 %v3808, %v3800
  %v3945 = vpack.c.b16 %v3809, %v3801
  %v3946 = vpack.c.b16 %v3810, %v3802
  %v3947 = vpack.c.b16 %v3811, %v3803
  %v3948 = vpack.c.b16 %v3812, %v3804
  %v3949 = vpack.c.b16 %v3813, %v3805
  %v3950 = vpack.c.b16 %v3814, %v3806
  %v3951 = vpack.c.b16 %v3815, %v3807
  %v3952 = vpack.c.b16 %v3824, %v3816
  %v3953 = vpack.c.b16 %v3825, %v3817
  %v3954 = vpack.c.b16 %v3826, %v3818
  %v3955 = vpack.c.b16 %v3827, %v3819
  %v3956 = vpack.c.b16 %v3828, %v3820
  %v3957 = vpack.c.b16 %v3829, %v3821
  %v3958 = vpack.c.b16 %v3830, %v3822
  %v3959 = vpack.c.b16 %v3831, %v3823
  %4088 = vmatprep.subr.bf16.mxu0 %v3889
  %4089 = vmatpush1.bf16.msra.mxu0 %v3888
  %4090 = vmatprep.subr.bf16.mxu0 %v3881
  %4091 = vmatpush1.bf16.msra.mxu0 %v3880
  %4092 = vmatprep.subr.bf16.mxu0 %v3873
  %4093 = vmatpush1.bf16.msra.mxu0 %v3872
  %4094 = vmatprep.subr.bf16.mxu0 %v3865
  %4095 = vmatpush1.bf16.msra.mxu0 %v3864
  %4096 = vmatprep.subr.bf16.mxu0 %v3857
  %4097 = vmatpush1.bf16.msra.mxu0 %v3856
  %4098 = vmatprep.subr.bf16.mxu0 %v3849
  %4099 = vmatpush1.bf16.msra.mxu0 %v3848
  %4100 = vmatprep.subr.bf16.mxu0 %v3841
  %4101 = vmatpush1.bf16.msra.mxu0 %v3840
  %4102 = vmatprep.subr.bf16.mxu0 %v3833
  %4103 = vmatpush1.bf16.msra.mxu0 %v3832
  %4104 = vmatprep.subr.bf16.mxu0 %v3953
  %4105 = vmatpush2.bf16.msra.mxu0 %v3952
  %4106 = vmatprep.subr.bf16.mxu0 %v3945
  %4107 = vmatpush2.bf16.msra.mxu0 %v3944
  %4108 = vmatprep.subr.bf16.mxu0 %v3937
  %4109 = vmatpush2.bf16.msra.mxu0 %v3936
  %4110 = vmatprep.subr.bf16.mxu0 %v3929
  %4111 = vmatpush2.bf16.msra.mxu0 %v3928
  %4112 = vmatprep.subr.bf16.mxu0 %v3921
  %4113 = vmatpush2.bf16.msra.mxu0 %v3920
  %4114 = vmatprep.subr.bf16.mxu0 %v3913
  %4115 = vmatpush2.bf16.msra.mxu0 %v3912
  %4116 = vmatprep.subr.bf16.mxu0 %v3905
  %4117 = vmatpush2.bf16.msra.mxu0 %v3904
  %4118 = vmatprep.subr.bf16.mxu0 %v3897
  %4119 = vmatpush2.bf16.msra.mxu0 %v3896
  %4120 = vmatprep.mubr.bf16.mxu0 %v3447
  %4121 = vmatmul.mubr.bf16.gmra.mxu0 %v3446
  %v4122 = vpop.f32.mrf.mxu0
  %v4123 = vadd.f32 0.0, %v4122
  %v4124 = vpop.f32.mrf.mxu0
  %v4125 = vadd.f32 0.0, %v4124
  %v4126 = vpop.f32.mrf.mxu0
  %v4127 = vpop.f32.mrf.mxu0
  %4128 = vdwg.mxu0
  %4129 = vmatprep.subr.bf16.mxu0 %v3891
  %4130 = vmatpush1.bf16.msra.mxu0 %v3890
  %4131 = vmatprep.subr.bf16.mxu0 %v3883
  %4132 = vmatpush1.bf16.msra.mxu0 %v3882
  %4133 = vmatprep.subr.bf16.mxu0 %v3875
  %4134 = vmatpush1.bf16.msra.mxu0 %v3874
  %4135 = vmatprep.subr.bf16.mxu0 %v3867
  %4136 = vmatpush1.bf16.msra.mxu0 %v3866
  %4137 = vmatprep.subr.bf16.mxu0 %v3859
  %4138 = vmatpush1.bf16.msra.mxu0 %v3858
  %4139 = vmatprep.subr.bf16.mxu0 %v3851
  %4140 = vmatpush1.bf16.msra.mxu0 %v3850
  %4141 = vmatprep.subr.bf16.mxu0 %v3843
  %4142 = vmatpush1.bf16.msra.mxu0 %v3842
  %4143 = vmatprep.subr.bf16.mxu0 %v3835
  %4144 = vmatpush1.bf16.msra.mxu0 %v3834
  %4145 = vmatprep.subr.bf16.mxu0 %v3955
  %4146 = vmatpush2.bf16.msra.mxu0 %v3954
  %4147 = vmatprep.subr.bf16.mxu0 %v3947
  %4148 = vmatpush2.bf16.msra.mxu0 %v3946
  %4149 = vmatprep.subr.bf16.mxu0 %v3939
  %4150 = vmatpush2.bf16.msra.mxu0 %v3938
  %4151 = vmatprep.subr.bf16.mxu0 %v3931
  %4152 = vmatpush2.bf16.msra.mxu0 %v3930
  %4153 = vmatprep.subr.bf16.mxu0 %v3923
  %4154 = vmatpush2.bf16.msra.mxu0 %v3922
  %4155 = vmatprep.subr.bf16.mxu0 %v3915
  %4156 = vmatpush2.bf16.msra.mxu0 %v3914
  %4157 = vmatprep.subr.bf16.mxu0 %v3907
  %4158 = vmatpush2.bf16.msra.mxu0 %v3906
  %4159 = vmatprep.subr.bf16.mxu0 %v3899
  %4160 = vmatpush2.bf16.msra.mxu0 %v3898
  %4161 = vmatprep.mubr.bf16.mxu0 %v3447
  %4162 = vmatmul.mubr.bf16.gmra.mxu0 %v3446
  %v4163 = vpop.f32.mrf.mxu0
  %v4164 = vadd.f32 0.0, %v4163
  %v4165 = vpop.f32.mrf.mxu0
  %v4166 = vadd.f32 0.0, %v4165
  %v4167 = vpop.f32.mrf.mxu0
  %v4168 = vpop.f32.mrf.mxu0
  %4169 = vdwg.mxu0
  %4170 = vmatprep.subr.bf16.mxu0 %v3893
  %4171 = vmatpush1.bf16.msra.mxu0 %v3892
  %4172 = vmatprep.subr.bf16.mxu0 %v3885
  %4173 = vmatpush1.bf16.msra.mxu0 %v3884
  %4174 = vmatprep.subr.bf16.mxu0 %v3877
  %4175 = vmatpush1.bf16.msra.mxu0 %v3876
  %4176 = vmatprep.subr.bf16.mxu0 %v3869
  %4177 = vmatpush1.bf16.msra.mxu0 %v3868
  %4178 = vmatprep.subr.bf16.mxu0 %v3861
  %4179 = vmatpush1.bf16.msra.mxu0 %v3860
  %4180 = vmatprep.subr.bf16.mxu0 %v3853
  %4181 = vmatpush1.bf16.msra.mxu0 %v3852
  %4182 = vmatprep.subr.bf16.mxu0 %v3845
  %4183 = vmatpush1.bf16.msra.mxu0 %v3844
  %4184 = vmatprep.subr.bf16.mxu0 %v3837
  %4185 = vmatpush1.bf16.msra.mxu0 %v3836
  %4186 = vmatprep.subr.bf16.mxu0 %v3957
  %4187 = vmatpush2.bf16.msra.mxu0 %v3956
  %4188 = vmatprep.subr.bf16.mxu0 %v3949
  %4189 = vmatpush2.bf16.msra.mxu0 %v3948
  %4190 = vmatprep.subr.bf16.mxu0 %v3941
  %4191 = vmatpush2.bf16.msra.mxu0 %v3940
  %4192 = vmatprep.subr.bf16.mxu0 %v3933
  %4193 = vmatpush2.bf16.msra.mxu0 %v3932
  %4194 = vmatprep.subr.bf16.mxu0 %v3925
  %4195 = vmatpush2.bf16.msra.mxu0 %v3924
  %4196 = vmatprep.subr.bf16.mxu0 %v3917
  %4197 = vmatpush2.bf16.msra.mxu0 %v3916
  %4198 = vmatprep.subr.bf16.mxu0 %v3909
  %4199 = vmatpush2.bf16.msra.mxu0 %v3908
  %4200 = vmatprep.subr.bf16.mxu0 %v3901
  %4201 = vmatpush2.bf16.msra.mxu0 %v3900
  %4202 = vmatprep.mubr.bf16.mxu0 %v3447
  %4203 = vmatmul.mubr.bf16.gmra.mxu0 %v3446
  %v4204 = vpop.f32.mrf.mxu0
  %v4205 = vadd.f32 0.0, %v4204
  %v4206 = vpop.f32.mrf.mxu0
  %v4207 = vadd.f32 0.0, %v4206
  %v4208 = vpop.f32.mrf.mxu0
  %v4209 = vpop.f32.mrf.mxu0
  %4210 = vdwg.mxu0
  %4211 = vmatprep.subr.bf16.mxu0 %v3895
  %4212 = vmatpush1.bf16.msra.mxu0 %v3894
  %4213 = vmatprep.subr.bf16.mxu0 %v3887
  %4214 = vmatpush1.bf16.msra.mxu0 %v3886
  %4215 = vmatprep.subr.bf16.mxu0 %v3879
  %4216 = vmatpush1.bf16.msra.mxu0 %v3878
  %4217 = vmatprep.subr.bf16.mxu0 %v3871
  %4218 = vmatpush1.bf16.msra.mxu0 %v3870
  %4219 = vmatprep.subr.bf16.mxu0 %v3863
  %4220 = vmatpush1.bf16.msra.mxu0 %v3862
  %4221 = vmatprep.subr.bf16.mxu0 %v3855
  %4222 = vmatpush1.bf16.msra.mxu0 %v3854
  %4223 = vmatprep.subr.bf16.mxu0 %v3847
  %4224 = vmatpush1.bf16.msra.mxu0 %v3846
  %4225 = vmatprep.subr.bf16.mxu0 %v3839
  %4226 = vmatpush1.bf16.msra.mxu0 %v3838
  %4227 = vmatprep.subr.bf16.mxu0 %v3959
  %4228 = vmatpush2.bf16.msra.mxu0 %v3958
  %4229 = vmatprep.subr.bf16.mxu0 %v3951
  %4230 = vmatpush2.bf16.msra.mxu0 %v3950
  %4231 = vmatprep.subr.bf16.mxu0 %v3943
  %4232 = vmatpush2.bf16.msra.mxu0 %v3942
  %4233 = vmatprep.subr.bf16.mxu0 %v3935
  %4234 = vmatpush2.bf16.msra.mxu0 %v3934
  %4235 = vmatprep.subr.bf16.mxu0 %v3927
  %4236 = vmatpush2.bf16.msra.mxu0 %v3926
  %4237 = vmatprep.subr.bf16.mxu0 %v3919
  %4238 = vmatpush2.bf16.msra.mxu0 %v3918
  %4239 = vmatprep.subr.bf16.mxu0 %v3911
  %4240 = vmatpush2.bf16.msra.mxu0 %v3910
  %4241 = vmatprep.subr.bf16.mxu0 %v3903
  %4242 = vmatpush2.bf16.msra.mxu0 %v3902
  %4243 = vmatprep.mubr.bf16.mxu0 %v3447
  %4244 = vmatmul.mubr.bf16.gmra.mxu0 %v3446
  %v4245 = vpop.f32.mrf.mxu0
  %v4246 = vadd.f32 0.0, %v4245
  %v4247 = vpop.f32.mrf.mxu0
  %v4248 = vadd.f32 0.0, %v4247
  %v4249 = vpop.f32.mrf.mxu0
  %v4250 = vpop.f32.mrf.mxu0
  %4251 = vdwg.mxu0
  %v4252 = vadd.f32 %v3436, %v4123
  %v4253 = vadd.f32 %v3437, %v4125
  %v4254 = vadd.f32 %v3438, %v4164
  %v4255 = vadd.f32 %v3439, %v4166
  %v4256 = vadd.f32 %v3440, %v4205
  %v4257 = vadd.f32 %v3441, %v4207
  %v4258 = vadd.f32 %v3442, %v4246
  %v4259 = vadd.f32 %v3443, %v4248
  %v4260 = vxor.u32 %v4252, 2147483648
  %v4261 = vxor.u32 %v4253, 2147483648
  %v4262 = vmul.f32 %v4260, 1.442695
  %v4263 = vpow.pop %v4262
  %v4264 = vmul.f32 %v4261, 1.442695
  %v4265 = vpow.pop %v4264
  %v4266 = vadd.f32 %v4263, 1.0
  %v4267 = vadd.f32 %v4265, 1.0
  %v4268 = vrcp.pop %v4266
  %v4269 = vmul.f32 1.0, %v4268
  %v4270 = vrcp.pop %v4267
  %v4271 = vmul.f32 1.0, %v4270
  %v4272 = vxor.u32 %v4254, 2147483648
  %v4273 = vxor.u32 %v4255, 2147483648
  %v4274 = vmul.f32 %v4272, 1.442695
  %v4275 = vpow.pop %v4274
  %v4276 = vmul.f32 %v4273, 1.442695
  %v4277 = vpow.pop %v4276
  %v4278 = vadd.f32 %v4275, 1.0
  %v4279 = vadd.f32 %v4277, 1.0
  %v4280 = vrcp.pop %v4278
  %v4281 = vmul.f32 1.0, %v4280
  %v4282 = vrcp.pop %v4279
  %v4283 = vmul.f32 1.0, %v4282
  %v4284 = vtanh.pop %v4256
  %v4285 = vtanh.pop %v4257
  %v4286 = vxor.u32 %v4258, 2147483648
  %v4287 = vxor.u32 %v4259, 2147483648
  %v4288 = vmul.f32 %v4286, 1.442695
  %v4289 = vpow.pop %v4288
  %v4290 = vmul.f32 %v4287, 1.442695
  %v4291 = vpow.pop %v4290
  %v4292 = vadd.f32 %v4289, 1.0
  %v4293 = vadd.f32 %v4291, 1.0
  %v4294 = vrcp.pop %v4292
  %v4295 = vmul.f32 1.0, %v4294
  %v4296 = vrcp.pop %v4293
  %v4297 = vmul.f32 1.0, %v4296
  %v4298 = vld [vmem:[#allocation4] sm:$0xff]
  %v4299 = vld [vmem:[#allocation4 + $0x8] sm:$0xff]
  %v4300 = vmul.f32 %v4281, %v4298
  %v4301 = vmul.f32 %v4283, %v4299
  %v4302 = vmul.f32 %v4269, %v4284
  %v4303 = vmul.f32 %v4271, %v4285
  %v4304 = vadd.f32 %v4300, %v4302
  %v4305 = vadd.f32 %v4301, %v4303
  %4306 = vst [vmem:[#allocation4] sm:$0xff] %v4304
  %4307 = vst [vmem:[#allocation4 + $0x8] sm:$0xff] %v4305
  %v4308 = vtanh.pop %v4304
  %v4309 = vtanh.pop %v4305
  %v4310 = vmul.f32 %v4295, %v4308
  %v4311 = vmul.f32 %v4297, %v4309
  %4312 = vst [vmem:[#allocation3] sm:$0xff] %v4310
  %4313 = vst [vmem:[#allocation3 + $0x8] sm:$0xff] %v4311
  %v4314 = vld [vmem:[#allocation2 + $0x80] sm:$0xff]
  %v4315 = vld [vmem:[#allocation2 + $0x88] sm:$0xff]
  %v4316 = vld [vmem:[#allocation2 + $0x90] sm:$0xff]
  %v4317 = vld [vmem:[#allocation2 + $0x98] sm:$0xff]
  %v4318 = vld [vmem:[#allocation2 + $0xa0] sm:$0xff]
  %v4319 = vld [vmem:[#allocation2 + $0xa8] sm:$0xff]
  %v4320 = vld [vmem:[#allocation2 + $0xb0] sm:$0xff]
  %v4321 = vld [vmem:[#allocation2 + $0xb8] sm:$0xff]
  %v4322 = vld [vmem:[#allocation3] sm:$0xff]
  %v4323 = vld [vmem:[#allocation3 + $0x8] sm:$0xff]
  %v4324 = vpack.c.bf16 %v4322, %v4322
  %v4325 = vpack.c.bf16 %v4323, %v4323
  %4326 = vmatprep.subr.bf16.mxu0 %v3889
  %4327 = vmatpush1.bf16.msra.mxu0 %v3888
  %4328 = vmatprep.subr.bf16.mxu0 %v3881
  %4329 = vmatpush1.bf16.msra.mxu0 %v3880
  %4330 = vmatprep.subr.bf16.mxu0 %v3873
  %4331 = vmatpush1.bf16.msra.mxu0 %v3872
  %4332 = vmatprep.subr.bf16.mxu0 %v3865
  %4333 = vmatpush1.bf16.msra.mxu0 %v3864
  %4334 = vmatprep.subr.bf16.mxu0 %v3857
  %4335 = vmatpush1.bf16.msra.mxu0 %v3856
  %4336 = vmatprep.subr.bf16.mxu0 %v3849
  %4337 = vmatpush1.bf16.msra.mxu0 %v3848
  %4338 = vmatprep.subr.bf16.mxu0 %v3841
  %4339 = vmatpush1.bf16.msra.mxu0 %v3840
  %4340 = vmatprep.subr.bf16.mxu0 %v3833
  %4341 = vmatpush1.bf16.msra.mxu0 %v3832
  %4342 = vmatprep.subr.bf16.mxu0 %v3953
  %4343 = vmatpush2.bf16.msra.mxu0 %v3952
  %4344 = vmatprep.subr.bf16.mxu0 %v3945
  %4345 = vmatpush2.bf16.msra.mxu0 %v3944
  %4346 = vmatprep.subr.bf16.mxu0 %v3937
  %4347 = vmatpush2.bf16.msra.mxu0 %v3936
  %4348 = vmatprep.subr.bf16.mxu0 %v3929
  %4349 = vmatpush2.bf16.msra.mxu0 %v3928
  %4350 = vmatprep.subr.bf16.mxu0 %v3921
  %4351 = vmatpush2.bf16.msra.mxu0 %v3920
  %4352 = vmatprep.subr.bf16.mxu0 %v3913
  %4353 = vmatpush2.bf16.msra.mxu0 %v3912
  %4354 = vmatprep.subr.bf16.mxu0 %v3905
  %4355 = vmatpush2.bf16.msra.mxu0 %v3904
  %4356 = vmatprep.subr.bf16.mxu0 %v3897
  %4357 = vmatpush2.bf16.msra.mxu0 %v3896
  %4358 = vmatprep.mubr.bf16.mxu0 %v4325
  %4359 = vmatmul.mubr.bf16.gmra.mxu0 %v4324
  %v4360 = vpop.f32.mrf.mxu0
  %v4361 = vadd.f32 0.0, %v4360
  %v4362 = vpop.f32.mrf.mxu0
  %v4363 = vadd.f32 0.0, %v4362
  %v4364 = vpop.f32.mrf.mxu0
  %v4365 = vpop.f32.mrf.mxu0
  %4366 = vdwg.mxu0
  %4367 = vmatprep.subr.bf16.mxu0 %v3891
  %4368 = vmatpush1.bf16.msra.mxu0 %v3890
  %4369 = vmatprep.subr.bf16.mxu0 %v3883
  %4370 = vmatpush1.bf16.msra.mxu0 %v3882
  %4371 = vmatprep.subr.bf16.mxu0 %v3875
  %4372 = vmatpush1.bf16.msra.mxu0 %v3874
  %4373 = vmatprep.subr.bf16.mxu0 %v3867
  %4374 = vmatpush1.bf16.msra.mxu0 %v3866
  %4375 = vmatprep.subr.bf16.mxu0 %v3859
  %4376 = vmatpush1.bf16.msra.mxu0 %v3858
  %4377 = vmatprep.subr.bf16.mxu0 %v3851
  %4378 = vmatpush1.bf16.msra.mxu0 %v3850
  %4379 = vmatprep.subr.bf16.mxu0 %v3843
  %4380 = vmatpush1.bf16.msra.mxu0 %v3842
  %4381 = vmatprep.subr.bf16.mxu0 %v3835
  %4382 = vmatpush1.bf16.msra.mxu0 %v3834
  %4383 = vmatprep.subr.bf16.mxu0 %v3955
  %4384 = vmatpush2.bf16.msra.mxu0 %v3954
  %4385 = vmatprep.subr.bf16.mxu0 %v3947
  %4386 = vmatpush2.bf16.msra.mxu0 %v3946
  %4387 = vmatprep.subr.bf16.mxu0 %v3939
  %4388 = vmatpush2.bf16.msra.mxu0 %v3938
  %4389 = vmatprep.subr.bf16.mxu0 %v3931
  %4390 = vmatpush2.bf16.msra.mxu0 %v3930
  %4391 = vmatprep.subr.bf16.mxu0 %v3923
  %4392 = vmatpush2.bf16.msra.mxu0 %v3922
  %4393 = vmatprep.subr.bf16.mxu0 %v3915
  %4394 = vmatpush2.bf16.msra.mxu0 %v3914
  %4395 = vmatprep.subr.bf16.mxu0 %v3907
  %4396 = vmatpush2.bf16.msra.mxu0 %v3906
  %4397 = vmatprep.subr.bf16.mxu0 %v3899
  %4398 = vmatpush2.bf16.msra.mxu0 %v3898
  %4399 = vmatprep.mubr.bf16.mxu0 %v4325
  %4400 = vmatmul.mubr.bf16.gmra.mxu0 %v4324
  %v4401 = vpop.f32.mrf.mxu0
  %v4402 = vadd.f32 0.0, %v4401
  %v4403 = vpop.f32.mrf.mxu0
  %v4404 = vadd.f32 0.0, %v4403
  %v4405 = vpop.f32.mrf.mxu0
  %v4406 = vpop.f32.mrf.mxu0
  %4407 = vdwg.mxu0
  %4408 = vmatprep.subr.bf16.mxu0 %v3893
  %4409 = vmatpush1.bf16.msra.mxu0 %v3892
  %4410 = vmatprep.subr.bf16.mxu0 %v3885
  %4411 = vmatpush1.bf16.msra.mxu0 %v3884
  %4412 = vmatprep.subr.bf16.mxu0 %v3877
  %4413 = vmatpush1.bf16.msra.mxu0 %v3876
  %4414 = vmatprep.subr.bf16.mxu0 %v3869
  %4415 = vmatpush1.bf16.msra.mxu0 %v3868
  %4416 = vmatprep.subr.bf16.mxu0 %v3861
  %4417 = vmatpush1.bf16.msra.mxu0 %v3860
  %4418 = vmatprep.subr.bf16.mxu0 %v3853
  %4419 = vmatpush1.bf16.msra.mxu0 %v3852
  %4420 = vmatprep.subr.bf16.mxu0 %v3845
  %4421 = vmatpush1.bf16.msra.mxu0 %v3844
  %4422 = vmatprep.subr.bf16.mxu0 %v3837
  %4423 = vmatpush1.bf16.msra.mxu0 %v3836
  %4424 = vmatprep.subr.bf16.mxu0 %v3957
  %4425 = vmatpush2.bf16.msra.mxu0 %v3956
  %4426 = vmatprep.subr.bf16.mxu0 %v3949
  %4427 = vmatpush2.bf16.msra.mxu0 %v3948
  %4428 = vmatprep.subr.bf16.mxu0 %v3941
  %4429 = vmatpush2.bf16.msra.mxu0 %v3940
  %4430 = vmatprep.subr.bf16.mxu0 %v3933
  %4431 = vmatpush2.bf16.msra.mxu0 %v3932
  %4432 = vmatprep.subr.bf16.mxu0 %v3925
  %4433 = vmatpush2.bf16.msra.mxu0 %v3924
  %4434 = vmatprep.subr.bf16.mxu0 %v3917
  %4435 = vmatpush2.bf16.msra.mxu0 %v3916
  %4436 = vmatprep.subr.bf16.mxu0 %v3909
  %4437 = vmatpush2.bf16.msra.mxu0 %v3908
  %4438 = vmatprep.subr.bf16.mxu0 %v3901
  %4439 = vmatpush2.bf16.msra.mxu0 %v3900
  %4440 = vmatprep.mubr.bf16.mxu0 %v4325
  %4441 = vmatmul.mubr.bf16.gmra.mxu0 %v4324
  %v4442 = vpop.f32.mrf.mxu0
  %v4443 = vadd.f32 0.0, %v4442
  %v4444 = vpop.f32.mrf.mxu0
  %v4445 = vadd.f32 0.0, %v4444
  %v4446 = vpop.f32.mrf.mxu0
  %v4447 = vpop.f32.mrf.mxu0
  %4448 = vdwg.mxu0
  %4449 = vmatprep.subr.bf16.mxu0 %v3895
  %4450 = vmatpush1.bf16.msra.mxu0 %v3894
  %4451 = vmatprep.subr.bf16.mxu0 %v3887
  %4452 = vmatpush1.bf16.msra.mxu0 %v3886
  %4453 = vmatprep.subr.bf16.mxu0 %v3879
  %4454 = vmatpush1.bf16.msra.mxu0 %v3878
  %4455 = vmatprep.subr.bf16.mxu0 %v3871
  %4456 = vmatpush1.bf16.msra.mxu0 %v3870
  %4457 = vmatprep.subr.bf16.mxu0 %v3863
  %4458 = vmatpush1.bf16.msra.mxu0 %v3862
  %4459 = vmatprep.subr.bf16.mxu0 %v3855
  %4460 = vmatpush1.bf16.msra.mxu0 %v3854
  %4461 = vmatprep.subr.bf16.mxu0 %v3847
  %4462 = vmatpush1.bf16.msra.mxu0 %v3846
  %4463 = vmatprep.subr.bf16.mxu0 %v3839
  %4464 = vmatpush1.bf16.msra.mxu0 %v3838
  %4465 = vmatprep.subr.bf16.mxu0 %v3959
  %4466 = vmatpush2.bf16.msra.mxu0 %v3958
  %4467 = vmatprep.subr.bf16.mxu0 %v3951
  %4468 = vmatpush2.bf16.msra.mxu0 %v3950
  %4469 = vmatprep.subr.bf16.mxu0 %v3943
  %4470 = vmatpush2.bf16.msra.mxu0 %v3942
  %4471 = vmatprep.subr.bf16.mxu0 %v3935
  %4472 = vmatpush2.bf16.msra.mxu0 %v3934
  %4473 = vmatprep.subr.bf16.mxu0 %v3927
  %4474 = vmatpush2.bf16.msra.mxu0 %v3926
  %4475 = vmatprep.subr.bf16.mxu0 %v3919
  %4476 = vmatpush2.bf16.msra.mxu0 %v3918
  %4477 = vmatprep.subr.bf16.mxu0 %v3911
  %4478 = vmatpush2.bf16.msra.mxu0 %v3910
  %4479 = vmatprep.subr.bf16.mxu0 %v3903
  %4480 = vmatpush2.bf16.msra.mxu0 %v3902
  %4481 = vmatprep.mubr.bf16.mxu0 %v4325
  %4482 = vmatmul.mubr.bf16.gmra.mxu0 %v4324
  %v4483 = vpop.f32.mrf.mxu0
  %v4484 = vadd.f32 0.0, %v4483
  %v4485 = vpop.f32.mrf.mxu0
  %v4486 = vadd.f32 0.0, %v4485
  %v4487 = vpop.f32.mrf.mxu0
  %v4488 = vpop.f32.mrf.mxu0
  %4489 = vdwg.mxu0
  %v4490 = vadd.f32 %v4314, %v4361
  %v4491 = vadd.f32 %v4315, %v4363
  %v4492 = vadd.f32 %v4316, %v4402
  %v4493 = vadd.f32 %v4317, %v4404
  %v4494 = vadd.f32 %v4318, %v4443
  %v4495 = vadd.f32 %v4319, %v4445
  %v4496 = vadd.f32 %v4320, %v4484
  %v4497 = vadd.f32 %v4321, %v4486
  %v4498 = vxor.u32 %v4490, 2147483648
  %v4499 = vxor.u32 %v4491, 2147483648
  %v4500 = vmul.f32 %v4498, 1.442695
  %v4501 = vpow.pop %v4500
  %v4502 = vmul.f32 %v4499, 1.442695
  %v4503 = vpow.pop %v4502
  %v4504 = vadd.f32 %v4501, 1.0
  %v4505 = vadd.f32 %v4503, 1.0
  %v4506 = vrcp.pop %v4504
  %v4507 = vmul.f32 1.0, %v4506
  %v4508 = vrcp.pop %v4505
  %v4509 = vmul.f32 1.0, %v4508
  %v4510 = vxor.u32 %v4492, 2147483648
  %v4511 = vxor.u32 %v4493, 2147483648
  %v4512 = vmul.f32 %v4510, 1.442695
  %v4513 = vpow.pop %v4512
  %v4514 = vmul.f32 %v4511, 1.442695
  %v4515 = vpow.pop %v4514
  %v4516 = vadd.f32 %v4513, 1.0
  %v4517 = vadd.f32 %v4515, 1.0
  %v4518 = vrcp.pop %v4516
  %v4519 = vmul.f32 1.0, %v4518
  %v4520 = vrcp.pop %v4517
  %v4521 = vmul.f32 1.0, %v4520
  %v4522 = vtanh.pop %v4494
  %v4523 = vtanh.pop %v4495
  %v4524 = vxor.u32 %v4496, 2147483648
  %v4525 = vxor.u32 %v4497, 2147483648
  %v4526 = vmul.f32 %v4524, 1.442695
  %v4527 = vpow.pop %v4526
  %v4528 = vmul.f32 %v4525, 1.442695
  %v4529 = vpow.pop %v4528
  %v4530 = vadd.f32 %v4527, 1.0
  %v4531 = vadd.f32 %v4529, 1.0
  %v4532 = vrcp.pop %v4530
  %v4533 = vmul.f32 1.0, %v4532
  %v4534 = vrcp.pop %v4531
  %v4535 = vmul.f32 1.0, %v4534
  %v4536 = vld [vmem:[#allocation4] sm:$0xff]
  %v4537 = vld [vmem:[#allocation4 + $0x8] sm:$0xff]
  %v4538 = vmul.f32 %v4519, %v4536
  %v4539 = vmul.f32 %v4521, %v4537
  %v4540 = vmul.f32 %v4507, %v4522
  %v4541 = vmul.f32 %v4509, %v4523
  %v4542 = vadd.f32 %v4538, %v4540
  %v4543 = vadd.f32 %v4539, %v4541
  %4544 = vst [vmem:[#allocation4] sm:$0xff] %v4542
  %4545 = vst [vmem:[#allocation4 + $0x8] sm:$0xff] %v4543
  %v4546 = vtanh.pop %v4542
  %v4547 = vtanh.pop %v4543
  %v4548 = vmul.f32 %v4533, %v4546
  %v4549 = vmul.f32 %v4535, %v4547
  %4550 = vst [vmem:[#allocation3] sm:$0xff] %v4548
  %4551 = vst [vmem:[#allocation3 + $0x8] sm:$0xff] %v4549
  %v4552 = vld [vmem:[#allocation3] sm:$0xff]
  %v4553 = vld [vmem:[#allocation3 + $0x8] sm:$0xff]
  %v4554 = vpack.c.bf16 %v4552, %v4552
  %v4555 = vpack.c.bf16 %v4553, %v4553
  %v4556 = vld [vmem:[%s15] sm:$0xf]
  %v4557 = vld [vmem:[%s15 + $0x4] sm:$0xf]
  %v4558 = vld [vmem:[%s15 + $0x8] sm:$0xf]
  %v4559 = vld [vmem:[%s15 + $0xc] sm:$0xf]
  %v4560 = vld [vmem:[%s15 + $0x10] sm:$0xf]
  %v4561 = vld [vmem:[%s15 + $0x14] sm:$0xf]
  %v4562 = vld [vmem:[%s15 + $0x18] sm:$0xf]
  %v4563 = vld [vmem:[%s15 + $0x1c] sm:$0xf]
  %v4564 = vld [vmem:[%s15 + $0x20] sm:$0xf]
  %v4565 = vld [vmem:[%s15 + $0x24] sm:$0xf]
  %v4566 = vld [vmem:[%s15 + $0x28] sm:$0xf]
  %v4567 = vld [vmem:[%s15 + $0x2c] sm:$0xf]
  %v4568 = vld [vmem:[%s15 + $0x30] sm:$0xf]
  %v4569 = vld [vmem:[%s15 + $0x34] sm:$0xf]
  %v4570 = vld [vmem:[%s15 + $0x38] sm:$0xf]
  %v4571 = vld [vmem:[%s15 + $0x3c] sm:$0xf]
  %v4572 = vld [vmem:[%s15 + $0x40] sm:$0xf]
  %v4573 = vld [vmem:[%s15 + $0x44] sm:$0xf]
  %v4574 = vld [vmem:[%s15 + $0x48] sm:$0xf]
  %v4575 = vld [vmem:[%s15 + $0x4c] sm:$0xf]
  %v4576 = vld [vmem:[%s15 + $0x50] sm:$0xf]
  %v4577 = vld [vmem:[%s15 + $0x54] sm:$0xf]
  %v4578 = vld [vmem:[%s15 + $0x58] sm:$0xf]
  %v4579 = vld [vmem:[%s15 + $0x5c] sm:$0xf]
  %v4580 = vld [vmem:[%s15 + $0x60] sm:$0xf]
  %v4581 = vld [vmem:[%s15 + $0x64] sm:$0xf]
  %v4582 = vld [vmem:[%s15 + $0x68] sm:$0xf]
  %v4583 = vld [vmem:[%s15 + $0x6c] sm:$0xf]
  %v4584 = vld [vmem:[%s15 + $0x70] sm:$0xf]
  %v4585 = vld [vmem:[%s15 + $0x74] sm:$0xf]
  %v4586 = vld [vmem:[%s15 + $0x78] sm:$0xf]
  %v4587 = vld [vmem:[%s15 + $0x7c] sm:$0xf]
  %v4588 = vld [vmem:[%s16] sm:$0x1]
  %v4590 = vlaneseq
  %v4591 = vshrl.u32 %v4590, 7
  %v4592 = vsub.s32 0, %v4591
  %v4593 = vrot.slane %v4588, %v4592
  %v4627 = vunpack.c.l.b16 %v4556
  %v4628 = vunpack.c.l.b16 %v4557
  %v4629 = vunpack.c.l.b16 %v4558
  %v4630 = vunpack.c.l.b16 %v4559
  %v4631 = vunpack.c.l.b16 %v4560
  %v4632 = vunpack.c.l.b16 %v4561
  %v4633 = vunpack.c.l.b16 %v4562
  %v4634 = vunpack.c.l.b16 %v4563
  %v4635 = vunpack.c.l.b16 %v4564
  %v4636 = vunpack.c.l.b16 %v4565
  %v4637 = vunpack.c.l.b16 %v4566
  %v4638 = vunpack.c.l.b16 %v4567
  %v4639 = vunpack.c.l.b16 %v4568
  %v4640 = vunpack.c.l.b16 %v4569
  %v4641 = vunpack.c.l.b16 %v4570
  %v4642 = vunpack.c.l.b16 %v4571
  %v4643 = vunpack.c.l.b16 %v4572
  %v4644 = vunpack.c.l.b16 %v4573
  %v4645 = vunpack.c.l.b16 %v4574
  %v4646 = vunpack.c.l.b16 %v4575
  %v4647 = vunpack.c.l.b16 %v4576
  %v4648 = vunpack.c.l.b16 %v4577
  %v4649 = vunpack.c.l.b16 %v4578
  %v4650 = vunpack.c.l.b16 %v4579
  %v4651 = vunpack.c.l.b16 %v4580
  %v4652 = vunpack.c.l.b16 %v4581
  %v4653 = vunpack.c.l.b16 %v4582
  %v4654 = vunpack.c.l.b16 %v4583
  %v4655 = vunpack.c.l.b16 %v4584
  %v4656 = vunpack.c.l.b16 %v4585
  %v4657 = vunpack.c.l.b16 %v4586
  %v4658 = vunpack.c.l.b16 %v4587
  %v4659 = vpack.c.b16 %v4628, %v4627
  %v4660 = vpack.c.b16 %v4630, %v4629
  %v4661 = vpack.c.b16 %v4632, %v4631
  %v4662 = vpack.c.b16 %v4634, %v4633
  %v4663 = vpack.c.b16 %v4636, %v4635
  %v4664 = vpack.c.b16 %v4638, %v4637
  %v4665 = vpack.c.b16 %v4640, %v4639
  %v4666 = vpack.c.b16 %v4642, %v4641
  %v4667 = vpack.c.b16 %v4644, %v4643
  %v4668 = vpack.c.b16 %v4646, %v4645
  %v4669 = vpack.c.b16 %v4648, %v4647
  %v4670 = vpack.c.b16 %v4650, %v4649
  %v4671 = vpack.c.b16 %v4652, %v4651
  %v4672 = vpack.c.b16 %v4654, %v4653
  %v4673 = vpack.c.b16 %v4656, %v4655
  %v4674 = vpack.c.b16 %v4658, %v4657
  %4691 = vmatprep.subr.bf16.mxu0 0
  %4692 = vmatpush1.bf16.msra.mxu0 %v4666
  %4693 = vmatprep.subr.bf16.mxu0 0
  %4694 = vmatpush1.bf16.msra.mxu0 %v4665
  %4695 = vmatprep.subr.bf16.mxu0 0
  %4696 = vmatpush1.bf16.msra.mxu0 %v4664
  %4697 = vmatprep.subr.bf16.mxu0 0
  %4698 = vmatpush1.bf16.msra.mxu0 %v4663
  %4699 = vmatprep.subr.bf16.mxu0 0
  %4700 = vmatpush1.bf16.msra.mxu0 %v4662
  %4701 = vmatprep.subr.bf16.mxu0 0
  %4702 = vmatpush1.bf16.msra.mxu0 %v4661
  %4703 = vmatprep.subr.bf16.mxu0 0
  %4704 = vmatpush1.bf16.msra.mxu0 %v4660
  %4705 = vmatprep.subr.bf16.mxu0 0
  %4706 = vmatpush1.bf16.msra.mxu0 %v4659
  %4707 = vmatprep.subr.bf16.mxu0 0
  %4708 = vmatpush2.bf16.msra.mxu0 %v4674
  %4709 = vmatprep.subr.bf16.mxu0 0
  %4710 = vmatpush2.bf16.msra.mxu0 %v4673
  %4711 = vmatprep.subr.bf16.mxu0 0
  %4712 = vmatpush2.bf16.msra.mxu0 %v4672
  %4713 = vmatprep.subr.bf16.mxu0 0
  %4714 = vmatpush2.bf16.msra.mxu0 %v4671
  %4715 = vmatprep.subr.bf16.mxu0 0
  %4716 = vmatpush2.bf16.msra.mxu0 %v4670
  %4717 = vmatprep.subr.bf16.mxu0 0
  %4718 = vmatpush2.bf16.msra.mxu0 %v4669
  %4719 = vmatprep.subr.bf16.mxu0 0
  %4720 = vmatpush2.bf16.msra.mxu0 %v4668
  %4721 = vmatprep.subr.bf16.mxu0 0
  %4722 = vmatpush2.bf16.msra.mxu0 %v4667
  %4723 = vmatprep.mubr.bf16.mxu0 %v4555
  %4724 = vmatmul.mubr.bf16.gmra.mxu0 %v4554
  %v4725 = vpop.f32.mrf.mxu0
  %v4726 = vadd.f32 %v4593, %v4725
  %v4727 = vpop.f32.mrf.mxu0
  %v4728 = vpop.f32.mrf.mxu0
  %v4729 = vpop.f32.mrf.mxu0
  %4730 = vdwg.mxu0
  %v4731 = vxor.u32 %v4726, 2147483648
  %v4732 = vmul.f32 %v4731, 1.442695
  %v4733 = vpow.pop %v4732
  %v4734 = vadd.f32 %v4733, 1.0
  %v4735 = vrcp.pop %v4734
  %v4736 = vmul.f32 1.0, %v4735
  %v4737 = vpack.c.bf16 %v4736, %v4736
  %v4738 = vld [vmem:[%s17] sm:$0xf]
  %v4739 = vld [vmem:[%s17 + $0x4] sm:$0xf]
  %v4740 = vld [vmem:[%s17 + $0x8] sm:$0xf]
  %v4741 = vld [vmem:[%s17 + $0xc] sm:$0xf]
  %v4742 = vld [vmem:[%s17 + $0x10] sm:$0xf]
  %v4743 = vld [vmem:[%s17 + $0x14] sm:$0xf]
  %v4744 = vld [vmem:[%s17 + $0x18] sm:$0xf]
  %v4745 = vld [vmem:[%s17 + $0x1c] sm:$0xf]
  %v4746 = vld [vmem:[%s17 + $0x20] sm:$0xf]
  %v4747 = vld [vmem:[%s17 + $0x24] sm:$0xf]
  %v4748 = vld [vmem:[%s17 + $0x28] sm:$0xf]
  %v4749 = vld [vmem:[%s17 + $0x2c] sm:$0xf]
  %v4750 = vld [vmem:[%s17 + $0x30] sm:$0xf]
  %v4751 = vld [vmem:[%s17 + $0x34] sm:$0xf]
  %v4752 = vld [vmem:[%s17 + $0x38] sm:$0xf]
  %v4753 = vld [vmem:[%s17 + $0x3c] sm:$0xf]
  %v4754 = vld [vmem:[%s18] sm:$0x1]
  %v4756 = vlaneseq
  %v4757 = vshrl.u32 %v4756, 7
  %v4758 = vsub.s32 0, %v4757
  %v4759 = vrot.slane %v4754, %v4758
  %v4777 = vunpack.c.l.b16 %v4738
  %v4778 = vunpack.c.l.b16 %v4739
  %v4779 = vunpack.c.l.b16 %v4740
  %v4780 = vunpack.c.l.b16 %v4741
  %v4781 = vunpack.c.l.b16 %v4742
  %v4782 = vunpack.c.l.b16 %v4743
  %v4783 = vunpack.c.l.b16 %v4744
  %v4784 = vunpack.c.l.b16 %v4745
  %v4785 = vunpack.c.l.b16 %v4746
  %v4786 = vunpack.c.l.b16 %v4747
  %v4787 = vunpack.c.l.b16 %v4748
  %v4788 = vunpack.c.l.b16 %v4749
  %v4789 = vunpack.c.l.b16 %v4750
  %v4790 = vunpack.c.l.b16 %v4751
  %v4791 = vunpack.c.l.b16 %v4752
  %v4792 = vunpack.c.l.b16 %v4753
  %v4793 = vpack.c.b16 %v4778, %v4777
  %v4794 = vpack.c.b16 %v4780, %v4779
  %v4795 = vpack.c.b16 %v4782, %v4781
  %v4796 = vpack.c.b16 %v4784, %v4783
  %v4797 = vpack.c.b16 %v4786, %v4785
  %v4798 = vpack.c.b16 %v4788, %v4787
  %v4799 = vpack.c.b16 %v4790, %v4789
  %v4800 = vpack.c.b16 %v4792, %v4791
  %4809 = vmatprep.subr.bf16.mxu0 0
  %4810 = vmatpush1.bf16.msra.mxu0 %v4800
  %4811 = vmatprep.subr.bf16.mxu0 0
  %4812 = vmatpush1.bf16.msra.mxu0 %v4799
  %4813 = vmatprep.subr.bf16.mxu0 0
  %4814 = vmatpush1.bf16.msra.mxu0 %v4798
  %4815 = vmatprep.subr.bf16.mxu0 0
  %4816 = vmatpush1.bf16.msra.mxu0 %v4797
  %4817 = vmatprep.subr.bf16.mxu0 0
  %4818 = vmatpush1.bf16.msra.mxu0 %v4796
  %4819 = vmatprep.subr.bf16.mxu0 0
  %4820 = vmatpush1.bf16.msra.mxu0 %v4795
  %4821 = vmatprep.subr.bf16.mxu0 0
  %4822 = vmatpush1.bf16.msra.mxu0 %v4794
  %4823 = vmatprep.subr.bf16.mxu0 0
  %4824 = vmatpush1.bf16.msra.mxu0 %v4793
  %4825 = vmatprep.subr.bf16.mxu0 0
  %4826 = vmatpush2.bf16.msra.mxu0 0
  %4827 = vmatprep.subr.bf16.mxu0 0
  %4828 = vmatpush2.bf16.msra.mxu0 0
  %4829 = vmatprep.subr.bf16.mxu0 0
  %4830 = vmatpush2.bf16.msra.mxu0 0
  %4831 = vmatprep.subr.bf16.mxu0 0
  %4832 = vmatpush2.bf16.msra.mxu0 0
  %4833 = vmatprep.subr.bf16.mxu0 0
  %4834 = vmatpush2.bf16.msra.mxu0 0
  %4835 = vmatprep.subr.bf16.mxu0 0
  %4836 = vmatpush2.bf16.msra.mxu0 0
  %4837 = vmatprep.subr.bf16.mxu0 0
  %4838 = vmatpush2.bf16.msra.mxu0 0
  %4839 = vmatprep.subr.bf16.mxu0 0
  %4840 = vmatpush2.bf16.msra.mxu0 0
  %4841 = vmatprep.mubr.bf16.mxu0 0
  %4842 = vmatmul.mubr.bf16.gmra.mxu0 %v4737
  %v4843 = vpop.f32.mrf.mxu0
  %v4844 = vadd.f32 %v4759, %v4843
  %v4845 = vpop.f32.mrf.mxu0
  %v4846 = vpop.f32.mrf.mxu0
  %v4847 = vpop.f32.mrf.mxu0
  %4848 = vdwg.mxu0
  %v4849 = vxor.u32 %v4844, 2147483648
  %v4850 = vmul.f32 %v4849, 1.442695
  %v4851 = vpow.pop %v4850
  %v4852 = vadd.f32 %v4851, 1.0
  %v4853 = vrcp.pop %v4852
  %v4854 = vmul.f32 1.0, %v4853
  %v4855 = vpack.c.bf16 %v4854, %v4854
  %v4856 = vld [vmem:[%s19] sm:$0xf]
  %v4857 = vld [vmem:[%s19 + $0x4] sm:$0xf]
  %v4858 = vld [vmem:[%s19 + $0x8] sm:$0xf]
  %v4859 = vld [vmem:[%s19 + $0xc] sm:$0xf]
  %v4860 = vld [vmem:[%s19 + $0x10] sm:$0xf]
  %v4861 = vld [vmem:[%s19 + $0x14] sm:$0xf]
  %v4862 = vld [vmem:[%s19 + $0x18] sm:$0xf]
  %v4863 = vld [vmem:[%s19 + $0x1c] sm:$0xf]
  %v4864 = vld [vmem:[#allocation5] sm:$0x1]
  %v4866 = vlaneseq
  %v4867 = vshrl.u32 %v4866, 7
  %v4868 = vsub.s32 0, %v4867
  %v4869 = vrot.slane %v4864, %v4868
  %v4879 = vunpack.c.l.b16 %v4856
  %v4880 = vunpack.c.l.b16 %v4857
  %v4881 = vunpack.c.l.b16 %v4858
  %v4882 = vunpack.c.l.b16 %v4859
  %v4883 = vunpack.c.l.b16 %v4860
  %v4884 = vunpack.c.l.b16 %v4861
  %v4885 = vunpack.c.l.b16 %v4862
  %v4886 = vunpack.c.l.b16 %v4863
  %v4887 = vpack.c.b16 %v4880, %v4879
  %v4888 = vpack.c.b16 %v4882, %v4881
  %v4889 = vpack.c.b16 %v4884, %v4883
  %v4890 = vpack.c.b16 %v4886, %v4885
  %v4896 = vsel %vm1711, %v4855, 0
  %4898 = vmatprep.subr.bf16.mxu0 0
  %4899 = vmatpush1.bf16.msra.mxu0 0
  %4900 = vmatprep.subr.bf16.mxu0 0
  %4901 = vmatpush1.bf16.msra.mxu0 0
  %4902 = vmatprep.subr.bf16.mxu0 0
  %4903 = vmatpush1.bf16.msra.mxu0 0
  %4904 = vmatprep.subr.bf16.mxu0 0
  %4905 = vmatpush1.bf16.msra.mxu0 0
  %4906 = vmatprep.subr.bf16.mxu0 0
  %4907 = vmatpush1.bf16.msra.mxu0 %v4890
  %4908 = vmatprep.subr.bf16.mxu0 0
  %4909 = vmatpush1.bf16.msra.mxu0 %v4889
  %4910 = vmatprep.subr.bf16.mxu0 0
  %4911 = vmatpush1.bf16.msra.mxu0 %v4888
  %4912 = vmatprep.subr.bf16.mxu0 0
  %4913 = vmatpush1.bf16.msra.mxu0 %v4887
  %4914 = vmatprep.subr.bf16.mxu0 0
  %4915 = vmatpush2.bf16.msra.mxu0 0
  %4916 = vmatprep.subr.bf16.mxu0 0
  %4917 = vmatpush2.bf16.msra.mxu0 0
  %4918 = vmatprep.subr.bf16.mxu0 0
  %4919 = vmatpush2.bf16.msra.mxu0 0
  %4920 = vmatprep.subr.bf16.mxu0 0
  %4921 = vmatpush2.bf16.msra.mxu0 0
  %4922 = vmatprep.subr.bf16.mxu0 0
  %4923 = vmatpush2.bf16.msra.mxu0 0
  %4924 = vmatprep.subr.bf16.mxu0 0
  %4925 = vmatpush2.bf16.msra.mxu0 0
  %4926 = vmatprep.subr.bf16.mxu0 0
  %4927 = vmatpush2.bf16.msra.mxu0 0
  %4928 = vmatprep.subr.bf16.mxu0 0
  %4929 = vmatpush2.bf16.msra.mxu0 0
  %4930 = vmatprep.mubr.bf16.mxu0 0
  %4931 = vmatmul.mubr.bf16.gmra.mxu0 %v4896
  %v4932 = vpop.f32.mrf.mxu0
  %v4933 = vadd.f32 %v4869, %v4932
  %v4934 = vpop.f32.mrf.mxu0
  %v4935 = vpop.f32.mrf.mxu0
  %v4936 = vpop.f32.mrf.mxu0
  %4937 = vdwg.mxu0
  %v4938 = vxor.u32 %v4933, 2147483648
  %v4939 = vmul.f32 %v4938, 1.442695
  %v4940 = vpow.pop %v4939
  %v4941 = vadd.f32 %v4940, 1.0
  %v4942 = vrcp.pop %v4941
  %v4943 = vmul.f32 1.0, %v4942
  %vm4944 = vcmask 7168
  %4945 = vst.msk [vmem:[%s21] sm:$0xff] %vm4944, %v4943
  // Predicated region
  $region86: #{cnn1d_forward.1} parent=0 // pred_check
    _
  $region87: #{cnn1d_forward.1} parent=0 // pred_check_branch
    %4947 = sbr.rel (0) target = $region89
  $region88: #{cnn1d_forward.1} parent=0 // pred_region
    _
  $region89: #{cnn1d_forward.1} parent=0 // pred_fallthru
    _
  // Predicated region
  $region90: #{cnn1d_forward.1} parent=0 // pred_check
    _
  $region91: #{cnn1d_forward.1} parent=0 // pred_check_branch
    %4949 = sbr.rel (0) target = $region93
  $region92: #{cnn1d_forward.1} parent=0 // pred_region
    _
  $region93: #{cnn1d_forward.1} parent=0 // pred_fallthru
    _

</llo_original>
